<compile_context>
chip_gen: v6e
topology: v6e:2x2x1
jax: 0.10.0
libtpu: 0.0.40
codegen_flags: <defaults>
</compile_context>

<pallas_src>
import functools

import jax
import jax.numpy as jnp
import numpy as np
from jax.experimental import pallas as pl
from jax.experimental.pallas import tpu as pltpu


# ----------------------------- Pallas kernel -------------------------------


def _layernorm(x, gamma, beta, eps=1e-5):
    # torch.nn.LayerNorm semantics (biased variance), computed in float32.
    xf = x.astype(jnp.float32)
    mu = jnp.mean(xf, axis=-1, keepdims=True)
    var = jnp.mean((xf - mu) ** 2, axis=-1, keepdims=True)
    return (xf - mu) * jax.lax.rsqrt(var + eps) * gamma + beta


def residual_attention_block_kernel(
    x_ref,                                   # (b_tile, N, C) f32
    wqkv_ref, bqkv_ref,                      # (C, 3C) bf16, (1, 3C) f32  (Q pre-scaled)
    wproj_ref, bproj_ref,                    # (C, C)  bf16, (1, C)  f32
    g1_ref, beta1_ref,                       # (1, C) f32, (1, C) f32
    wfc_ref, bfc_ref,                        # (C, 4C) bf16, (1, 4C) f32
    wcp_ref, bcp_ref,                        # (4C, C) bf16, (1, C)  f32
    g2_ref, beta2_ref,                       # (1, C) f32, (1, C) f32
    out_ref,                                 # (b_tile, N, C) f32
    *, num_heads, mlp_chunk,
):
    b_tile, N, C = x_ref.shape
    hd = C // num_heads
    R = b_tile * N
    f32, bf16 = jnp.float32, jnp.bfloat16

    x = x_ref[...].reshape(R, C)                                    # (R, C) f32

    # ---- x = x + attn(ln_1(x)) ---------------------------------------------
    h1 = _layernorm(x, g1_ref[...], beta1_ref[...]).astype(bf16)
    # Bias applied in f32, then a single downcast: qkv lives as bf16 (halved
    # footprint) and feeds the bf16 attention matmuls directly.
    qkv = (jnp.dot(h1, wqkv_ref[...], preferred_element_type=f32)
           + bqkv_ref[...]).astype(bf16)                            # (R, 3C) bf16

    head_outs = []
    for h in range(num_heads):                 # heads: short static loop (H small)
        lo = h * hd
        # 1/sqrt(hd) already folded into W_q / b_q in the wrapper.
        qh = qkv[:, lo:lo + hd].reshape(b_tile, N, hd)               # bf16
        kh = qkv[:, C + lo:C + lo + hd].reshape(b_tile, N, hd)       # bf16
        vh = qkv[:, 2 * C + lo:2 * C + lo + hd].reshape(b_tile, N, hd)

        # bf16 operands, f32 MXU accumulation (matches PyTorch .half()).
        s = jnp.einsum('bnd,bmd->bnm', qh, kh,
                       preferred_element_type=f32)                   # (b, N, N) f32
        s = s - jnp.max(s, axis=-1, keepdims=True)
        p = jnp.exp(s)
        p = p * pl.reciprocal(jnp.sum(p, axis=-1, keepdims=True), approx=True)
        o = jnp.einsum('bnm,bmd->bnd', p.astype(bf16), vh,
                       preferred_element_type=f32)                   # (b, N, hd) f32
        head_outs.append(o.reshape(R, hd).astype(bf16))

    ctx = jnp.concatenate(head_outs, axis=-1)                        # (R, C) bf16
    attn_out = jnp.dot(ctx, wproj_ref[...],
                       preferred_element_type=f32) + bproj_ref[...]
    x1 = x + attn_out                                                # residual 1

    # ---- x = x + mlp(ln_2(x))  (QuickGELU MLP, 4C dim chunked) --------------
    h2 = _layernorm(x1, g2_ref[...], beta2_ref[...]).astype(bf16)
    dff = wfc_ref.shape[1]

    def mlp_piece(c0):
        u = (jnp.dot(h2, wfc_ref[:, c0:c0 + mlp_chunk],
                     preferred_element_type=f32)
             + bfc_ref[:, c0:c0 + mlp_chunk])
        u = u * jax.nn.sigmoid(1.702 * u)                            # QuickGELU
        return jnp.dot(u.astype(bf16), wcp_ref[c0:c0 + mlp_chunk, :],
                       preferred_element_type=f32)

    m = mlp_piece(0)                       # init from first chunk (no zeros+add)
    for c0 in range(mlp_chunk, dff, mlp_chunk):
        m = m + mlp_piece(c0)

    out_ref[...] = (x1 + m + bcp_ref[...]).reshape(b_tile, N, C)     # residual 2


# ----------------------------- wrapper --------------------------------------


def _pick_b_tile(B, N, *, row_cap=1024, score_cap_bytes=8 << 20):
    """Largest batch tile that keeps rows/score memory bounded, preferring a
    grid of >= 2 steps so both v7x TensorCores get work (no-op on v5e/v6e)."""
    def fits(t):
        return t * N <= row_cap and t * N * N * 4 <= score_cap_bytes
    divisors = [t for t in range(1, B + 1) if B % t == 0]
    pool = [t for t in divisors if fits(t)] or [1]
    multi = [t for t in pool if B // t >= 2]
    return max(multi) if multi else max(pool)


def _vmem_limit_bytes(weight_bytes, b_tile, N, C, mlp_chunk, *, double_buffered):
    """Derive the scoped-VMEM limit from the real footprint (with headroom)."""
    R = b_tile * N
    wb = weight_bytes * (2 if double_buffered else 1)
    io = 2 * 2 * R * C * 4                       # in + out tiles, double-buffered
    work = (R * 3 * C * 6                        # qkv f32 transient + bf16
            + b_tile * N * N * 8                 # per-head scores + probs (f32)
            + R * C * 14                         # ctx/attn_out/x1/m
            + R * mlp_chunk * 6)                 # MLP chunk f32 + bf16
    limit = wb + io + work + (4 << 20)
    try:
        cap = int(pltpu.get_tpu_info().vmem_capacity_bytes * 0.9)
    except Exception:
        cap = 96 << 20
    return int(min(max(limit, 32 << 20), max(cap, 32 << 20)))


def residual_attention_block(x, params, num_heads):
    """x: (N, B, C) float32, sequence-first like the PyTorch module."""
    N, B, C = x.shape
    hd = C // num_heads
    scale = hd ** (-0.5)
    dff = params["w_fc"].shape[1]

    # Fold the 1/sqrt(hd) attention scale into the Q projection (one-time,
    # wrapper-side) so the kernel does no per-head broadcast-multiply.
    w_qkv = params["w_qkv"]
    w_qkv = jnp.concatenate(
        [(w_qkv[:, :C].astype(jnp.float32) * scale).astype(w_qkv.dtype),
         w_qkv[:, C:]], axis=1)
    b_qkv = jnp.concatenate(
        [params["b_qkv"][:, :C] * scale, params["b_qkv"][:, C:]], axis=1)

    b_tile = _pick_b_tile(B, N)
    grid = (B // b_tile,)
    # Chunk the 4C intermediate so peak VMEM is O(tile_rows * mlp_chunk).
    mlp_chunk = 1024 if (dff > 1024 and dff % 1024 == 0) else dff

    xb = jnp.transpose(x, (1, 0, 2))                                 # (B, N, C)

    weights = (
        w_qkv, b_qkv,
        params["w_proj"], params["b_proj"],
        params["g1"], params["beta1"],
        params["w_fc"], params["b_fc"],
        params["w_cproj"], params["b_cproj"],
        params["g2"], params["beta2"],
    )
    weight_bytes = sum(int(w.size) * w.dtype.itemsize for w in weights)

    kernel = functools.partial(
        residual_attention_block_kernel, num_heads=num_heads, mlp_chunk=mlp_chunk)

    def resident(a, single_buffer):
        # Full-extent block, constant block index -> DMA'd once, stays in VMEM.
        nd = a.ndim
        idx = lambda i, _nd=nd: (0,) * _nd
        if single_buffer:
            # Constant-index blocks never change: single-buffer them so CLIP-L
            # weights (~24 MiB bf16) don't double to ~48 MiB on v7x's 64 MiB VMEM.
            return pl.BlockSpec(a.shape, idx, pipeline_mode=pl.Buffered(1))
        return pl.BlockSpec(a.shape, idx)

    def run(single_buffer_weights):
        in_specs = [pl.BlockSpec((b_tile, N, C), lambda i: (i, 0, 0))]
        in_specs += [resident(a, single_buffer_weights) for a in weights]
        vmem_limit = _vmem_limit_bytes(weight_bytes, b_tile, N, C, mlp_chunk,
                                       double_buffered=not single_buffer_weights)
        call = pl.pallas_call(
            kernel,
            out_shape=jax.ShapeDtypeStruct((B, N, C), jnp.float32),
            grid_spec=pltpu.PrefetchScalarGridSpec(
                num_scalar_prefetch=0,
                grid=grid,
                in_specs=in_specs,
                out_specs=pl.BlockSpec((b_tile, N, C), lambda i: (i, 0, 0)),
            ),
            compiler_params=pltpu.CompilerParams(
                dimension_semantics=("parallel",),
                vmem_limit_bytes=vmem_limit,
            ),
        )
        return call(xb, *weights)

    try:
        out = jax.block_until_ready(run(single_buffer_weights=True))
    except Exception:
        # pl.Buffered(1) pipeline_mode unavailable / rejected on this Pallas
        # version: fall back to default (double-buffered) resident weights.
        out = run(single_buffer_weights=False)

    return jnp.transpose(out, (1, 0, 2))                             # (N, B, C)


# ----------------------------- reference (pure JAX) --------------------------


def reference_block(x, params, num_heads):
    # Mirrors the module's numerics: bf16 weights / bf16 matmul inputs with f32
    # accumulation (the PyTorch module runs attn/mlp in half precision), f32
    # LayerNorm / softmax / residuals.
    N, B, C = x.shape
    hd = C // num_heads
    scale = hd ** (-0.5)
    f32, bf16 = jnp.float32, jnp.bfloat16
    hi = jax.lax.Precision.HIGHEST

    def ln(v, g, b):
        mu = v.mean(-1, keepdims=True)
        var = ((v - mu) ** 2).mean(-1, keepdims=True)
        return (v - mu) / jnp.sqrt(var + 1e-5) * g + b

    h1 = ln(x, params["g1"][0], params["beta1"][0]).astype(bf16)
    qkv = jnp.einsum("nbc,cd->nbd", h1, params["w_qkv"],
                     preferred_element_type=f32) + params["b_qkv"][0]
    q, k, v = qkv[..., :C], qkv[..., C:2 * C], qkv[..., 2 * C:]
    q = q.reshape(N, B, num_heads, hd)
    k = k.reshape(N, B, num_heads, hd)
    v = v.reshape(N, B, num_heads, hd)
    attn = jnp.einsum("nbhd,mbhd->bhnm", q * scale, k, precision=hi)
    attn = jax.nn.softmax(attn, axis=-1)
    ctx = jnp.einsum("bhnm,mbhd->nbhd", attn, v, precision=hi).reshape(N, B, C)
    attn_out = jnp.einsum("nbc,cd->nbd", ctx.astype(bf16), params["w_proj"],
                          preferred_element_type=f32) + params["b_proj"][0]
    x1 = x + attn_out
    h2 = ln(x1, params["g2"][0], params["beta2"][0]).astype(bf16)
    u = jnp.einsum("nbc,cd->nbd", h2, params["w_fc"],
                   preferred_element_type=f32) + params["b_fc"][0]
    u = u * jax.nn.sigmoid(1.702 * u)
    m = jnp.einsum("nbd,dc->nbc", u.astype(bf16), params["w_cproj"],
                   preferred_element_type=f32) + params["b_cproj"][0]
    return x1 + m


# ----------------------------- main ------------------------------------------


def init_params(key, d_model):
    ks = jax.random.split(key, 12)
    C = d_model
    dff = 4 * C
    std = 0.5 / np.sqrt(C)
    bf16, f32 = jnp.bfloat16, jnp.float32
    params = {
        # Linear weights stored as (in_dim, out_dim), carried in bf16.
        "w_qkv":   (jax.random.normal(ks[0], (C, 3 * C), f32) * std).astype(bf16),
        "b_qkv":   jax.random.normal(ks[1], (1, 3 * C), f32) * 0.02,
        "w_proj":  (jax.random.normal(ks[2], (C, C), f32) * std).astype(bf16),
        "b_proj":  jax.random.normal(ks[3], (1, C), f32) * 0.02,
        "w_fc":    (jax.random.normal(ks[4], (C, dff), f32) * std).astype(bf16),
        "b_fc":    jax.random.normal(ks[5], (1, dff), f32) * 0.02,
        "w_cproj": (jax.random.normal(ks[6], (dff, C), f32) * (0.5 / np.sqrt(dff))).astype(bf16),
        "b_cproj": jax.random.normal(ks[7], (1, C), f32) * 0.02,
        "g1":      1.0 + 0.1 * jax.random.normal(ks[8], (1, C), f32),
        "beta1":   0.1 * jax.random.normal(ks[9], (1, C), f32),
        "g2":      1.0 + 0.1 * jax.random.normal(ks[10], (1, C), f32),
        "beta2":   0.1 * jax.random.normal(ks[11], (1, C), f32),
    }
    return params


if __name__ == "__main__":
    # Small shapes consistent with the module's (N, B, C) convention.
    N, B, C, H = 8, 2, 32, 4          # seq_len, batch, d_model, n_head
    key = jax.random.PRNGKey(0)
    kx, kp = jax.random.split(key)
    x = jax.random.normal(kx, (N, B, C), jnp.float32)
    params = init_params(kp, C)

    out = jax.block_until_ready(residual_attention_block(x, params, H))
    ref = jax.block_until_ready(reference_block(x, params, H))

    assert out.shape == (N, B, C)
    np.testing.assert_allclose(np.asarray(out), np.asarray(ref), rtol=1e-2, atol=1e-2)
    print("KERNEL_OK")
</pallas_src>

<mosaic_0001>
module attributes {stable_mosaic.version = 11 : i64} {
  func.func @residual_attention_block_kernel(%arg0: i32, %arg1: memref<1x8x32xf32, #tpu.memory_space<vmem>>, %arg2: memref<32x96xbf16, #tpu.memory_space<vmem>>, %arg3: memref<1x96xf32, #tpu.memory_space<vmem>>, %arg4: memref<32x32xbf16, #tpu.memory_space<vmem>>, %arg5: memref<1x32xf32, #tpu.memory_space<vmem>>, %arg6: memref<1x32xf32, #tpu.memory_space<vmem>>, %arg7: memref<1x32xf32, #tpu.memory_space<vmem>>, %arg8: memref<32x128xbf16, #tpu.memory_space<vmem>>, %arg9: memref<1x128xf32, #tpu.memory_space<vmem>>, %arg10: memref<128x32xbf16, #tpu.memory_space<vmem>>, %arg11: memref<1x32xf32, #tpu.memory_space<vmem>>, %arg12: memref<1x32xf32, #tpu.memory_space<vmem>>, %arg13: memref<1x32xf32, #tpu.memory_space<vmem>>, %arg14: memref<1x8x32xf32, #tpu.memory_space<vmem>>) attributes {dimension_semantics = [#tpu.dimension_semantics<parallel>], iteration_bounds = array<i64: 2>, scalar_prefetch = 0 : i64, scratch_operands = 0 : i64, tpu.core_type = #tpu.core_type<tc>, window_params = [{transform_indices = @transform_0, window_bounds = array<i64: 1, 8, 32>}, {pipeline_mode = #tpu.pipeline_mode<synchronous>, transform_indices = @transform_1, window_bounds = array<i64: 32, 96>}, {pipeline_mode = #tpu.pipeline_mode<synchronous>, transform_indices = @transform_2, window_bounds = array<i64: 1, 96>}, {pipeline_mode = #tpu.pipeline_mode<synchronous>, transform_indices = @transform_3, window_bounds = array<i64: 32, 32>}, {pipeline_mode = #tpu.pipeline_mode<synchronous>, transform_indices = @transform_4, window_bounds = array<i64: 1, 32>}, {pipeline_mode = #tpu.pipeline_mode<synchronous>, transform_indices = @transform_5, window_bounds = array<i64: 1, 32>}, {pipeline_mode = #tpu.pipeline_mode<synchronous>, transform_indices = @transform_6, window_bounds = array<i64: 1, 32>}, {pipeline_mode = #tpu.pipeline_mode<synchronous>, transform_indices = @transform_7, window_bounds = array<i64: 32, 128>}, {pipeline_mode = #tpu.pipeline_mode<synchronous>, transform_indices = @transform_8, window_bounds = array<i64: 1, 128>}, {pipeline_mode = #tpu.pipeline_mode<synchronous>, transform_indices = @transform_9, window_bounds = array<i64: 128, 32>}, {pipeline_mode = #tpu.pipeline_mode<synchronous>, transform_indices = @transform_10, window_bounds = array<i64: 1, 32>}, {pipeline_mode = #tpu.pipeline_mode<synchronous>, transform_indices = @transform_11, window_bounds = array<i64: 1, 32>}, {pipeline_mode = #tpu.pipeline_mode<synchronous>, transform_indices = @transform_12, window_bounds = array<i64: 1, 32>}, {transform_indices = @transform_13, window_bounds = array<i64: 1, 8, 32>}]} {
    %c0 = arith.constant 0 : index
    %c0_0 = arith.constant 0 : index
    %c0_1 = arith.constant 0 : index
    %0 = vector.load %arg1[%c0, %c0_0, %c0_1] : memref<1x8x32xf32, #tpu.memory_space<vmem>>, vector<1x8x32xf32>
    %1 = vector.shape_cast %0 : vector<1x8x32xf32> to vector<8x32xf32>
    %c0_2 = arith.constant 0 : index
    %c0_3 = arith.constant 0 : index
    %2 = vector.load %arg6[%c0_2, %c0_3] : memref<1x32xf32, #tpu.memory_space<vmem>>, vector<1x32xf32>
    %c0_4 = arith.constant 0 : index
    %c0_5 = arith.constant 0 : index
    %3 = vector.load %arg7[%c0_4, %c0_5] : memref<1x32xf32, #tpu.memory_space<vmem>>, vector<1x32xf32>
    %cst = arith.constant dense<0.000000e+00> : vector<8xf32>
    %4 = vector.multi_reduction <add>, %1, %cst [1] : vector<8x32xf32> to vector<8xf32>
    %5 = vector.shape_cast %4 : vector<8xf32> to vector<8x1xf32>
    %cst_6 = arith.constant 3.200000e+01 : f32
    %6 = vector.broadcast %cst_6 : f32 to vector<8x1xf32>
    %7 = arith.divf %5, %6 : vector<8x1xf32>
    %8 = vector.broadcast %7 : vector<8x1xf32> to vector<8x32xf32>
    %9 = arith.subf %1, %8 : vector<8x32xf32>
    %10 = arith.mulf %9, %9 : vector<8x32xf32>
    %cst_7 = arith.constant dense<0.000000e+00> : vector<8xf32>
    %11 = vector.multi_reduction <add>, %10, %cst_7 [1] : vector<8x32xf32> to vector<8xf32>
    %12 = vector.shape_cast %11 : vector<8xf32> to vector<8x1xf32>
    %cst_8 = arith.constant 3.200000e+01 : f32
    %13 = vector.broadcast %cst_8 : f32 to vector<8x1xf32>
    %14 = arith.divf %12, %13 : vector<8x1xf32>
    %15 = vector.broadcast %7 : vector<8x1xf32> to vector<8x32xf32>
    %16 = arith.subf %1, %15 : vector<8x32xf32>
    %cst_9 = arith.constant 9.99999974E-6 : f32
    %17 = vector.broadcast %cst_9 : f32 to vector<8x1xf32>
    %18 = arith.addf %14, %17 : vector<8x1xf32>
    %19 = math.rsqrt %18 : vector<8x1xf32>
    %20 = vector.broadcast %19 : vector<8x1xf32> to vector<8x32xf32>
    %21 = arith.mulf %16, %20 : vector<8x32xf32>
    %22 = vector.broadcast %2 : vector<1x32xf32> to vector<8x32xf32>
    %23 = arith.mulf %21, %22 : vector<8x32xf32>
    %24 = vector.broadcast %3 : vector<1x32xf32> to vector<8x32xf32>
    %25 = arith.addf %23, %24 : vector<8x32xf32>
    %26 = arith.truncf %25 : vector<8x32xf32> to vector<8x32xbf16>
    %c0_10 = arith.constant 0 : index
    %c0_11 = arith.constant 0 : index
    %27 = vector.load %arg2[%c0_10, %c0_11] : memref<32x96xbf16, #tpu.memory_space<vmem>>, vector<32x96xbf16>
    %cst_12 = arith.constant dense<0.000000e+00> : vector<8x96xf32>
    %28 = tpu.matmul %26, %27, %cst_12 {dimension_numbers = #tpu.dot_dimension_numbers<[1], [0], [0], [1], [0, 0, 1, 1], [], []>} : vector<8x32xbf16>, vector<32x96xbf16>, vector<8x96xf32> -> vector<8x96xf32>
    %c0_13 = arith.constant 0 : index
    %c0_14 = arith.constant 0 : index
    %29 = vector.load %arg3[%c0_13, %c0_14] : memref<1x96xf32, #tpu.memory_space<vmem>>, vector<1x96xf32>
    %30 = vector.broadcast %29 : vector<1x96xf32> to vector<8x96xf32>
    %31 = arith.addf %28, %30 : vector<8x96xf32>
    %32 = arith.truncf %31 : vector<8x96xf32> to vector<8x96xbf16>
    %33 = vector.extract_strided_slice %32 {offsets = [0, 0], sizes = [8, 8], strides = [1, 1]} : vector<8x96xbf16> to vector<8x8xbf16>
    %34 = vector.shape_cast %33 : vector<8x8xbf16> to vector<1x8x8xbf16>
    %35 = vector.extract_strided_slice %32 {offsets = [0, 32], sizes = [8, 8], strides = [1, 1]} : vector<8x96xbf16> to vector<8x8xbf16>
    %36 = vector.shape_cast %35 : vector<8x8xbf16> to vector<1x8x8xbf16>
    %37 = vector.extract_strided_slice %32 {offsets = [0, 64], sizes = [8, 8], strides = [1, 1]} : vector<8x96xbf16> to vector<8x8xbf16>
    %38 = vector.shape_cast %37 : vector<8x8xbf16> to vector<1x8x8xbf16>
    "tpu.trace_start"() <{level = 10 : i32, message = "bnd,bmd->bnm"}> : () -> ()
    %cst_15 = arith.constant dense<0.000000e+00> : vector<1x8x8xf32>
    %39 = tpu.matmul %34, %36, %cst_15 {dimension_numbers = #tpu.dot_dimension_numbers<[2], [2], [1], [1], [0, 0, 0, 1, 1, 1], [0], [0]>} : vector<1x8x8xbf16>, vector<1x8x8xbf16>, vector<1x8x8xf32> -> vector<1x8x8xf32>
    "tpu.trace_stop"() : () -> ()
    %cst_16 = arith.constant dense<0xFF800000> : vector<1x8xf32>
    %40 = vector.multi_reduction <maximumf>, %39, %cst_16 [2] : vector<1x8x8xf32> to vector<1x8xf32>
    %41 = vector.shape_cast %40 : vector<1x8xf32> to vector<1x8x1xf32>
    %42 = vector.broadcast %41 : vector<1x8x1xf32> to vector<1x8x8xf32>
    %43 = arith.subf %39, %42 : vector<1x8x8xf32>
    %44 = math.exp %43 : vector<1x8x8xf32>
    %cst_17 = arith.constant dense<0.000000e+00> : vector<1x8xf32>
    %45 = vector.multi_reduction <add>, %44, %cst_17 [2] : vector<1x8x8xf32> to vector<1x8xf32>
    %46 = vector.shape_cast %45 : vector<1x8xf32> to vector<1x8x1xf32>
    %47 = tpu.reciprocal %46 {approx = true} : vector<1x8x1xf32> -> vector<1x8x1xf32>
    %48 = vector.broadcast %47 : vector<1x8x1xf32> to vector<1x8x8xf32>
    %49 = arith.mulf %44, %48 : vector<1x8x8xf32>
    %50 = arith.truncf %49 : vector<1x8x8xf32> to vector<1x8x8xbf16>
    "tpu.trace_start"() <{level = 10 : i32, message = "bnm,bmd->bnd"}> : () -> ()
    %cst_18 = arith.constant dense<0.000000e+00> : vector<1x8x8xf32>
    %51 = tpu.matmul %50, %38, %cst_18 {dimension_numbers = #tpu.dot_dimension_numbers<[2], [1], [1], [2], [0, 0, 0, 1, 1, 2], [0], [0]>} : vector<1x8x8xbf16>, vector<1x8x8xbf16>, vector<1x8x8xf32> -> vector<1x8x8xf32>
    "tpu.trace_stop"() : () -> ()
    %52 = vector.shape_cast %51 : vector<1x8x8xf32> to vector<8x8xf32>
    %53 = arith.truncf %52 : vector<8x8xf32> to vector<8x8xbf16>
    %54 = vector.extract_strided_slice %32 {offsets = [0, 8], sizes = [8, 8], strides = [1, 1]} : vector<8x96xbf16> to vector<8x8xbf16>
    %55 = vector.shape_cast %54 : vector<8x8xbf16> to vector<1x8x8xbf16>
    %56 = vector.extract_strided_slice %32 {offsets = [0, 40], sizes = [8, 8], strides = [1, 1]} : vector<8x96xbf16> to vector<8x8xbf16>
    %57 = vector.shape_cast %56 : vector<8x8xbf16> to vector<1x8x8xbf16>
    %58 = vector.extract_strided_slice %32 {offsets = [0, 72], sizes = [8, 8], strides = [1, 1]} : vector<8x96xbf16> to vector<8x8xbf16>
    %59 = vector.shape_cast %58 : vector<8x8xbf16> to vector<1x8x8xbf16>
    "tpu.trace_start"() <{level = 10 : i32, message = "bnd,bmd->bnm"}> : () -> ()
    %cst_19 = arith.constant dense<0.000000e+00> : vector<1x8x8xf32>
    %60 = tpu.matmul %55, %57, %cst_19 {dimension_numbers = #tpu.dot_dimension_numbers<[2], [2], [1], [1], [0, 0, 0, 1, 1, 1], [0], [0]>} : vector<1x8x8xbf16>, vector<1x8x8xbf16>, vector<1x8x8xf32> -> vector<1x8x8xf32>
    "tpu.trace_stop"() : () -> ()
    %cst_20 = arith.constant dense<0xFF800000> : vector<1x8xf32>
    %61 = vector.multi_reduction <maximumf>, %60, %cst_20 [2] : vector<1x8x8xf32> to vector<1x8xf32>
    %62 = vector.shape_cast %61 : vector<1x8xf32> to vector<1x8x1xf32>
    %63 = vector.broadcast %62 : vector<1x8x1xf32> to vector<1x8x8xf32>
    %64 = arith.subf %60, %63 : vector<1x8x8xf32>
    %65 = math.exp %64 : vector<1x8x8xf32>
    %cst_21 = arith.constant dense<0.000000e+00> : vector<1x8xf32>
    %66 = vector.multi_reduction <add>, %65, %cst_21 [2] : vector<1x8x8xf32> to vector<1x8xf32>
    %67 = vector.shape_cast %66 : vector<1x8xf32> to vector<1x8x1xf32>
    %68 = tpu.reciprocal %67 {approx = true} : vector<1x8x1xf32> -> vector<1x8x1xf32>
    %69 = vector.broadcast %68 : vector<1x8x1xf32> to vector<1x8x8xf32>
    %70 = arith.mulf %65, %69 : vector<1x8x8xf32>
    %71 = arith.truncf %70 : vector<1x8x8xf32> to vector<1x8x8xbf16>
    "tpu.trace_start"() <{level = 10 : i32, message = "bnm,bmd->bnd"}> : () -> ()
    %cst_22 = arith.constant dense<0.000000e+00> : vector<1x8x8xf32>
    %72 = tpu.matmul %71, %59, %cst_22 {dimension_numbers = #tpu.dot_dimension_numbers<[2], [1], [1], [2], [0, 0, 0, 1, 1, 2], [0], [0]>} : vector<1x8x8xbf16>, vector<1x8x8xbf16>, vector<1x8x8xf32> -> vector<1x8x8xf32>
    "tpu.trace_stop"() : () -> ()
    %73 = vector.shape_cast %72 : vector<1x8x8xf32> to vector<8x8xf32>
    %74 = arith.truncf %73 : vector<8x8xf32> to vector<8x8xbf16>
    %75 = vector.extract_strided_slice %32 {offsets = [0, 16], sizes = [8, 8], strides = [1, 1]} : vector<8x96xbf16> to vector<8x8xbf16>
    %76 = vector.shape_cast %75 : vector<8x8xbf16> to vector<1x8x8xbf16>
    %77 = vector.extract_strided_slice %32 {offsets = [0, 48], sizes = [8, 8], strides = [1, 1]} : vector<8x96xbf16> to vector<8x8xbf16>
    %78 = vector.shape_cast %77 : vector<8x8xbf16> to vector<1x8x8xbf16>
    %79 = vector.extract_strided_slice %32 {offsets = [0, 80], sizes = [8, 8], strides = [1, 1]} : vector<8x96xbf16> to vector<8x8xbf16>
    %80 = vector.shape_cast %79 : vector<8x8xbf16> to vector<1x8x8xbf16>
    "tpu.trace_start"() <{level = 10 : i32, message = "bnd,bmd->bnm"}> : () -> ()
    %cst_23 = arith.constant dense<0.000000e+00> : vector<1x8x8xf32>
    %81 = tpu.matmul %76, %78, %cst_23 {dimension_numbers = #tpu.dot_dimension_numbers<[2], [2], [1], [1], [0, 0, 0, 1, 1, 1], [0], [0]>} : vector<1x8x8xbf16>, vector<1x8x8xbf16>, vector<1x8x8xf32> -> vector<1x8x8xf32>
    "tpu.trace_stop"() : () -> ()
    %cst_24 = arith.constant dense<0xFF800000> : vector<1x8xf32>
    %82 = vector.multi_reduction <maximumf>, %81, %cst_24 [2] : vector<1x8x8xf32> to vector<1x8xf32>
    %83 = vector.shape_cast %82 : vector<1x8xf32> to vector<1x8x1xf32>
    %84 = vector.broadcast %83 : vector<1x8x1xf32> to vector<1x8x8xf32>
    %85 = arith.subf %81, %84 : vector<1x8x8xf32>
    %86 = math.exp %85 : vector<1x8x8xf32>
    %cst_25 = arith.constant dense<0.000000e+00> : vector<1x8xf32>
    %87 = vector.multi_reduction <add>, %86, %cst_25 [2] : vector<1x8x8xf32> to vector<1x8xf32>
    %88 = vector.shape_cast %87 : vector<1x8xf32> to vector<1x8x1xf32>
    %89 = tpu.reciprocal %88 {approx = true} : vector<1x8x1xf32> -> vector<1x8x1xf32>
    %90 = vector.broadcast %89 : vector<1x8x1xf32> to vector<1x8x8xf32>
    %91 = arith.mulf %86, %90 : vector<1x8x8xf32>
    %92 = arith.truncf %91 : vector<1x8x8xf32> to vector<1x8x8xbf16>
    "tpu.trace_start"() <{level = 10 : i32, message = "bnm,bmd->bnd"}> : () -> ()
    %cst_26 = arith.constant dense<0.000000e+00> : vector<1x8x8xf32>
    %93 = tpu.matmul %92, %80, %cst_26 {dimension_numbers = #tpu.dot_dimension_numbers<[2], [1], [1], [2], [0, 0, 0, 1, 1, 2], [0], [0]>} : vector<1x8x8xbf16>, vector<1x8x8xbf16>, vector<1x8x8xf32> -> vector<1x8x8xf32>
    "tpu.trace_stop"() : () -> ()
    %94 = vector.shape_cast %93 : vector<1x8x8xf32> to vector<8x8xf32>
    %95 = arith.truncf %94 : vector<8x8xf32> to vector<8x8xbf16>
    %96 = vector.extract_strided_slice %32 {offsets = [0, 24], sizes = [8, 8], strides = [1, 1]} : vector<8x96xbf16> to vector<8x8xbf16>
    %97 = vector.shape_cast %96 : vector<8x8xbf16> to vector<1x8x8xbf16>
    %98 = vector.extract_strided_slice %32 {offsets = [0, 56], sizes = [8, 8], strides = [1, 1]} : vector<8x96xbf16> to vector<8x8xbf16>
    %99 = vector.shape_cast %98 : vector<8x8xbf16> to vector<1x8x8xbf16>
    %100 = vector.extract_strided_slice %32 {offsets = [0, 88], sizes = [8, 8], strides = [1, 1]} : vector<8x96xbf16> to vector<8x8xbf16>
    %101 = vector.shape_cast %100 : vector<8x8xbf16> to vector<1x8x8xbf16>
    "tpu.trace_start"() <{level = 10 : i32, message = "bnd,bmd->bnm"}> : () -> ()
    %cst_27 = arith.constant dense<0.000000e+00> : vector<1x8x8xf32>
    %102 = tpu.matmul %97, %99, %cst_27 {dimension_numbers = #tpu.dot_dimension_numbers<[2], [2], [1], [1], [0, 0, 0, 1, 1, 1], [0], [0]>} : vector<1x8x8xbf16>, vector<1x8x8xbf16>, vector<1x8x8xf32> -> vector<1x8x8xf32>
    "tpu.trace_stop"() : () -> ()
    %cst_28 = arith.constant dense<0xFF800000> : vector<1x8xf32>
    %103 = vector.multi_reduction <maximumf>, %102, %cst_28 [2] : vector<1x8x8xf32> to vector<1x8xf32>
    %104 = vector.shape_cast %103 : vector<1x8xf32> to vector<1x8x1xf32>
    %105 = vector.broadcast %104 : vector<1x8x1xf32> to vector<1x8x8xf32>
    %106 = arith.subf %102, %105 : vector<1x8x8xf32>
    %107 = math.exp %106 : vector<1x8x8xf32>
    %cst_29 = arith.constant dense<0.000000e+00> : vector<1x8xf32>
    %108 = vector.multi_reduction <add>, %107, %cst_29 [2] : vector<1x8x8xf32> to vector<1x8xf32>
    %109 = vector.shape_cast %108 : vector<1x8xf32> to vector<1x8x1xf32>
    %110 = tpu.reciprocal %109 {approx = true} : vector<1x8x1xf32> -> vector<1x8x1xf32>
    %111 = vector.broadcast %110 : vector<1x8x1xf32> to vector<1x8x8xf32>
    %112 = arith.mulf %107, %111 : vector<1x8x8xf32>
    %113 = arith.truncf %112 : vector<1x8x8xf32> to vector<1x8x8xbf16>
    "tpu.trace_start"() <{level = 10 : i32, message = "bnm,bmd->bnd"}> : () -> ()
    %cst_30 = arith.constant dense<0.000000e+00> : vector<1x8x8xf32>
    %114 = tpu.matmul %113, %101, %cst_30 {dimension_numbers = #tpu.dot_dimension_numbers<[2], [1], [1], [2], [0, 0, 0, 1, 1, 2], [0], [0]>} : vector<1x8x8xbf16>, vector<1x8x8xbf16>, vector<1x8x8xf32> -> vector<1x8x8xf32>
    "tpu.trace_stop"() : () -> ()
    %115 = vector.shape_cast %114 : vector<1x8x8xf32> to vector<8x8xf32>
    %116 = arith.truncf %115 : vector<8x8xf32> to vector<8x8xbf16>
    %117 = tpu.concatenate %53, %74, %95, %116 in 1 : vector<8x8xbf16>, vector<8x8xbf16>, vector<8x8xbf16>, vector<8x8xbf16> -> vector<8x32xbf16>
    %c0_31 = arith.constant 0 : index
    %c0_32 = arith.constant 0 : index
    %118 = vector.load %arg4[%c0_31, %c0_32] : memref<32x32xbf16, #tpu.memory_space<vmem>>, vector<32x32xbf16>
    %cst_33 = arith.constant dense<0.000000e+00> : vector<8x32xf32>
    %119 = tpu.matmul %117, %118, %cst_33 {dimension_numbers = #tpu.dot_dimension_numbers<[1], [0], [0], [1], [0, 0, 1, 1], [], []>} : vector<8x32xbf16>, vector<32x32xbf16>, vector<8x32xf32> -> vector<8x32xf32>
    %c0_34 = arith.constant 0 : index
    %c0_35 = arith.constant 0 : index
    %120 = vector.load %arg5[%c0_34, %c0_35] : memref<1x32xf32, #tpu.memory_space<vmem>>, vector<1x32xf32>
    %121 = vector.broadcast %120 : vector<1x32xf32> to vector<8x32xf32>
    %122 = arith.addf %119, %121 : vector<8x32xf32>
    %123 = arith.addf %1, %122 : vector<8x32xf32>
    %c0_36 = arith.constant 0 : index
    %c0_37 = arith.constant 0 : index
    %124 = vector.load %arg12[%c0_36, %c0_37] : memref<1x32xf32, #tpu.memory_space<vmem>>, vector<1x32xf32>
    %c0_38 = arith.constant 0 : index
    %c0_39 = arith.constant 0 : index
    %125 = vector.load %arg13[%c0_38, %c0_39] : memref<1x32xf32, #tpu.memory_space<vmem>>, vector<1x32xf32>
    %cst_40 = arith.constant dense<0.000000e+00> : vector<8xf32>
    %126 = vector.multi_reduction <add>, %123, %cst_40 [1] : vector<8x32xf32> to vector<8xf32>
    %127 = vector.shape_cast %126 : vector<8xf32> to vector<8x1xf32>
    %cst_41 = arith.constant 3.200000e+01 : f32
    %128 = vector.broadcast %cst_41 : f32 to vector<8x1xf32>
    %129 = arith.divf %127, %128 : vector<8x1xf32>
    %130 = vector.broadcast %129 : vector<8x1xf32> to vector<8x32xf32>
    %131 = arith.subf %123, %130 : vector<8x32xf32>
    %132 = arith.mulf %131, %131 : vector<8x32xf32>
    %cst_42 = arith.constant dense<0.000000e+00> : vector<8xf32>
    %133 = vector.multi_reduction <add>, %132, %cst_42 [1] : vector<8x32xf32> to vector<8xf32>
    %134 = vector.shape_cast %133 : vector<8xf32> to vector<8x1xf32>
    %cst_43 = arith.constant 3.200000e+01 : f32
    %135 = vector.broadcast %cst_43 : f32 to vector<8x1xf32>
    %136 = arith.divf %134, %135 : vector<8x1xf32>
    %137 = vector.broadcast %129 : vector<8x1xf32> to vector<8x32xf32>
    %138 = arith.subf %123, %137 : vector<8x32xf32>
    %cst_44 = arith.constant 9.99999974E-6 : f32
    %139 = vector.broadcast %cst_44 : f32 to vector<8x1xf32>
    %140 = arith.addf %136, %139 : vector<8x1xf32>
    %141 = math.rsqrt %140 : vector<8x1xf32>
    %142 = vector.broadcast %141 : vector<8x1xf32> to vector<8x32xf32>
    %143 = arith.mulf %138, %142 : vector<8x32xf32>
    %144 = vector.broadcast %124 : vector<1x32xf32> to vector<8x32xf32>
    %145 = arith.mulf %143, %144 : vector<8x32xf32>
    %146 = vector.broadcast %125 : vector<1x32xf32> to vector<8x32xf32>
    %147 = arith.addf %145, %146 : vector<8x32xf32>
    %148 = arith.truncf %147 : vector<8x32xf32> to vector<8x32xbf16>
    %c0_45 = arith.constant 0 : index
    %c0_46 = arith.constant 0 : index
    %149 = vector.load %arg8[%c0_45, %c0_46] : memref<32x128xbf16, #tpu.memory_space<vmem>>, vector<32x128xbf16>
    %cst_47 = arith.constant dense<0.000000e+00> : vector<8x128xf32>
    %150 = tpu.matmul %148, %149, %cst_47 {dimension_numbers = #tpu.dot_dimension_numbers<[1], [0], [0], [1], [0, 0, 1, 1], [], []>} : vector<8x32xbf16>, vector<32x128xbf16>, vector<8x128xf32> -> vector<8x128xf32>
    %c0_48 = arith.constant 0 : index
    %c0_49 = arith.constant 0 : index
    %151 = vector.load %arg9[%c0_48, %c0_49] : memref<1x128xf32, #tpu.memory_space<vmem>>, vector<1x128xf32>
    %152 = vector.broadcast %151 : vector<1x128xf32> to vector<8x128xf32>
    %153 = arith.addf %150, %152 : vector<8x128xf32>
    %cst_50 = arith.constant 1.702000e+00 : f32
    %154 = vector.broadcast %cst_50 : f32 to vector<8x128xf32>
    %155 = arith.mulf %154, %153 : vector<8x128xf32>
    %156 = arith.negf %155 : vector<8x128xf32>
    %157 = math.exp %156 : vector<8x128xf32>
    %cst_51 = arith.constant 1.000000e+00 : f32
    %158 = vector.broadcast %cst_51 : f32 to vector<8x128xf32>
    %159 = arith.addf %158, %157 : vector<8x128xf32>
    %160 = arith.divf %158, %159 : vector<8x128xf32>
    %161 = arith.mulf %153, %160 : vector<8x128xf32>
    %162 = arith.truncf %161 : vector<8x128xf32> to vector<8x128xbf16>
    %c0_52 = arith.constant 0 : index
    %c0_53 = arith.constant 0 : index
    %163 = vector.load %arg10[%c0_52, %c0_53] : memref<128x32xbf16, #tpu.memory_space<vmem>>, vector<128x32xbf16>
    %cst_54 = arith.constant dense<0.000000e+00> : vector<8x32xf32>
    %164 = tpu.matmul %162, %163, %cst_54 {dimension_numbers = #tpu.dot_dimension_numbers<[1], [0], [0], [1], [0, 0, 1, 1], [], []>} : vector<8x128xbf16>, vector<128x32xbf16>, vector<8x32xf32> -> vector<8x32xf32>
    %165 = arith.addf %123, %164 : vector<8x32xf32>
    %c0_55 = arith.constant 0 : index
    %c0_56 = arith.constant 0 : index
    %166 = vector.load %arg11[%c0_55, %c0_56] : memref<1x32xf32, #tpu.memory_space<vmem>>, vector<1x32xf32>
    %167 = vector.broadcast %166 : vector<1x32xf32> to vector<8x32xf32>
    %168 = arith.addf %165, %167 : vector<8x32xf32>
    %169 = vector.shape_cast %168 : vector<8x32xf32> to vector<1x8x32xf32>
    %c0_57 = arith.constant 0 : index
    %c0_58 = arith.constant 0 : index
    %c0_59 = arith.constant 0 : index
    %170 = vector.load %arg14[%c0_57, %c0_58, %c0_59] : memref<1x8x32xf32, #tpu.memory_space<vmem>>, vector<1x8x32xf32>
    tpu.vector_store %arg14[%c0_57, %c0_58, %c0_59], %169 {strides = array<i32>} : memref<1x8x32xf32, #tpu.memory_space<vmem>>, vector<1x8x32xf32>,
    return
  }
  func.func @transform_0(%arg0: i32) -> (i32, i32, i32) {
    %c0_i32 = arith.constant 0 : i32
    %c0_i32_0 = arith.constant 0 : i32
    %c0_i32_1 = arith.constant 0 : i32
    return %arg0, %c0_i32, %c0_i32_0 : i32, i32, i32
  }
  func.func @transform_1(%arg0: i32) -> (i32, i32) {
    %c0_i32 = arith.constant 0 : i32
    %c0_i32_0 = arith.constant 0 : i32
    %c0_i32_1 = arith.constant 0 : i32
    return %c0_i32, %c0_i32_0 : i32, i32
  }
  func.func @transform_2(%arg0: i32) -> (i32, i32) {
    %c0_i32 = arith.constant 0 : i32
    %c0_i32_0 = arith.constant 0 : i32
    %c0_i32_1 = arith.constant 0 : i32
    return %c0_i32, %c0_i32_0 : i32, i32
  }
  func.func @transform_3(%arg0: i32) -> (i32, i32) {
    %c0_i32 = arith.constant 0 : i32
    %c0_i32_0 = arith.constant 0 : i32
    %c0_i32_1 = arith.constant 0 : i32
    return %c0_i32, %c0_i32_0 : i32, i32
  }
  func.func @transform_4(%arg0: i32) -> (i32, i32) {
    %c0_i32 = arith.constant 0 : i32
    %c0_i32_0 = arith.constant 0 : i32
    %c0_i32_1 = arith.constant 0 : i32
    return %c0_i32, %c0_i32_0 : i32, i32
  }
  func.func @transform_5(%arg0: i32) -> (i32, i32) {
    %c0_i32 = arith.constant 0 : i32
    %c0_i32_0 = arith.constant 0 : i32
    %c0_i32_1 = arith.constant 0 : i32
    return %c0_i32, %c0_i32_0 : i32, i32
  }
  func.func @transform_6(%arg0: i32) -> (i32, i32) {
    %c0_i32 = arith.constant 0 : i32
    %c0_i32_0 = arith.constant 0 : i32
    %c0_i32_1 = arith.constant 0 : i32
    return %c0_i32, %c0_i32_0 : i32, i32
  }
  func.func @transform_7(%arg0: i32) -> (i32, i32) {
    %c0_i32 = arith.constant 0 : i32
    %c0_i32_0 = arith.constant 0 : i32
    %c0_i32_1 = arith.constant 0 : i32
    return %c0_i32, %c0_i32_0 : i32, i32
  }
  func.func @transform_8(%arg0: i32) -> (i32, i32) {
    %c0_i32 = arith.constant 0 : i32
    %c0_i32_0 = arith.constant 0 : i32
    %c0_i32_1 = arith.constant 0 : i32
    return %c0_i32, %c0_i32_0 : i32, i32
  }
  func.func @transform_9(%arg0: i32) -> (i32, i32) {
    %c0_i32 = arith.constant 0 : i32
    %c0_i32_0 = arith.constant 0 : i32
    %c0_i32_1 = arith.constant 0 : i32
    return %c0_i32, %c0_i32_0 : i32, i32
  }
  func.func @transform_10(%arg0: i32) -> (i32, i32) {
    %c0_i32 = arith.constant 0 : i32
    %c0_i32_0 = arith.constant 0 : i32
    %c0_i32_1 = arith.constant 0 : i32
    return %c0_i32, %c0_i32_0 : i32, i32
  }
  func.func @transform_11(%arg0: i32) -> (i32, i32) {
    %c0_i32 = arith.constant 0 : i32
    %c0_i32_0 = arith.constant 0 : i32
    %c0_i32_1 = arith.constant 0 : i32
    return %c0_i32, %c0_i32_0 : i32, i32
  }
  func.func @transform_12(%arg0: i32) -> (i32, i32) {
    %c0_i32 = arith.constant 0 : i32
    %c0_i32_0 = arith.constant 0 : i32
    %c0_i32_1 = arith.constant 0 : i32
    return %c0_i32, %c0_i32_0 : i32, i32
  }
  func.func @transform_13(%arg0: i32) -> (i32, i32, i32) {
    %c0_i32 = arith.constant 0 : i32
    %c0_i32_0 = arith.constant 0 : i32
    %c0_i32_1 = arith.constant 0 : i32
    return %arg0, %c0_i32, %c0_i32_0 : i32, i32, i32
  }
}

module attributes {stable_mosaic.version = 11 : i64} {
  func.func @residual_attention_block_kernel(%arg0: i32, %arg1: memref<1x8x32xf32, #tpu.memory_space<vmem>>, %arg2: memref<32x96xbf16, #tpu.memory_space<vmem>>, %arg3: memref<1x96xf32, #tpu.memory_space<vmem>>, %arg4: memref<32x32xbf16, #tpu.memory_space<vmem>>, %arg5: memref<1x32xf32, #tpu.memory_space<vmem>>, %arg6: memref<1x32xf32, #tpu.memory_space<vmem>>, %arg7: memref<1x32xf32, #tpu.memory_space<vmem>>, %arg8: memref<32x128xbf16, #tpu.memory_space<vmem>>, %arg9: memref<1x128xf32, #tpu.memory_space<vmem>>, %arg10: memref<128x32xbf16, #tpu.memory_space<vmem>>, %arg11: memref<1x32xf32, #tpu.memory_space<vmem>>, %arg12: memref<1x32xf32, #tpu.memory_space<vmem>>, %arg13: memref<1x32xf32, #tpu.memory_space<vmem>>, %arg14: memref<1x8x32xf32, #tpu.memory_space<vmem>>) attributes {dimension_semantics = [#tpu.dimension_semantics<parallel>], iteration_bounds = array<i64: 2>, scalar_prefetch = 0 : i64, scratch_operands = 0 : i64, tpu.core_type = #tpu.core_type<tc>, window_params = [{transform_indices = @transform_0, window_bounds = array<i64: 1, 8, 32>}, {pipeline_mode = #tpu.pipeline_mode<synchronous>, transform_indices = @transform_1, window_bounds = array<i64: 32, 96>}, {pipeline_mode = #tpu.pipeline_mode<synchronous>, transform_indices = @transform_2, window_bounds = array<i64: 1, 96>}, {pipeline_mode = #tpu.pipeline_mode<synchronous>, transform_indices = @transform_3, window_bounds = array<i64: 32, 32>}, {pipeline_mode = #tpu.pipeline_mode<synchronous>, transform_indices = @transform_4, window_bounds = array<i64: 1, 32>}, {pipeline_mode = #tpu.pipeline_mode<synchronous>, transform_indices = @transform_5, window_bounds = array<i64: 1, 32>}, {pipeline_mode = #tpu.pipeline_mode<synchronous>, transform_indices = @transform_6, window_bounds = array<i64: 1, 32>}, {pipeline_mode = #tpu.pipeline_mode<synchronous>, transform_indices = @transform_7, window_bounds = array<i64: 32, 128>}, {pipeline_mode = #tpu.pipeline_mode<synchronous>, transform_indices = @transform_8, window_bounds = array<i64: 1, 128>}, {pipeline_mode = #tpu.pipeline_mode<synchronous>, transform_indices = @transform_9, window_bounds = array<i64: 128, 32>}, {pipeline_mode = #tpu.pipeline_mode<synchronous>, transform_indices = @transform_10, window_bounds = array<i64: 1, 32>}, {pipeline_mode = #tpu.pipeline_mode<synchronous>, transform_indices = @transform_11, window_bounds = array<i64: 1, 32>}, {pipeline_mode = #tpu.pipeline_mode<synchronous>, transform_indices = @transform_12, window_bounds = array<i64: 1, 32>}, {transform_indices = @transform_13, window_bounds = array<i64: 1, 8, 32>}]} {
    %c0 = arith.constant 0 : index
    %c0_0 = arith.constant 0 : index
    %c0_1 = arith.constant 0 : index
    %0 = vector.load %arg1[%c0, %c0_0, %c0_1] : memref<1x8x32xf32, #tpu.memory_space<vmem>>, vector<1x8x32xf32>
    %1 = vector.shape_cast %0 : vector<1x8x32xf32> to vector<8x32xf32>
    %c0_2 = arith.constant 0 : index
    %c0_3 = arith.constant 0 : index
    %2 = vector.load %arg6[%c0_2, %c0_3] : memref<1x32xf32, #tpu.memory_space<vmem>>, vector<1x32xf32>
    %c0_4 = arith.constant 0 : index
    %c0_5 = arith.constant 0 : index
    %3 = vector.load %arg7[%c0_4, %c0_5] : memref<1x32xf32, #tpu.memory_space<vmem>>, vector<1x32xf32>
    %cst = arith.constant dense<0.000000e+00> : vector<8xf32>
    %4 = vector.multi_reduction <add>, %1, %cst [1] : vector<8x32xf32> to vector<8xf32>
    %5 = vector.shape_cast %4 : vector<8xf32> to vector<8x1xf32>
    %cst_6 = arith.constant 3.200000e+01 : f32
    %6 = vector.broadcast %cst_6 : f32 to vector<8x1xf32>
    %7 = arith.divf %5, %6 : vector<8x1xf32>
    %8 = vector.broadcast %7 : vector<8x1xf32> to vector<8x32xf32>
    %9 = arith.subf %1, %8 : vector<8x32xf32>
    %10 = arith.mulf %9, %9 : vector<8x32xf32>
    %cst_7 = arith.constant dense<0.000000e+00> : vector<8xf32>
    %11 = vector.multi_reduction <add>, %10, %cst_7 [1] : vector<8x32xf32> to vector<8xf32>
    %12 = vector.shape_cast %11 : vector<8xf32> to vector<8x1xf32>
    %cst_8 = arith.constant 3.200000e+01 : f32
    %13 = vector.broadcast %cst_8 : f32 to vector<8x1xf32>
    %14 = arith.divf %12, %13 : vector<8x1xf32>
    %15 = vector.broadcast %7 : vector<8x1xf32> to vector<8x32xf32>
    %16 = arith.subf %1, %15 : vector<8x32xf32>
    %cst_9 = arith.constant 9.99999974E-6 : f32
    %17 = vector.broadcast %cst_9 : f32 to vector<8x1xf32>
    %18 = arith.addf %14, %17 : vector<8x1xf32>
    %19 = math.rsqrt %18 : vector<8x1xf32>
    %20 = vector.broadcast %19 : vector<8x1xf32> to vector<8x32xf32>
    %21 = arith.mulf %16, %20 : vector<8x32xf32>
    %22 = vector.broadcast %2 : vector<1x32xf32> to vector<8x32xf32>
    %23 = arith.mulf %21, %22 : vector<8x32xf32>
    %24 = vector.broadcast %3 : vector<1x32xf32> to vector<8x32xf32>
    %25 = arith.addf %23, %24 : vector<8x32xf32>
    %26 = arith.truncf %25 : vector<8x32xf32> to vector<8x32xbf16>
    %c0_10 = arith.constant 0 : index
    %c0_11 = arith.constant 0 : index
    %27 = vector.load %arg2[%c0_10, %c0_11] : memref<32x96xbf16, #tpu.memory_space<vmem>>, vector<32x96xbf16>
    %cst_12 = arith.constant dense<0.000000e+00> : vector<8x96xf32>
    %28 = tpu.matmul %26, %27, %cst_12 {dimension_numbers = #tpu.dot_dimension_numbers<[1], [0], [0], [1], [0, 0, 1, 1], [], []>} : vector<8x32xbf16>, vector<32x96xbf16>, vector<8x96xf32> -> vector<8x96xf32>
    %c0_13 = arith.constant 0 : index
    %c0_14 = arith.constant 0 : index
    %29 = vector.load %arg3[%c0_13, %c0_14] : memref<1x96xf32, #tpu.memory_space<vmem>>, vector<1x96xf32>
    %30 = vector.broadcast %29 : vector<1x96xf32> to vector<8x96xf32>
    %31 = arith.addf %28, %30 : vector<8x96xf32>
    %32 = arith.truncf %31 : vector<8x96xf32> to vector<8x96xbf16>
    %33 = vector.extract_strided_slice %32 {offsets = [0, 0], sizes = [8, 8], strides = [1, 1]} : vector<8x96xbf16> to vector<8x8xbf16>
    %34 = vector.shape_cast %33 : vector<8x8xbf16> to vector<1x8x8xbf16>
    %35 = vector.extract_strided_slice %32 {offsets = [0, 32], sizes = [8, 8], strides = [1, 1]} : vector<8x96xbf16> to vector<8x8xbf16>
    %36 = vector.shape_cast %35 : vector<8x8xbf16> to vector<1x8x8xbf16>
    %37 = vector.extract_strided_slice %32 {offsets = [0, 64], sizes = [8, 8], strides = [1, 1]} : vector<8x96xbf16> to vector<8x8xbf16>
    %38 = vector.shape_cast %37 : vector<8x8xbf16> to vector<1x8x8xbf16>
    "tpu.trace_start"() <{level = 10 : i32, message = "bnd,bmd->bnm"}> : () -> ()
    %cst_15 = arith.constant dense<0.000000e+00> : vector<1x8x8xf32>
    %39 = tpu.matmul %34, %36, %cst_15 {dimension_numbers = #tpu.dot_dimension_numbers<[2], [2], [1], [1], [0, 0, 0, 1, 1, 1], [0], [0]>} : vector<1x8x8xbf16>, vector<1x8x8xbf16>, vector<1x8x8xf32> -> vector<1x8x8xf32>
    "tpu.trace_stop"() : () -> ()
    %cst_16 = arith.constant dense<0xFF800000> : vector<1x8xf32>
    %40 = vector.multi_reduction <maximumf>, %39, %cst_16 [2] : vector<1x8x8xf32> to vector<1x8xf32>
    %41 = vector.shape_cast %40 : vector<1x8xf32> to vector<1x8x1xf32>
    %42 = vector.broadcast %41 : vector<1x8x1xf32> to vector<1x8x8xf32>
    %43 = arith.subf %39, %42 : vector<1x8x8xf32>
    %44 = math.exp %43 : vector<1x8x8xf32>
    %cst_17 = arith.constant dense<0.000000e+00> : vector<1x8xf32>
    %45 = vector.multi_reduction <add>, %44, %cst_17 [2] : vector<1x8x8xf32> to vector<1x8xf32>
    %46 = vector.shape_cast %45 : vector<1x8xf32> to vector<1x8x1xf32>
    %47 = tpu.reciprocal %46 {approx = true} : vector<1x8x1xf32> -> vector<1x8x1xf32>
    %48 = vector.broadcast %47 : vector<1x8x1xf32> to vector<1x8x8xf32>
    %49 = arith.mulf %44, %48 : vector<1x8x8xf32>
    %50 = arith.truncf %49 : vector<1x8x8xf32> to vector<1x8x8xbf16>
    "tpu.trace_start"() <{level = 10 : i32, message = "bnm,bmd->bnd"}> : () -> ()
    %cst_18 = arith.constant dense<0.000000e+00> : vector<1x8x8xf32>
    %51 = tpu.matmul %50, %38, %cst_18 {dimension_numbers = #tpu.dot_dimension_numbers<[2], [1], [1], [2], [0, 0, 0, 1, 1, 2], [0], [0]>} : vector<1x8x8xbf16>, vector<1x8x8xbf16>, vector<1x8x8xf32> -> vector<1x8x8xf32>
    "tpu.trace_stop"() : () -> ()
    %52 = vector.shape_cast %51 : vector<1x8x8xf32> to vector<8x8xf32>
    %53 = arith.truncf %52 : vector<8x8xf32> to vector<8x8xbf16>
    %54 = vector.extract_strided_slice %32 {offsets = [0, 8], sizes = [8, 8], strides = [1, 1]} : vector<8x96xbf16> to vector<8x8xbf16>
    %55 = vector.shape_cast %54 : vector<8x8xbf16> to vector<1x8x8xbf16>
    %56 = vector.extract_strided_slice %32 {offsets = [0, 40], sizes = [8, 8], strides = [1, 1]} : vector<8x96xbf16> to vector<8x8xbf16>
    %57 = vector.shape_cast %56 : vector<8x8xbf16> to vector<1x8x8xbf16>
    %58 = vector.extract_strided_slice %32 {offsets = [0, 72], sizes = [8, 8], strides = [1, 1]} : vector<8x96xbf16> to vector<8x8xbf16>
    %59 = vector.shape_cast %58 : vector<8x8xbf16> to vector<1x8x8xbf16>
    "tpu.trace_start"() <{level = 10 : i32, message = "bnd,bmd->bnm"}> : () -> ()
    %cst_19 = arith.constant dense<0.000000e+00> : vector<1x8x8xf32>
    %60 = tpu.matmul %55, %57, %cst_19 {dimension_numbers = #tpu.dot_dimension_numbers<[2], [2], [1], [1], [0, 0, 0, 1, 1, 1], [0], [0]>} : vector<1x8x8xbf16>, vector<1x8x8xbf16>, vector<1x8x8xf32> -> vector<1x8x8xf32>
    "tpu.trace_stop"() : () -> ()
    %cst_20 = arith.constant dense<0xFF800000> : vector<1x8xf32>
    %61 = vector.multi_reduction <maximumf>, %60, %cst_20 [2] : vector<1x8x8xf32> to vector<1x8xf32>
    %62 = vector.shape_cast %61 : vector<1x8xf32> to vector<1x8x1xf32>
    %63 = vector.broadcast %62 : vector<1x8x1xf32> to vector<1x8x8xf32>
    %64 = arith.subf %60, %63 : vector<1x8x8xf32>
    %65 = math.exp %64 : vector<1x8x8xf32>
    %cst_21 = arith.constant dense<0.000000e+00> : vector<1x8xf32>
    %66 = vector.multi_reduction <add>, %65, %cst_21 [2] : vector<1x8x8xf32> to vector<1x8xf32>
    %67 = vector.shape_cast %66 : vector<1x8xf32> to vector<1x8x1xf32>
    %68 = tpu.reciprocal %67 {approx = true} : vector<1x8x1xf32> -> vector<1x8x1xf32>
    %69 = vector.broadcast %68 : vector<1x8x1xf32> to vector<1x8x8xf32>
    %70 = arith.mulf %65, %69 : vector<1x8x8xf32>
    %71 = arith.truncf %70 : vector<1x8x8xf32> to vector<1x8x8xbf16>
    "tpu.trace_start"() <{level = 10 : i32, message = "bnm,bmd->bnd"}> : () -> ()
    %cst_22 = arith.constant dense<0.000000e+00> : vector<1x8x8xf32>
    %72 = tpu.matmul %71, %59, %cst_22 {dimension_numbers = #tpu.dot_dimension_numbers<[2], [1], [1], [2], [0, 0, 0, 1, 1, 2], [0], [0]>} : vector<1x8x8xbf16>, vector<1x8x8xbf16>, vector<1x8x8xf32> -> vector<1x8x8xf32>
    "tpu.trace_stop"() : () -> ()
    %73 = vector.shape_cast %72 : vector<1x8x8xf32> to vector<8x8xf32>
    %74 = arith.truncf %73 : vector<8x8xf32> to vector<8x8xbf16>
    %75 = vector.extract_strided_slice %32 {offsets = [0, 16], sizes = [8, 8], strides = [1, 1]} : vector<8x96xbf16> to vector<8x8xbf16>
    %76 = vector.shape_cast %75 : vector<8x8xbf16> to vector<1x8x8xbf16>
    %77 = vector.extract_strided_slice %32 {offsets = [0, 48], sizes = [8, 8], strides = [1, 1]} : vector<8x96xbf16> to vector<8x8xbf16>
    %78 = vector.shape_cast %77 : vector<8x8xbf16> to vector<1x8x8xbf16>
    %79 = vector.extract_strided_slice %32 {offsets = [0, 80], sizes = [8, 8], strides = [1, 1]} : vector<8x96xbf16> to vector<8x8xbf16>
    %80 = vector.shape_cast %79 : vector<8x8xbf16> to vector<1x8x8xbf16>
    "tpu.trace_start"() <{level = 10 : i32, message = "bnd,bmd->bnm"}> : () -> ()
    %cst_23 = arith.constant dense<0.000000e+00> : vector<1x8x8xf32>
    %81 = tpu.matmul %76, %78, %cst_23 {dimension_numbers = #tpu.dot_dimension_numbers<[2], [2], [1], [1], [0, 0, 0, 1, 1, 1], [0], [0]>} : vector<1x8x8xbf16>, vector<1x8x8xbf16>, vector<1x8x8xf32> -> vector<1x8x8xf32>
    "tpu.trace_stop"() : () -> ()
    %cst_24 = arith.constant dense<0xFF800000> : vector<1x8xf32>
    %82 = vector.multi_reduction <maximumf>, %81, %cst_24 [2] : vector<1x8x8xf32> to vector<1x8xf32>
    %83 = vector.shape_cast %82 : vector<1x8xf32> to vector<1x8x1xf32>
    %84 = vector.broadcast %83 : vector<1x8x1xf32> to vector<1x8x8xf32>
    %85 = arith.subf %81, %84 : vector<1x8x8xf32>
    %86 = math.exp %85 : vector<1x8x8xf32>
    %cst_25 = arith.constant dense<0.000000e+00> : vector<1x8xf32>
    %87 = vector.multi_reduction <add>, %86, %cst_25 [2] : vector<1x8x8xf32> to vector<1x8xf32>
    %88 = vector.shape_cast %87 : vector<1x8xf32> to vector<1x8x1xf32>
    %89 = tpu.reciprocal %88 {approx = true} : vector<1x8x1xf32> -> vector<1x8x1xf32>
    %90 = vector.broadcast %89 : vector<1x8x1xf32> to vector<1x8x8xf32>
    %91 = arith.mulf %86, %90 : vector<1x8x8xf32>
    %92 = arith.truncf %91 : vector<1x8x8xf32> to vector<1x8x8xbf16>
    "tpu.trace_start"() <{level = 10 : i32, message = "bnm,bmd->bnd"}> : () -> ()
    %cst_26 = arith.constant dense<0.000000e+00> : vector<1x8x8xf32>
    %93 = tpu.matmul %92, %80, %cst_26 {dimension_numbers = #tpu.dot_dimension_numbers<[2], [1], [1], [2], [0, 0, 0, 1, 1, 2], [0], [0]>} : vector<1x8x8xbf16>, vector<1x8x8xbf16>, vector<1x8x8xf32> -> vector<1x8x8xf32>
    "tpu.trace_stop"() : () -> ()
    %94 = vector.shape_cast %93 : vector<1x8x8xf32> to vector<8x8xf32>
    %95 = arith.truncf %94 : vector<8x8xf32> to vector<8x8xbf16>
    %96 = vector.extract_strided_slice %32 {offsets = [0, 24], sizes = [8, 8], strides = [1, 1]} : vector<8x96xbf16> to vector<8x8xbf16>
    %97 = vector.shape_cast %96 : vector<8x8xbf16> to vector<1x8x8xbf16>
    %98 = vector.extract_strided_slice %32 {offsets = [0, 56], sizes = [8, 8], strides = [1, 1]} : vector<8x96xbf16> to vector<8x8xbf16>
    %99 = vector.shape_cast %98 : vector<8x8xbf16> to vector<1x8x8xbf16>
    %100 = vector.extract_strided_slice %32 {offsets = [0, 88], sizes = [8, 8], strides = [1, 1]} : vector<8x96xbf16> to vector<8x8xbf16>
    %101 = vector.shape_cast %100 : vector<8x8xbf16> to vector<1x8x8xbf16>
    "tpu.trace_start"() <{level = 10 : i32, message = "bnd,bmd->bnm"}> : () -> ()
    %cst_27 = arith.constant dense<0.000000e+00> : vector<1x8x8xf32>
    %102 = tpu.matmul %97, %99, %cst_27 {dimension_numbers = #tpu.dot_dimension_numbers<[2], [2], [1], [1], [0, 0, 0, 1, 1, 1], [0], [0]>} : vector<1x8x8xbf16>, vector<1x8x8xbf16>, vector<1x8x8xf32> -> vector<1x8x8xf32>
    "tpu.trace_stop"() : () -> ()
    %cst_28 = arith.constant dense<0xFF800000> : vector<1x8xf32>
    %103 = vector.multi_reduction <maximumf>, %102, %cst_28 [2] : vector<1x8x8xf32> to vector<1x8xf32>
    %104 = vector.shape_cast %103 : vector<1x8xf32> to vector<1x8x1xf32>
    %105 = vector.broadcast %104 : vector<1x8x1xf32> to vector<1x8x8xf32>
    %106 = arith.subf %102, %105 : vector<1x8x8xf32>
    %107 = math.exp %106 : vector<1x8x8xf32>
    %cst_29 = arith.constant dense<0.000000e+00> : vector<1x8xf32>
    %108 = vector.multi_reduction <add>, %107, %cst_29 [2] : vector<1x8x8xf32> to vector<1x8xf32>
    %109 = vector.shape_cast %108 : vector<1x8xf32> to vector<1x8x1xf32>
    %110 = tpu.reciprocal %109 {approx = true} : vector<1x8x1xf32> -> vector<1x8x1xf32>
    %111 = vector.broadcast %110 : vector<1x8x1xf32> to vector<1x8x8xf32>
    %112 = arith.mulf %107, %111 : vector<1x8x8xf32>
    %113 = arith.truncf %112 : vector<1x8x8xf32> to vector<1x8x8xbf16>
    "tpu.trace_start"() <{level = 10 : i32, message = "bnm,bmd->bnd"}> : () -> ()
    %cst_30 = arith.constant dense<0.000000e+00> : vector<1x8x8xf32>
    %114 = tpu.matmul %113, %101, %cst_30 {dimension_numbers = #tpu.dot_dimension_numbers<[2], [1], [1], [2], [0, 0, 0, 1, 1, 2], [0], [0]>} : vector<1x8x8xbf16>, vector<1x8x8xbf16>, vector<1x8x8xf32> -> vector<1x8x8xf32>
    "tpu.trace_stop"() : () -> ()
    %115 = vector.shape_cast %114 : vector<1x8x8xf32> to vector<8x8xf32>
    %116 = arith.truncf %115 : vector<8x8xf32> to vector<8x8xbf16>
    %117 = tpu.concatenate %53, %74, %95, %116 in 1 : vector<8x8xbf16>, vector<8x8xbf16>, vector<8x8xbf16>, vector<8x8xbf16> -> vector<8x32xbf16>
    %c0_31 = arith.constant 0 : index
    %c0_32 = arith.constant 0 : index
    %118 = vector.load %arg4[%c0_31, %c0_32] : memref<32x32xbf16, #tpu.memory_space<vmem>>, vector<32x32xbf16>
    %cst_33 = arith.constant dense<0.000000e+00> : vector<8x32xf32>
    %119 = tpu.matmul %117, %118, %cst_33 {dimension_numbers = #tpu.dot_dimension_numbers<[1], [0], [0], [1], [0, 0, 1, 1], [], []>} : vector<8x32xbf16>, vector<32x32xbf16>, vector<8x32xf32> -> vector<8x32xf32>
    %c0_34 = arith.constant 0 : index
    %c0_35 = arith.constant 0 : index
    %120 = vector.load %arg5[%c0_34, %c0_35] : memref<1x32xf32, #tpu.memory_space<vmem>>, vector<1x32xf32>
    %121 = vector.broadcast %120 : vector<1x32xf32> to vector<8x32xf32>
    %122 = arith.addf %119, %121 : vector<8x32xf32>
    %123 = arith.addf %1, %122 : vector<8x32xf32>
    %c0_36 = arith.constant 0 : index
    %c0_37 = arith.constant 0 : index
    %124 = vector.load %arg12[%c0_36, %c0_37] : memref<1x32xf32, #tpu.memory_space<vmem>>, vector<1x32xf32>
    %c0_38 = arith.constant 0 : index
    %c0_39 = arith.constant 0 : index
    %125 = vector.load %arg13[%c0_38, %c0_39] : memref<1x32xf32, #tpu.memory_space<vmem>>, vector<1x32xf32>
    %cst_40 = arith.constant dense<0.000000e+00> : vector<8xf32>
    %126 = vector.multi_reduction <add>, %123, %cst_40 [1] : vector<8x32xf32> to vector<8xf32>
    %127 = vector.shape_cast %126 : vector<8xf32> to vector<8x1xf32>
    %cst_41 = arith.constant 3.200000e+01 : f32
    %128 = vector.broadcast %cst_41 : f32 to vector<8x1xf32>
    %129 = arith.divf %127, %128 : vector<8x1xf32>
    %130 = vector.broadcast %129 : vector<8x1xf32> to vector<8x32xf32>
    %131 = arith.subf %123, %130 : vector<8x32xf32>
    %132 = arith.mulf %131, %131 : vector<8x32xf32>
    %cst_42 = arith.constant dense<0.000000e+00> : vector<8xf32>
    %133 = vector.multi_reduction <add>, %132, %cst_42 [1] : vector<8x32xf32> to vector<8xf32>
    %134 = vector.shape_cast %133 : vector<8xf32> to vector<8x1xf32>
    %cst_43 = arith.constant 3.200000e+01 : f32
    %135 = vector.broadcast %cst_43 : f32 to vector<8x1xf32>
    %136 = arith.divf %134, %135 : vector<8x1xf32>
    %137 = vector.broadcast %129 : vector<8x1xf32> to vector<8x32xf32>
    %138 = arith.subf %123, %137 : vector<8x32xf32>
    %cst_44 = arith.constant 9.99999974E-6 : f32
    %139 = vector.broadcast %cst_44 : f32 to vector<8x1xf32>
    %140 = arith.addf %136, %139 : vector<8x1xf32>
    %141 = math.rsqrt %140 : vector<8x1xf32>
    %142 = vector.broadcast %141 : vector<8x1xf32> to vector<8x32xf32>
    %143 = arith.mulf %138, %142 : vector<8x32xf32>
    %144 = vector.broadcast %124 : vector<1x32xf32> to vector<8x32xf32>
    %145 = arith.mulf %143, %144 : vector<8x32xf32>
    %146 = vector.broadcast %125 : vector<1x32xf32> to vector<8x32xf32>
    %147 = arith.addf %145, %146 : vector<8x32xf32>
    %148 = arith.truncf %147 : vector<8x32xf32> to vector<8x32xbf16>
    %c0_45 = arith.constant 0 : index
    %c0_46 = arith.constant 0 : index
    %149 = vector.load %arg8[%c0_45, %c0_46] : memref<32x128xbf16, #tpu.memory_space<vmem>>, vector<32x128xbf16>
    %cst_47 = arith.constant dense<0.000000e+00> : vector<8x128xf32>
    %150 = tpu.matmul %148, %149, %cst_47 {dimension_numbers = #tpu.dot_dimension_numbers<[1], [0], [0], [1], [0, 0, 1, 1], [], []>} : vector<8x32xbf16>, vector<32x128xbf16>, vector<8x128xf32> -> vector<8x128xf32>
    %c0_48 = arith.constant 0 : index
    %c0_49 = arith.constant 0 : index
    %151 = vector.load %arg9[%c0_48, %c0_49] : memref<1x128xf32, #tpu.memory_space<vmem>>, vector<1x128xf32>
    %152 = vector.broadcast %151 : vector<1x128xf32> to vector<8x128xf32>
    %153 = arith.addf %150, %152 : vector<8x128xf32>
    %cst_50 = arith.constant 1.702000e+00 : f32
    %154 = vector.broadcast %cst_50 : f32 to vector<8x128xf32>
    %155 = arith.mulf %154, %153 : vector<8x128xf32>
    %156 = arith.negf %155 : vector<8x128xf32>
    %157 = math.exp %156 : vector<8x128xf32>
    %cst_51 = arith.constant 1.000000e+00 : f32
    %158 = vector.broadcast %cst_51 : f32 to vector<8x128xf32>
    %159 = arith.addf %158, %157 : vector<8x128xf32>
    %160 = arith.divf %158, %159 : vector<8x128xf32>
    %161 = arith.mulf %153, %160 : vector<8x128xf32>
    %162 = arith.truncf %161 : vector<8x128xf32> to vector<8x128xbf16>
    %c0_52 = arith.constant 0 : index
    %c0_53 = arith.constant 0 : index
    %163 = vector.load %arg10[%c0_52, %c0_53] : memref<128x32xbf16, #tpu.memory_space<vmem>>, vector<128x32xbf16>
    %cst_54 = arith.constant dense<0.000000e+00> : vector<8x32xf32>
    %164 = tpu.matmul %162, %163, %cst_54 {dimension_numbers = #tpu.dot_dimension_numbers<[1], [0], [0], [1], [0, 0, 1, 1], [], []>} : vector<8x128xbf16>, vector<128x32xbf16>, vector<8x32xf32> -> vector<8x32xf32>
    %165 = arith.addf %123, %164 : vector<8x32xf32>
    %c0_55 = arith.constant 0 : index
    %c0_56 = arith.constant 0 : index
    %166 = vector.load %arg11[%c0_55, %c0_56] : memref<1x32xf32, #tpu.memory_space<vmem>>, vector<1x32xf32>
    %167 = vector.broadcast %166 : vector<1x32xf32> to vector<8x32xf32>
    %168 = arith.addf %165, %167 : vector<8x32xf32>
    %169 = vector.shape_cast %168 : vector<8x32xf32> to vector<1x8x32xf32>
    %c0_57 = arith.constant 0 : index
    %c0_58 = arith.constant 0 : index
    %c0_59 = arith.constant 0 : index
    %170 = vector.load %arg14[%c0_57, %c0_58, %c0_59] : memref<1x8x32xf32, #tpu.memory_space<vmem>>, vector<1x8x32xf32>
    tpu.vector_store %arg14[%c0_57, %c0_58, %c0_59], %169 {strides = array<i32>} : memref<1x8x32xf32, #tpu.memory_space<vmem>>, vector<1x8x32xf32>,
    return
  }
  func.func @transform_0(%arg0: i32) -> (i32, i32, i32) {
    %c0_i32 = arith.constant 0 : i32
    %c0_i32_0 = arith.constant 0 : i32
    %c0_i32_1 = arith.constant 0 : i32
    return %arg0, %c0_i32, %c0_i32_0 : i32, i32, i32
  }
  func.func @transform_1(%arg0: i32) -> (i32, i32) {
    %c0_i32 = arith.constant 0 : i32
    %c0_i32_0 = arith.constant 0 : i32
    %c0_i32_1 = arith.constant 0 : i32
    return %c0_i32, %c0_i32_0 : i32, i32
  }
  func.func @transform_2(%arg0: i32) -> (i32, i32) {
    %c0_i32 = arith.constant 0 : i32
    %c0_i32_0 = arith.constant 0 : i32
    %c0_i32_1 = arith.constant 0 : i32
    return %c0_i32, %c0_i32_0 : i32, i32
  }
  func.func @transform_3(%arg0: i32) -> (i32, i32) {
    %c0_i32 = arith.constant 0 : i32
    %c0_i32_0 = arith.constant 0 : i32
    %c0_i32_1 = arith.constant 0 : i32
    return %c0_i32, %c0_i32_0 : i32, i32
  }
  func.func @transform_4(%arg0: i32) -> (i32, i32) {
    %c0_i32 = arith.constant 0 : i32
    %c0_i32_0 = arith.constant 0 : i32
    %c0_i32_1 = arith.constant 0 : i32
    return %c0_i32, %c0_i32_0 : i32, i32
  }
  func.func @transform_5(%arg0: i32) -> (i32, i32) {
    %c0_i32 = arith.constant 0 : i32
    %c0_i32_0 = arith.constant 0 : i32
    %c0_i32_1 = arith.constant 0 : i32
    return %c0_i32, %c0_i32_0 : i32, i32
  }
  func.func @transform_6(%arg0: i32) -> (i32, i32) {
    %c0_i32 = arith.constant 0 : i32
    %c0_i32_0 = arith.constant 0 : i32
    %c0_i32_1 = arith.constant 0 : i32
    return %c0_i32, %c0_i32_0 : i32, i32
  }
  func.func @transform_7(%arg0: i32) -> (i32, i32) {
    %c0_i32 = arith.constant 0 : i32
    %c0_i32_0 = arith.constant 0 : i32
    %c0_i32_1 = arith.constant 0 : i32
    return %c0_i32, %c0_i32_0 : i32, i32
  }
  func.func @transform_8(%arg0: i32) -> (i32, i32) {
    %c0_i32 = arith.constant 0 : i32
    %c0_i32_0 = arith.constant 0 : i32
    %c0_i32_1 = arith.constant 0 : i32
    return %c0_i32, %c0_i32_0 : i32, i32
  }
  func.func @transform_9(%arg0: i32) -> (i32, i32) {
    %c0_i32 = arith.constant 0 : i32
    %c0_i32_0 = arith.constant 0 : i32
    %c0_i32_1 = arith.constant 0 : i32
    return %c0_i32, %c0_i32_0 : i32, i32
  }
  func.func @transform_10(%arg0: i32) -> (i32, i32) {
    %c0_i32 = arith.constant 0 : i32
    %c0_i32_0 = arith.constant 0 : i32
    %c0_i32_1 = arith.constant 0 : i32
    return %c0_i32, %c0_i32_0 : i32, i32
  }
  func.func @transform_11(%arg0: i32) -> (i32, i32) {
    %c0_i32 = arith.constant 0 : i32
    %c0_i32_0 = arith.constant 0 : i32
    %c0_i32_1 = arith.constant 0 : i32
    return %c0_i32, %c0_i32_0 : i32, i32
  }
  func.func @transform_12(%arg0: i32) -> (i32, i32) {
    %c0_i32 = arith.constant 0 : i32
    %c0_i32_0 = arith.constant 0 : i32
    %c0_i32_1 = arith.constant 0 : i32
    return %c0_i32, %c0_i32_0 : i32, i32
  }
  func.func @transform_13(%arg0: i32) -> (i32, i32, i32) {
    %c0_i32 = arith.constant 0 : i32
    %c0_i32_0 = arith.constant 0 : i32
    %c0_i32_1 = arith.constant 0 : i32
    return %arg0, %c0_i32, %c0_i32_0 : i32, i32, i32
  }
}

</mosaic_0001>

<llo_original>
// kernel: tpu_custom_call.1
$region0: #{tpu_custom_call.1}
  #allocation0 [shape = 'u32[]', space=smem, size = 0x4, offset = 0x4, fixed_abs, tag = 'smem constant byte address 0x4 - core index']
  #allocation1 [shape = 'u32[144,128]{1,0:T(1,128)}', space=vmem, size = 0x12000, scoped, tag = 'internal scratch']
  %s0 = inlined_call_operand.vmem [shape: f32[2,8,32], index: 0, kind: input, shape index: {}]
  %s1 = inlined_call_operand.vmem [shape: bf16[32,96], index: 1, kind: input, shape index: {}]
  %s2 = inlined_call_operand.vmem [shape: f32[1,96], index: 2, kind: input, shape index: {}]
  %s3 = inlined_call_operand.vmem [shape: bf16[32,32], index: 3, kind: input, shape index: {}]
  %s4 = inlined_call_operand.vmem [shape: f32[1,32], index: 4, kind: input, shape index: {}]
  %s5 = inlined_call_operand.vmem [shape: f32[1,32], index: 5, kind: input, shape index: {}]
  %s6 = inlined_call_operand.vmem [shape: f32[1,32], index: 6, kind: input, shape index: {}]
  %s7 = inlined_call_operand.vmem [shape: bf16[32,128], index: 7, kind: input, shape index: {}]
  %s8 = inlined_call_operand.vmem [shape: f32[1,128], index: 8, kind: input, shape index: {}]
  %s9 = inlined_call_operand.vmem [shape: bf16[128,32], index: 9, kind: input, shape index: {}]
  %s10 = inlined_call_operand.vmem [shape: f32[1,32], index: 10, kind: input, shape index: {}]
  %s11 = inlined_call_operand.vmem [shape: f32[1,32], index: 11, kind: input, shape index: {}]
  %s12 = inlined_call_operand.vmem [shape: f32[1,32], index: 12, kind: input, shape index: {}]
  %s13 = inlined_call_operand.hbm [shape: f32[2,8,32], index: 13, kind: output, shape index: {}]
  %s14 = sld [smem:[#allocation0]]
  $region85: #{tpu_custom_call.1} parent=0
    _
  %s16 = ssub.s32 1, %s14
  %s17 = scalar_select 0, %s16, %s14
  $region1: #{tpu_custom_call.1} parent=0
    #allocation2 [shape = 'u8[8192]{0}', space=vmem, size = 0x2000, scoped, tag = 'output window, operand 0']
    #allocation3 [shape = 's32[2]{0}', space=sflag, size = 0x8, scoped, tag = 'scoped memory for tpu_custom_call.1']
    %18 = vsyncpa [#allocation3], 0
    %s19 = scalar_lea.sflag [#allocation3], 1
    %20 = vsyncpa %s19, 0
    loop: start=0, step=1, limit=4
    $region2: #{tpu_custom_call.1} parent=1 // loop_pre_header
      _
    $region3: #{tpu_custom_call.1} parent=1 // loop_header
      %s22 = sphi 0, %s26
      %p23 = scmp.ge.s32.totalorder %s22, 4
      %s32 = sphi 0, %s34
      %s35 = sphi 0, %s32
      %s36 = sphi 0, %s35
      %s52 = sphi 0, %s36
      %s56 = sphi 0, %s56
      %s58 = sphi 0, %s56
      %s59 = sphi 0, %s58
      %s73 = sphi 0, %s59
      %s77 = sphi 0, %s77
      %s79 = sphi 0, %s77
      %s80 = sphi 0, %s79
      %s94 = sphi 0, %s80
      %s98 = sphi 0, %s98
      %s100 = sphi 0, %s98
      %s101 = sphi 0, %s100
      %s115 = sphi 0, %s101
      %s119 = sphi 0, %s119
      %s121 = sphi 0, %s119
      %s122 = sphi 0, %s121
      %s136 = sphi 0, %s122
      %s140 = sphi 0, %s140
      %s142 = sphi 0, %s140
      %s143 = sphi 0, %s142
      %s157 = sphi 0, %s143
      %s161 = sphi 0, %s161
      %s163 = sphi 0, %s161
      %s164 = sphi 0, %s163
      %s178 = sphi 0, %s164
      %s182 = sphi 0, %s182
      %s184 = sphi 0, %s182
      %s185 = sphi 0, %s184
      %s199 = sphi 0, %s185
      %s203 = sphi 0, %s203
      %s205 = sphi 0, %s203
      %s206 = sphi 0, %s205
      %s220 = sphi 0, %s206
      %s224 = sphi 0, %s224
      %s226 = sphi 0, %s224
      %s227 = sphi 0, %s226
      %s241 = sphi 0, %s227
      %s245 = sphi 0, %s245
      %s247 = sphi 0, %s245
      %s248 = sphi 0, %s247
      %s262 = sphi 0, %s248
      %s266 = sphi 0, %s266
      %s268 = sphi 0, %s266
      %s269 = sphi 0, %s268
      %s283 = sphi 0, %s269
      %s287 = sphi 0, %s287
      %s289 = sphi 0, %s287
      %s290 = sphi 0, %s289
      %s304 = sphi 0, %s290
      %s310 = sphi 0, %s312
      %s313 = sphi 0, %s310
      %s314 = sphi 0, %s313
      %s330 = sphi 0, %s314
    $region4: #{tpu_custom_call.1} parent=1 // loop_header_branch
      %25 = sbr.rel (%p23) target = $region8
    $region5: #{tpu_custom_call.1} parent=1 // loop_body
      %s27 = ssub.s32 %s22, 1
      %s28 = ssub.s32 %s22, 2
      %s29 = sadd.s32 %s22, 1
      %s30 = ssub.s32 %s22, %s29
      %p31 = scmp.eq.s32.totalorder %s30, 0
      %s33 = sadd.s32 %s32, 1
      %s34 = scalar_select %p31, %s32, %s33
      %p37 = pneg %p31
      %p38 = scmp.eq.s32.totalorder %s22, 1
      %p39 = por %p37, %p38
      %p40 = scmp.ne.s32.totalorder %s32, %s35
      %p41 = scmp.eq.s32.totalorder %s22, 0
      %p42 = por %p40, %p41
      %p43 = scmp.ne.s32.totalorder %s32, %s35
      %p44 = scmp.eq.s32.totalorder %s27, 1
      %p45 = por %p43, %p44
      %p46 = scmp.ne.s32.totalorder %s35, %s36
      %p47 = scmp.eq.s32.totalorder %s27, 0
      %p48 = por %p46, %p47
      %p49 = scmp.ne.s32.totalorder %s35, %s36
      %p50 = scmp.eq.s32.totalorder %s28, 1
      %p51 = por %p49, %p50
      %p53 = scmp.ne.s32.totalorder %s36, %s52
      %p54 = scmp.eq.s32.totalorder %s28, 0
      %p55 = por %p53, %p54
      %s57 = sadd.s32 %s56, 1
      %p60 = scmp.eq.s32.totalorder %s22, 1
      %p61 = scmp.ne.s32.totalorder %s56, %s58
      %p62 = scmp.eq.s32.totalorder %s22, 0
      %p63 = por %p61, %p62
      %p64 = scmp.ne.s32.totalorder %s56, %s58
      %p65 = scmp.eq.s32.totalorder %s27, 1
      %p66 = por %p64, %p65
      %p67 = scmp.ne.s32.totalorder %s58, %s59
      %p68 = scmp.eq.s32.totalorder %s27, 0
      %p69 = por %p67, %p68
      %p70 = scmp.ne.s32.totalorder %s58, %s59
      %p71 = scmp.eq.s32.totalorder %s28, 1
      %p72 = por %p70, %p71
      %p74 = scmp.ne.s32.totalorder %s59, %s73
      %p75 = scmp.eq.s32.totalorder %s28, 0
      %p76 = por %p74, %p75
      %s78 = sadd.s32 %s77, 1
      %p81 = scmp.eq.s32.totalorder %s22, 1
      %p82 = scmp.ne.s32.totalorder %s77, %s79
      %p83 = scmp.eq.s32.totalorder %s22, 0
      %p84 = por %p82, %p83
      %p85 = scmp.ne.s32.totalorder %s77, %s79
      %p86 = scmp.eq.s32.totalorder %s27, 1
      %p87 = por %p85, %p86
      %p88 = scmp.ne.s32.totalorder %s79, %s80
      %p89 = scmp.eq.s32.totalorder %s27, 0
      %p90 = por %p88, %p89
      %p91 = scmp.ne.s32.totalorder %s79, %s80
      %p92 = scmp.eq.s32.totalorder %s28, 1
      %p93 = por %p91, %p92
      %p95 = scmp.ne.s32.totalorder %s80, %s94
      %p96 = scmp.eq.s32.totalorder %s28, 0
      %p97 = por %p95, %p96
      %s99 = sadd.s32 %s98, 1
      %p102 = scmp.eq.s32.totalorder %s22, 1
      %p103 = scmp.ne.s32.totalorder %s98, %s100
      %p104 = scmp.eq.s32.totalorder %s22, 0
      %p105 = por %p103, %p104
      %p106 = scmp.ne.s32.totalorder %s98, %s100
      %p107 = scmp.eq.s32.totalorder %s27, 1
      %p108 = por %p106, %p107
      %p109 = scmp.ne.s32.totalorder %s100, %s101
      %p110 = scmp.eq.s32.totalorder %s27, 0
      %p111 = por %p109, %p110
      %p112 = scmp.ne.s32.totalorder %s100, %s101
      %p113 = scmp.eq.s32.totalorder %s28, 1
      %p114 = por %p112, %p113
      %p116 = scmp.ne.s32.totalorder %s101, %s115
      %p117 = scmp.eq.s32.totalorder %s28, 0
      %p118 = por %p116, %p117
      %s120 = sadd.s32 %s119, 1
      %p123 = scmp.eq.s32.totalorder %s22, 1
      %p124 = scmp.ne.s32.totalorder %s119, %s121
      %p125 = scmp.eq.s32.totalorder %s22, 0
      %p126 = por %p124, %p125
      %p127 = scmp.ne.s32.totalorder %s119, %s121
      %p128 = scmp.eq.s32.totalorder %s27, 1
      %p129 = por %p127, %p128
      %p130 = scmp.ne.s32.totalorder %s121, %s122
      %p131 = scmp.eq.s32.totalorder %s27, 0
      %p132 = por %p130, %p131
      %p133 = scmp.ne.s32.totalorder %s121, %s122
      %p134 = scmp.eq.s32.totalorder %s28, 1
      %p135 = por %p133, %p134
      %p137 = scmp.ne.s32.totalorder %s122, %s136
      %p138 = scmp.eq.s32.totalorder %s28, 0
      %p139 = por %p137, %p138
      %s141 = sadd.s32 %s140, 1
      %p144 = scmp.eq.s32.totalorder %s22, 1
      %p145 = scmp.ne.s32.totalorder %s140, %s142
      %p146 = scmp.eq.s32.totalorder %s22, 0
      %p147 = por %p145, %p146
      %p148 = scmp.ne.s32.totalorder %s140, %s142
      %p149 = scmp.eq.s32.totalorder %s27, 1
      %p150 = por %p148, %p149
      %p151 = scmp.ne.s32.totalorder %s142, %s143
      %p152 = scmp.eq.s32.totalorder %s27, 0
      %p153 = por %p151, %p152
      %p154 = scmp.ne.s32.totalorder %s142, %s143
      %p155 = scmp.eq.s32.totalorder %s28, 1
      %p156 = por %p154, %p155
      %p158 = scmp.ne.s32.totalorder %s143, %s157
      %p159 = scmp.eq.s32.totalorder %s28, 0
      %p160 = por %p158, %p159
      %s162 = sadd.s32 %s161, 1
      %p165 = scmp.eq.s32.totalorder %s22, 1
      %p166 = scmp.ne.s32.totalorder %s161, %s163
      %p167 = scmp.eq.s32.totalorder %s22, 0
      %p168 = por %p166, %p167
      %p169 = scmp.ne.s32.totalorder %s161, %s163
      %p170 = scmp.eq.s32.totalorder %s27, 1
      %p171 = por %p169, %p170
      %p172 = scmp.ne.s32.totalorder %s163, %s164
      %p173 = scmp.eq.s32.totalorder %s27, 0
      %p174 = por %p172, %p173
      %p175 = scmp.ne.s32.totalorder %s163, %s164
      %p176 = scmp.eq.s32.totalorder %s28, 1
      %p177 = por %p175, %p176
      %p179 = scmp.ne.s32.totalorder %s164, %s178
      %p180 = scmp.eq.s32.totalorder %s28, 0
      %p181 = por %p179, %p180
      %s183 = sadd.s32 %s182, 1
      %p186 = scmp.eq.s32.totalorder %s22, 1
      %p187 = scmp.ne.s32.totalorder %s182, %s184
      %p188 = scmp.eq.s32.totalorder %s22, 0
      %p189 = por %p187, %p188
      %p190 = scmp.ne.s32.totalorder %s182, %s184
      %p191 = scmp.eq.s32.totalorder %s27, 1
      %p192 = por %p190, %p191
      %p193 = scmp.ne.s32.totalorder %s184, %s185
      %p194 = scmp.eq.s32.totalorder %s27, 0
      %p195 = por %p193, %p194
      %p196 = scmp.ne.s32.totalorder %s184, %s185
      %p197 = scmp.eq.s32.totalorder %s28, 1
      %p198 = por %p196, %p197
      %p200 = scmp.ne.s32.totalorder %s185, %s199
      %p201 = scmp.eq.s32.totalorder %s28, 0
      %p202 = por %p200, %p201
      %s204 = sadd.s32 %s203, 1
      %p207 = scmp.eq.s32.totalorder %s22, 1
      %p208 = scmp.ne.s32.totalorder %s203, %s205
      %p209 = scmp.eq.s32.totalorder %s22, 0
      %p210 = por %p208, %p209
      %p211 = scmp.ne.s32.totalorder %s203, %s205
      %p212 = scmp.eq.s32.totalorder %s27, 1
      %p213 = por %p211, %p212
      %p214 = scmp.ne.s32.totalorder %s205, %s206
      %p215 = scmp.eq.s32.totalorder %s27, 0
      %p216 = por %p214, %p215
      %p217 = scmp.ne.s32.totalorder %s205, %s206
      %p218 = scmp.eq.s32.totalorder %s28, 1
      %p219 = por %p217, %p218
      %p221 = scmp.ne.s32.totalorder %s206, %s220
      %p222 = scmp.eq.s32.totalorder %s28, 0
      %p223 = por %p221, %p222
      %s225 = sadd.s32 %s224, 1
      %p228 = scmp.eq.s32.totalorder %s22, 1
      %p229 = scmp.ne.s32.totalorder %s224, %s226
      %p230 = scmp.eq.s32.totalorder %s22, 0
      %p231 = por %p229, %p230
      %p232 = scmp.ne.s32.totalorder %s224, %s226
      %p233 = scmp.eq.s32.totalorder %s27, 1
      %p234 = por %p232, %p233
      %p235 = scmp.ne.s32.totalorder %s226, %s227
      %p236 = scmp.eq.s32.totalorder %s27, 0
      %p237 = por %p235, %p236
      %p238 = scmp.ne.s32.totalorder %s226, %s227
      %p239 = scmp.eq.s32.totalorder %s28, 1
      %p240 = por %p238, %p239
      %p242 = scmp.ne.s32.totalorder %s227, %s241
      %p243 = scmp.eq.s32.totalorder %s28, 0
      %p244 = por %p242, %p243
      %s246 = sadd.s32 %s245, 1
      %p249 = scmp.eq.s32.totalorder %s22, 1
      %p250 = scmp.ne.s32.totalorder %s245, %s247
      %p251 = scmp.eq.s32.totalorder %s22, 0
      %p252 = por %p250, %p251
      %p253 = scmp.ne.s32.totalorder %s245, %s247
      %p254 = scmp.eq.s32.totalorder %s27, 1
      %p255 = por %p253, %p254
      %p256 = scmp.ne.s32.totalorder %s247, %s248
      %p257 = scmp.eq.s32.totalorder %s27, 0
      %p258 = por %p256, %p257
      %p259 = scmp.ne.s32.totalorder %s247, %s248
      %p260 = scmp.eq.s32.totalorder %s28, 1
      %p261 = por %p259, %p260
      %p263 = scmp.ne.s32.totalorder %s248, %s262
      %p264 = scmp.eq.s32.totalorder %s28, 0
      %p265 = por %p263, %p264
      %s267 = sadd.s32 %s266, 1
      %p270 = scmp.eq.s32.totalorder %s22, 1
      %p271 = scmp.ne.s32.totalorder %s266, %s268
      %p272 = scmp.eq.s32.totalorder %s22, 0
      %p273 = por %p271, %p272
      %p274 = scmp.ne.s32.totalorder %s266, %s268
      %p275 = scmp.eq.s32.totalorder %s27, 1
      %p276 = por %p274, %p275
      %p277 = scmp.ne.s32.totalorder %s268, %s269
      %p278 = scmp.eq.s32.totalorder %s27, 0
      %p279 = por %p277, %p278
      %p280 = scmp.ne.s32.totalorder %s268, %s269
      %p281 = scmp.eq.s32.totalorder %s28, 1
      %p282 = por %p280, %p281
      %p284 = scmp.ne.s32.totalorder %s269, %s283
      %p285 = scmp.eq.s32.totalorder %s28, 0
      %p286 = por %p284, %p285
      %s288 = sadd.s32 %s287, 1
      %p291 = scmp.eq.s32.totalorder %s22, 1
      %p292 = scmp.ne.s32.totalorder %s287, %s289
      %p293 = scmp.eq.s32.totalorder %s22, 0
      %p294 = por %p292, %p293
      %p295 = scmp.ne.s32.totalorder %s287, %s289
      %p296 = scmp.eq.s32.totalorder %s27, 1
      %p297 = por %p295, %p296
      %p298 = scmp.ne.s32.totalorder %s289, %s290
      %p299 = scmp.eq.s32.totalorder %s27, 0
      %p300 = por %p298, %p299
      %p301 = scmp.ne.s32.totalorder %s289, %s290
      %p302 = scmp.eq.s32.totalorder %s28, 1
      %p303 = por %p301, %p302
      %p305 = scmp.ne.s32.totalorder %s290, %s304
      %p306 = scmp.eq.s32.totalorder %s28, 0
      %p307 = por %p305, %p306
      %s308 = ssub.s32 %s22, %s29
      %p309 = scmp.eq.s32.totalorder %s308, 0
      %s311 = sadd.s32 %s310, 1
      %s312 = scalar_select %p309, %s310, %s311
      %p315 = pneg %p309
      %p316 = scmp.eq.s32.totalorder %s22, 1
      %p317 = por %p315, %p316
      %p318 = scmp.ne.s32.totalorder %s310, %s313
      %p319 = scmp.eq.s32.totalorder %s22, 0
      %p320 = por %p318, %p319
      %p321 = scmp.ne.s32.totalorder %s310, %s313
      %p322 = scmp.eq.s32.totalorder %s27, 1
      %p323 = por %p321, %p322
      %p324 = scmp.ne.s32.totalorder %s313, %s314
      %p325 = scmp.eq.s32.totalorder %s27, 0
      %p326 = por %p324, %p325
      %p327 = scmp.ne.s32.totalorder %s313, %s314
      %p328 = scmp.eq.s32.totalorder %s28, 1
      %p329 = por %p327, %p328
      %p331 = scmp.ne.s32.totalorder %s314, %s330
      %p332 = scmp.eq.s32.totalorder %s28, 0
      %p333 = por %p331, %p332
      %p334 = scmp.le.s32.totalorder 1, %s22
      %p335 = scmp.lt.s32.totalorder %s22, 3
      %p336 = pnand %p334, %p335
      %p337 = pneg %p336
      // Predicated region
      $region9: #{tpu_custom_call.1} parent=5 // pred_check
        _
      $region10: #{tpu_custom_call.1} parent=5 // pred_check_branch
        %339 = sbr.rel (%p336) target = $region12
      $region11: #{tpu_custom_call.1} parent=5 // pred_region
        %s340 = ssub.s32 %s22, 1
        // Predicated region
        $region13: #{tpu_custom_call.1} parent=11 // pred_check
          %p341 = pneg %p69
        $region14: #{tpu_custom_call.1} parent=11 // pred_check_branch
          %343 = sbr.rel (%p341) target = $region16
        $region15: #{tpu_custom_call.1} parent=11 // pred_region
          _
        $region16: #{tpu_custom_call.1} parent=11 // pred_fallthru
          _
        // Predicated region
        $region17: #{tpu_custom_call.1} parent=11 // pred_check
          %p344 = pneg %p90
        $region18: #{tpu_custom_call.1} parent=11 // pred_check_branch
          %346 = sbr.rel (%p344) target = $region20
        $region19: #{tpu_custom_call.1} parent=11 // pred_region
          _
        $region20: #{tpu_custom_call.1} parent=11 // pred_fallthru
          _
        // Predicated region
        $region21: #{tpu_custom_call.1} parent=11 // pred_check
          %p347 = pneg %p111
        $region22: #{tpu_custom_call.1} parent=11 // pred_check_branch
          %349 = sbr.rel (%p347) target = $region24
        $region23: #{tpu_custom_call.1} parent=11 // pred_region
          _
        $region24: #{tpu_custom_call.1} parent=11 // pred_fallthru
          _
        // Predicated region
        $region25: #{tpu_custom_call.1} parent=11 // pred_check
          %p350 = pneg %p132
        $region26: #{tpu_custom_call.1} parent=11 // pred_check_branch
          %352 = sbr.rel (%p350) target = $region28
        $region27: #{tpu_custom_call.1} parent=11 // pred_region
          _
        $region28: #{tpu_custom_call.1} parent=11 // pred_fallthru
          _
        // Predicated region
        $region29: #{tpu_custom_call.1} parent=11 // pred_check
          %p353 = pneg %p153
        $region30: #{tpu_custom_call.1} parent=11 // pred_check_branch
          %355 = sbr.rel (%p353) target = $region32
        $region31: #{tpu_custom_call.1} parent=11 // pred_region
          _
        $region32: #{tpu_custom_call.1} parent=11 // pred_fallthru
          _
        // Predicated region
        $region33: #{tpu_custom_call.1} parent=11 // pred_check
          %p356 = pneg %p174
        $region34: #{tpu_custom_call.1} parent=11 // pred_check_branch
          %358 = sbr.rel (%p356) target = $region36
        $region35: #{tpu_custom_call.1} parent=11 // pred_region
          _
        $region36: #{tpu_custom_call.1} parent=11 // pred_fallthru
          _
        // Predicated region
        $region37: #{tpu_custom_call.1} parent=11 // pred_check
          %p359 = pneg %p195
        $region38: #{tpu_custom_call.1} parent=11 // pred_check_branch
          %361 = sbr.rel (%p359) target = $region40
        $region39: #{tpu_custom_call.1} parent=11 // pred_region
          _
        $region40: #{tpu_custom_call.1} parent=11 // pred_fallthru
          _
        // Predicated region
        $region41: #{tpu_custom_call.1} parent=11 // pred_check
          %p362 = pneg %p216
        $region42: #{tpu_custom_call.1} parent=11 // pred_check_branch
          %364 = sbr.rel (%p362) target = $region44
        $region43: #{tpu_custom_call.1} parent=11 // pred_region
          _
        $region44: #{tpu_custom_call.1} parent=11 // pred_fallthru
          _
        // Predicated region
        $region45: #{tpu_custom_call.1} parent=11 // pred_check
          %p365 = pneg %p237
        $region46: #{tpu_custom_call.1} parent=11 // pred_check_branch
          %367 = sbr.rel (%p365) target = $region48
        $region47: #{tpu_custom_call.1} parent=11 // pred_region
          _
        $region48: #{tpu_custom_call.1} parent=11 // pred_fallthru
          _
        // Predicated region
        $region49: #{tpu_custom_call.1} parent=11 // pred_check
          %p368 = pneg %p258
        $region50: #{tpu_custom_call.1} parent=11 // pred_check_branch
          %370 = sbr.rel (%p368) target = $region52
        $region51: #{tpu_custom_call.1} parent=11 // pred_region
          _
        $region52: #{tpu_custom_call.1} parent=11 // pred_fallthru
          _
        // Predicated region
        $region53: #{tpu_custom_call.1} parent=11 // pred_check
          %p371 = pneg %p279
        $region54: #{tpu_custom_call.1} parent=11 // pred_check_branch
          %373 = sbr.rel (%p371) target = $region56
        $region55: #{tpu_custom_call.1} parent=11 // pred_region
          _
        $region56: #{tpu_custom_call.1} parent=11 // pred_fallthru
          _
        // Predicated region
        $region57: #{tpu_custom_call.1} parent=11 // pred_check
          %p374 = pneg %p300
        $region58: #{tpu_custom_call.1} parent=11 // pred_check_branch
          %376 = sbr.rel (%p374) target = $region60
        $region59: #{tpu_custom_call.1} parent=11 // pred_region
          _
        $region60: #{tpu_custom_call.1} parent=11 // pred_fallthru
          _
      $region12: #{tpu_custom_call.1} parent=5 // pred_fallthru
        _
      %p377 = scmp.lt.s32.totalorder %s22, 2
      // Predicated region
      $region61: #{tpu_custom_call.1} parent=5 // pred_check
        %p378 = pneg %p377
      $region62: #{tpu_custom_call.1} parent=5 // pred_check_branch
        %380 = sbr.rel (%p378) target = $region64
      $region63: #{tpu_custom_call.1} parent=5 // pred_region
        // Predicated region
        $region65: #{tpu_custom_call.1} parent=63 // pred_check
          %p381 = pneg %p42
        $region66: #{tpu_custom_call.1} parent=63 // pred_check_branch
          %383 = sbr.rel (%p381) target = $region68
        $region67: #{tpu_custom_call.1} parent=63 // pred_region
          %p384 = scmp.lt.s32.totalorder %s22, 1
          %s385 = scalar_select %p384, %s22, 1
          %s386 = smul.addr %s385, 8
          %s387 = scalar_lea.vmem %s0, %s386
        $region68: #{tpu_custom_call.1} parent=63 // pred_fallthru
          _
      $region64: #{tpu_custom_call.1} parent=5 // pred_fallthru
        _
      %p388 = scmp.le.s32.totalorder 1, %s22
      %p389 = scmp.lt.s32.totalorder %s22, 3
      %p390 = pnand %p388, %p389
      %p391 = pneg %p390
      // Predicated region
      $region69: #{tpu_custom_call.1} parent=5 // pred_check
        _
      $region70: #{tpu_custom_call.1} parent=5 // pred_check_branch
        %393 = sbr.rel (%p390) target = $region72
      $region71: #{tpu_custom_call.1} parent=5 // pred_region
        %s394 = ssub.s32 %s22, 1
        %p395 = scmp.lt.s32.totalorder %s27, 1
        %s396 = scalar_select %p395, %s27, 1
        %s397 = smul.addr %s396, 8
        %s398 = scalar_lea.vmem %s0, %s397
        %p399 = pneg %p48
        %p400 = pneg %p45
        %p401 = pneg %p69
        %p402 = pneg %p66
        %p403 = pneg %p90
        %p404 = pneg %p87
        %p405 = pneg %p111
        %p406 = pneg %p108
        %p407 = pneg %p132
        %p408 = pneg %p129
        %p409 = pneg %p153
        %p410 = pneg %p150
        %p411 = pneg %p174
        %p412 = pneg %p171
        %p413 = pneg %p195
        %p414 = pneg %p192
        %p415 = pneg %p216
        %p416 = pneg %p213
        %p417 = pneg %p237
        %p418 = pneg %p234
        %p419 = pneg %p258
        %p420 = pneg %p255
        %p421 = pneg %p279
        %p422 = pneg %p276
        %p423 = pneg %p300
        %p424 = pneg %p297
        %p425 = pneg %p326
        %p426 = pneg %p323
        %s427 = sand.u32 %s313, 1
        %s428 = scalar_lea.sflag [#allocation3], %s427
        %s429 = sand.u32 %s313, 1
        %s430 = smul.addr %s429, 8
        %s431 = scalar_lea.vmem [#allocation2], %s430
        %p432 = scmp.lt.s32.totalorder %s27, 1
        %s433 = scalar_select %p432, %s27, 1
        %s434 = smul.addr %s433, 8
        %s435 = scalar_lea.vmem %s0, %s434
        %v437 = vld [vmem:[%s435] sm:$0xff]
        %v438 = vld [vmem:[%s5] sm:$0x1]
        %v439 = vld [vmem:[%s6] sm:$0x1]
        %vm440 = vcmask 261120
        %v441 = vsel %vm440, %v437, 0.0
        %442 = vadd.xlane.f32.xlu0 %v441
        %v443 = vpop.xlane.xlu0 %442
        %v444 = vrcp.pop 32.0
        %v445 = vmul.f32 %v443, %v444
        %v446 = vsub.f32 %v437, %v445
        %v447 = vmul.f32 %v446, %v446
        %v448 = vsel %vm440, %v447, 0.0
        %449 = vadd.xlane.f32.xlu0 %v448
        %v450 = vpop.xlane.xlu0 %449
        %v451 = vmul.f32 %v450, %v444
        %v452 = vadd.f32 %v451, 1e-05
        %v453 = vrsqrt.pop %v452
        %v454 = vmul.f32 %v446, %v453
        %v456 = vlaneseq
        %v457 = vshrl.u32 %v456, 7
        %v458 = vsub.s32 0, %v457
        %v459 = vrot.slane %v438, %v458
        %v461 = vmul.f32 %v454, %v459
        %v463 = vlaneseq
        %v464 = vshrl.u32 %v463, 7
        %v465 = vsub.s32 0, %v464
        %v466 = vrot.slane %v439, %v465
        %v468 = vadd.f32 %v461, %v466
        %v469 = vpack.c.bf16 %v468, %v468
        %v470 = vld [vmem:[%s1] sm:$0xf]
        %v471 = vld [vmem:[%s1 + $0x4] sm:$0xf]
        %v472 = vld [vmem:[%s1 + $0x8] sm:$0xf]
        %v473 = vld [vmem:[%s1 + $0xc] sm:$0xf]
        %v474 = vld [vmem:[%s2] sm:$0x1]
        %v476 = vlaneseq
        %v477 = vshrl.u32 %v476, 7
        %v478 = vsub.s32 0, %v477
        %v479 = vrot.slane %v474, %v478
        %v485 = vunpack.c.l.b16 %v470
        %v486 = vunpack.c.l.b16 %v471
        %v487 = vunpack.c.l.b16 %v472
        %v488 = vunpack.c.l.b16 %v473
        %v489 = vpack.c.b16 %v486, %v485
        %v490 = vpack.c.b16 %v488, %v487
        %v494 = vsel %vm440, %v469, 0
        %496 = vmatprep.subr.bf16.mxu0 0
        %497 = vmatpush1.bf16.msra.mxu0 0
        %498 = vmatprep.subr.bf16.mxu0 0
        %499 = vmatpush1.bf16.msra.mxu0 0
        %500 = vmatprep.subr.bf16.mxu0 0
        %501 = vmatpush1.bf16.msra.mxu0 0
        %502 = vmatprep.subr.bf16.mxu0 0
        %503 = vmatpush1.bf16.msra.mxu0 0
        %504 = vmatprep.subr.bf16.mxu0 0
        %505 = vmatpush1.bf16.msra.mxu0 0
        %506 = vmatprep.subr.bf16.mxu0 0
        %507 = vmatpush1.bf16.msra.mxu0 0
        %508 = vmatprep.subr.bf16.mxu0 0
        %509 = vmatpush1.bf16.msra.mxu0 %v490
        %510 = vmatprep.subr.bf16.mxu0 0
        %511 = vmatpush1.bf16.msra.mxu0 %v489
        %512 = vmatprep.subr.bf16.mxu0 0
        %513 = vmatpush2.bf16.msra.mxu0 0
        %514 = vmatprep.subr.bf16.mxu0 0
        %515 = vmatpush2.bf16.msra.mxu0 0
        %516 = vmatprep.subr.bf16.mxu0 0
        %517 = vmatpush2.bf16.msra.mxu0 0
        %518 = vmatprep.subr.bf16.mxu0 0
        %519 = vmatpush2.bf16.msra.mxu0 0
        %520 = vmatprep.subr.bf16.mxu0 0
        %521 = vmatpush2.bf16.msra.mxu0 0
        %522 = vmatprep.subr.bf16.mxu0 0
        %523 = vmatpush2.bf16.msra.mxu0 0
        %524 = vmatprep.subr.bf16.mxu0 0
        %525 = vmatpush2.bf16.msra.mxu0 0
        %526 = vmatprep.subr.bf16.mxu0 0
        %527 = vmatpush2.bf16.msra.mxu0 0
        %528 = vmatprep.mubr.bf16.mxu0 0
        %529 = vmatmul.mubr.bf16.gmra.mxu0 %v494
        %v530 = vpop.f32.mrf.mxu0
        %v531 = vadd.f32 %v479, %v530
        %v532 = vpop.f32.mrf.mxu0
        %v533 = vpop.f32.mrf.mxu0
        %v534 = vpop.f32.mrf.mxu0
        %535 = vdwg.mxu0
        %v536 = vpack.c.bf16 %v531, %v531
        %538 = vrot.lane.b32.xlu0 %v536, 96
        %v539 = vpop.permute.xlu0 %538
        %vm540 = vcmask 64512
        %v542 = vsel %vm540, %v536, 0
        %v545 = vsel %vm540, %v539, 0
        %547 = vmatprep.subr.bf16.mxu0 0
        %548 = vmatpush1.bf16.xpose.msra.mxu0 0
        %549 = vmatprep.subr.bf16.mxu0 0
        %550 = vmatpush1.bf16.xpose.msra.mxu0 0
        %551 = vmatprep.subr.bf16.mxu0 0
        %552 = vmatpush1.bf16.xpose.msra.mxu0 0
        %553 = vmatprep.subr.bf16.mxu0 0
        %554 = vmatpush1.bf16.xpose.msra.mxu0 0
        %555 = vmatprep.subr.bf16.mxu0 0
        %556 = vmatpush1.bf16.xpose.msra.mxu0 0
        %557 = vmatprep.subr.bf16.mxu0 0
        %558 = vmatpush1.bf16.xpose.msra.mxu0 0
        %559 = vmatprep.subr.bf16.mxu0 0
        %560 = vmatpush1.bf16.xpose.msra.mxu0 0
        %561 = vmatprep.subr.bf16.mxu0 0
        %562 = vmatpush1.bf16.xpose.msra.mxu0 %v545
        %563 = vmatprep.subr.bf16.mxu0 0
        %564 = vmatpush2.bf16.xpose.msra.mxu0 0
        %565 = vmatprep.subr.bf16.mxu0 0
        %566 = vmatpush2.bf16.xpose.msra.mxu0 0
        %567 = vmatprep.subr.bf16.mxu0 0
        %568 = vmatpush2.bf16.xpose.msra.mxu0 0
        %569 = vmatprep.subr.bf16.mxu0 0
        %570 = vmatpush2.bf16.xpose.msra.mxu0 0
        %571 = vmatprep.subr.bf16.mxu0 0
        %572 = vmatpush2.bf16.xpose.msra.mxu0 0
        %573 = vmatprep.subr.bf16.mxu0 0
        %574 = vmatpush2.bf16.xpose.msra.mxu0 0
        %575 = vmatprep.subr.bf16.mxu0 0
        %576 = vmatpush2.bf16.xpose.msra.mxu0 0
        %577 = vmatprep.subr.bf16.mxu0 0
        %578 = vmatpush2.bf16.xpose.msra.mxu0 0
        %579 = vmatprep.mubr.bf16.mxu0 0
        %580 = vmatmul.mubr.bf16.gmra.mxu0 %v542
        %v581 = vpop.f32.mrf.mxu0
        %v582 = vadd.f32 0.0, %v581
        %v583 = vpop.f32.mrf.mxu0
        %v584 = vpop.f32.mrf.mxu0
        %v585 = vpop.f32.mrf.mxu0
        %586 = vdwg.mxu0
        %v587 = vsel %vm540, %v582, -inf
        %588 = vmax.xlane.f32.xlu0 %v587
        %v589 = vpop.xlane.xlu0 %588
        %v590 = vsub.f32 %v582, %v589
        %v591 = vmul.f32 %v590, 1.442695
        %v592 = vpow.pop %v591
        %v593 = vsel %vm540, %v592, 0.0
        %594 = vadd.xlane.f32.xlu0 %v593
        %v595 = vpop.xlane.xlu0 %594
        %v596 = vrcp.pop %v595
        %v597 = vmul.f32 %v592, %v596
        %v598 = vpack.c.bf16 %v597, %v597
        %599 = vrot.lane.b32.xlu0 %v536, 64
        %v600 = vpop.permute.xlu0 %599
        %v602 = vsel %vm540, %v598, 0
        %vm604 = vcmask 1043456
        %v606 = vsel %vm604, %v600, 0
        %608 = vmatprep.subr.bf16.mxu0 0
        %609 = vmatpush1.bf16.msra.mxu0 0
        %610 = vmatprep.subr.bf16.mxu0 0
        %611 = vmatpush1.bf16.msra.mxu0 0
        %612 = vmatprep.subr.bf16.mxu0 0
        %613 = vmatpush1.bf16.msra.mxu0 0
        %614 = vmatprep.subr.bf16.mxu0 0
        %615 = vmatpush1.bf16.msra.mxu0 0
        %616 = vmatprep.subr.bf16.mxu0 0
        %617 = vmatpush1.bf16.msra.mxu0 0
        %618 = vmatprep.subr.bf16.mxu0 0
        %619 = vmatpush1.bf16.msra.mxu0 0
        %620 = vmatprep.subr.bf16.mxu0 0
        %621 = vmatpush1.bf16.msra.mxu0 0
        %622 = vmatprep.subr.bf16.mxu0 0
        %623 = vmatpush1.bf16.msra.mxu0 %v606
        %624 = vmatprep.subr.bf16.mxu0 0
        %625 = vmatpush2.bf16.msra.mxu0 0
        %626 = vmatprep.subr.bf16.mxu0 0
        %627 = vmatpush2.bf16.msra.mxu0 0
        %628 = vmatprep.subr.bf16.mxu0 0
        %629 = vmatpush2.bf16.msra.mxu0 0
        %630 = vmatprep.subr.bf16.mxu0 0
        %631 = vmatpush2.bf16.msra.mxu0 0
        %632 = vmatprep.subr.bf16.mxu0 0
        %633 = vmatpush2.bf16.msra.mxu0 0
        %634 = vmatprep.subr.bf16.mxu0 0
        %635 = vmatpush2.bf16.msra.mxu0 0
        %636 = vmatprep.subr.bf16.mxu0 0
        %637 = vmatpush2.bf16.msra.mxu0 0
        %638 = vmatprep.subr.bf16.mxu0 0
        %639 = vmatpush2.bf16.msra.mxu0 0
        %640 = vmatprep.mubr.bf16.mxu0 0
        %641 = vmatmul.mubr.bf16.gmra.mxu0 %v602
        %v642 = vpop.f32.mrf.mxu0
        %v643 = vadd.f32 0.0, %v642
        %v644 = vpop.f32.mrf.mxu0
        %v645 = vpop.f32.mrf.mxu0
        %v646 = vpop.f32.mrf.mxu0
        %647 = vdwg.mxu0
        %v648 = vpack.c.bf16 %v643, %v643
        %649 = vrot.lane.b32.xlu0 %v536, 120
        %v650 = vpop.permute.xlu0 %649
        %651 = vrot.lane.b32.xlu0 %v536, 88
        %v652 = vpop.permute.xlu0 %651
        %v654 = vsel %vm540, %v650, 0
        %v657 = vsel %vm540, %v652, 0
        %659 = vmatprep.subr.bf16.mxu0 0
        %660 = vmatpush1.bf16.xpose.msra.mxu0 0
        %661 = vmatprep.subr.bf16.mxu0 0
        %662 = vmatpush1.bf16.xpose.msra.mxu0 0
        %663 = vmatprep.subr.bf16.mxu0 0
        %664 = vmatpush1.bf16.xpose.msra.mxu0 0
        %665 = vmatprep.subr.bf16.mxu0 0
        %666 = vmatpush1.bf16.xpose.msra.mxu0 0
        %667 = vmatprep.subr.bf16.mxu0 0
        %668 = vmatpush1.bf16.xpose.msra.mxu0 0
        %669 = vmatprep.subr.bf16.mxu0 0
        %670 = vmatpush1.bf16.xpose.msra.mxu0 0
        %671 = vmatprep.subr.bf16.mxu0 0
        %672 = vmatpush1.bf16.xpose.msra.mxu0 0
        %673 = vmatprep.subr.bf16.mxu0 0
        %674 = vmatpush1.bf16.xpose.msra.mxu0 %v657
        %675 = vmatprep.subr.bf16.mxu0 0
        %676 = vmatpush2.bf16.xpose.msra.mxu0 0
        %677 = vmatprep.subr.bf16.mxu0 0
        %678 = vmatpush2.bf16.xpose.msra.mxu0 0
        %679 = vmatprep.subr.bf16.mxu0 0
        %680 = vmatpush2.bf16.xpose.msra.mxu0 0
        %681 = vmatprep.subr.bf16.mxu0 0
        %682 = vmatpush2.bf16.xpose.msra.mxu0 0
        %683 = vmatprep.subr.bf16.mxu0 0
        %684 = vmatpush2.bf16.xpose.msra.mxu0 0
        %685 = vmatprep.subr.bf16.mxu0 0
        %686 = vmatpush2.bf16.xpose.msra.mxu0 0
        %687 = vmatprep.subr.bf16.mxu0 0
        %688 = vmatpush2.bf16.xpose.msra.mxu0 0
        %689 = vmatprep.subr.bf16.mxu0 0
        %690 = vmatpush2.bf16.xpose.msra.mxu0 0
        %691 = vmatprep.mubr.bf16.mxu0 0
        %692 = vmatmul.mubr.bf16.gmra.mxu0 %v654
        %v693 = vpop.f32.mrf.mxu0
        %v694 = vadd.f32 0.0, %v693
        %v695 = vpop.f32.mrf.mxu0
        %v696 = vpop.f32.mrf.mxu0
        %v697 = vpop.f32.mrf.mxu0
        %698 = vdwg.mxu0
        %v699 = vsel %vm540, %v694, -inf
        %700 = vmax.xlane.f32.xlu0 %v699
        %v701 = vpop.xlane.xlu0 %700
        %v702 = vsub.f32 %v694, %v701
        %v703 = vmul.f32 %v702, 1.442695
        %v704 = vpow.pop %v703
        %v705 = vsel %vm540, %v704, 0.0
        %706 = vadd.xlane.f32.xlu0 %v705
        %v707 = vpop.xlane.xlu0 %706
        %v708 = vrcp.pop %v707
        %v709 = vmul.f32 %v704, %v708
        %v710 = vpack.c.bf16 %v709, %v709
        %711 = vrot.lane.b32.xlu0 %v536, 56
        %v712 = vpop.permute.xlu0 %711
        %v714 = vsel %vm540, %v710, 0
        %v717 = vsel %vm604, %v712, 0
        %719 = vmatprep.subr.bf16.mxu0 0
        %720 = vmatpush1.bf16.msra.mxu0 0
        %721 = vmatprep.subr.bf16.mxu0 0
        %722 = vmatpush1.bf16.msra.mxu0 0
        %723 = vmatprep.subr.bf16.mxu0 0
        %724 = vmatpush1.bf16.msra.mxu0 0
        %725 = vmatprep.subr.bf16.mxu0 0
        %726 = vmatpush1.bf16.msra.mxu0 0
        %727 = vmatprep.subr.bf16.mxu0 0
        %728 = vmatpush1.bf16.msra.mxu0 0
        %729 = vmatprep.subr.bf16.mxu0 0
        %730 = vmatpush1.bf16.msra.mxu0 0
        %731 = vmatprep.subr.bf16.mxu0 0
        %732 = vmatpush1.bf16.msra.mxu0 0
        %733 = vmatprep.subr.bf16.mxu0 0
        %734 = vmatpush1.bf16.msra.mxu0 %v717
        %735 = vmatprep.subr.bf16.mxu0 0
        %736 = vmatpush2.bf16.msra.mxu0 0
        %737 = vmatprep.subr.bf16.mxu0 0
        %738 = vmatpush2.bf16.msra.mxu0 0
        %739 = vmatprep.subr.bf16.mxu0 0
        %740 = vmatpush2.bf16.msra.mxu0 0
        %741 = vmatprep.subr.bf16.mxu0 0
        %742 = vmatpush2.bf16.msra.mxu0 0
        %743 = vmatprep.subr.bf16.mxu0 0
        %744 = vmatpush2.bf16.msra.mxu0 0
        %745 = vmatprep.subr.bf16.mxu0 0
        %746 = vmatpush2.bf16.msra.mxu0 0
        %747 = vmatprep.subr.bf16.mxu0 0
        %748 = vmatpush2.bf16.msra.mxu0 0
        %749 = vmatprep.subr.bf16.mxu0 0
        %750 = vmatpush2.bf16.msra.mxu0 0
        %751 = vmatprep.mubr.bf16.mxu0 0
        %752 = vmatmul.mubr.bf16.gmra.mxu0 %v714
        %v753 = vpop.f32.mrf.mxu0
        %v754 = vadd.f32 0.0, %v753
        %v755 = vpop.f32.mrf.mxu0
        %v756 = vpop.f32.mrf.mxu0
        %v757 = vpop.f32.mrf.mxu0
        %758 = vdwg.mxu0
        %v759 = vpack.c.bf16 %v754, %v754
        %760 = vrot.lane.b32.xlu0 %v536, 112
        %v761 = vpop.permute.xlu0 %760
        %762 = vrot.lane.b32.xlu0 %v536, 80
        %v763 = vpop.permute.xlu0 %762
        %v765 = vsel %vm540, %v761, 0
        %v768 = vsel %vm540, %v763, 0
        %770 = vmatprep.subr.bf16.mxu0 0
        %771 = vmatpush1.bf16.xpose.msra.mxu0 0
        %772 = vmatprep.subr.bf16.mxu0 0
        %773 = vmatpush1.bf16.xpose.msra.mxu0 0
        %774 = vmatprep.subr.bf16.mxu0 0
        %775 = vmatpush1.bf16.xpose.msra.mxu0 0
        %776 = vmatprep.subr.bf16.mxu0 0
        %777 = vmatpush1.bf16.xpose.msra.mxu0 0
        %778 = vmatprep.subr.bf16.mxu0 0
        %779 = vmatpush1.bf16.xpose.msra.mxu0 0
        %780 = vmatprep.subr.bf16.mxu0 0
        %781 = vmatpush1.bf16.xpose.msra.mxu0 0
        %782 = vmatprep.subr.bf16.mxu0 0
        %783 = vmatpush1.bf16.xpose.msra.mxu0 0
        %784 = vmatprep.subr.bf16.mxu0 0
        %785 = vmatpush1.bf16.xpose.msra.mxu0 %v768
        %786 = vmatprep.subr.bf16.mxu0 0
        %787 = vmatpush2.bf16.xpose.msra.mxu0 0
        %788 = vmatprep.subr.bf16.mxu0 0
        %789 = vmatpush2.bf16.xpose.msra.mxu0 0
        %790 = vmatprep.subr.bf16.mxu0 0
        %791 = vmatpush2.bf16.xpose.msra.mxu0 0
        %792 = vmatprep.subr.bf16.mxu0 0
        %793 = vmatpush2.bf16.xpose.msra.mxu0 0
        %794 = vmatprep.subr.bf16.mxu0 0
        %795 = vmatpush2.bf16.xpose.msra.mxu0 0
        %796 = vmatprep.subr.bf16.mxu0 0
        %797 = vmatpush2.bf16.xpose.msra.mxu0 0
        %798 = vmatprep.subr.bf16.mxu0 0
        %799 = vmatpush2.bf16.xpose.msra.mxu0 0
        %800 = vmatprep.subr.bf16.mxu0 0
        %801 = vmatpush2.bf16.xpose.msra.mxu0 0
        %802 = vmatprep.mubr.bf16.mxu0 0
        %803 = vmatmul.mubr.bf16.gmra.mxu0 %v765
        %v804 = vpop.f32.mrf.mxu0
        %v805 = vadd.f32 0.0, %v804
        %v806 = vpop.f32.mrf.mxu0
        %v807 = vpop.f32.mrf.mxu0
        %v808 = vpop.f32.mrf.mxu0
        %809 = vdwg.mxu0
        %v810 = vsel %vm540, %v805, -inf
        %811 = vmax.xlane.f32.xlu0 %v810
        %v812 = vpop.xlane.xlu0 %811
        %v813 = vsub.f32 %v805, %v812
        %v814 = vmul.f32 %v813, 1.442695
        %v815 = vpow.pop %v814
        %v816 = vsel %vm540, %v815, 0.0
        %817 = vadd.xlane.f32.xlu0 %v816
        %v818 = vpop.xlane.xlu0 %817
        %v819 = vrcp.pop %v818
        %v820 = vmul.f32 %v815, %v819
        %v821 = vpack.c.bf16 %v820, %v820
        %822 = vrot.lane.b32.xlu0 %v536, 48
        %v823 = vpop.permute.xlu0 %822
        %v825 = vsel %vm540, %v821, 0
        %v828 = vsel %vm604, %v823, 0
        %830 = vmatprep.subr.bf16.mxu0 0
        %831 = vmatpush1.bf16.msra.mxu0 0
        %832 = vmatprep.subr.bf16.mxu0 0
        %833 = vmatpush1.bf16.msra.mxu0 0
        %834 = vmatprep.subr.bf16.mxu0 0
        %835 = vmatpush1.bf16.msra.mxu0 0
        %836 = vmatprep.subr.bf16.mxu0 0
        %837 = vmatpush1.bf16.msra.mxu0 0
        %838 = vmatprep.subr.bf16.mxu0 0
        %839 = vmatpush1.bf16.msra.mxu0 0
        %840 = vmatprep.subr.bf16.mxu0 0
        %841 = vmatpush1.bf16.msra.mxu0 0
        %842 = vmatprep.subr.bf16.mxu0 0
        %843 = vmatpush1.bf16.msra.mxu0 0
        %844 = vmatprep.subr.bf16.mxu0 0
        %845 = vmatpush1.bf16.msra.mxu0 %v828
        %846 = vmatprep.subr.bf16.mxu0 0
        %847 = vmatpush2.bf16.msra.mxu0 0
        %848 = vmatprep.subr.bf16.mxu0 0
        %849 = vmatpush2.bf16.msra.mxu0 0
        %850 = vmatprep.subr.bf16.mxu0 0
        %851 = vmatpush2.bf16.msra.mxu0 0
        %852 = vmatprep.subr.bf16.mxu0 0
        %853 = vmatpush2.bf16.msra.mxu0 0
        %854 = vmatprep.subr.bf16.mxu0 0
        %855 = vmatpush2.bf16.msra.mxu0 0
        %856 = vmatprep.subr.bf16.mxu0 0
        %857 = vmatpush2.bf16.msra.mxu0 0
        %858 = vmatprep.subr.bf16.mxu0 0
        %859 = vmatpush2.bf16.msra.mxu0 0
        %860 = vmatprep.subr.bf16.mxu0 0
        %861 = vmatpush2.bf16.msra.mxu0 0
        %862 = vmatprep.mubr.bf16.mxu0 0
        %863 = vmatmul.mubr.bf16.gmra.mxu0 %v825
        %v864 = vpop.f32.mrf.mxu0
        %v865 = vadd.f32 0.0, %v864
        %v866 = vpop.f32.mrf.mxu0
        %v867 = vpop.f32.mrf.mxu0
        %v868 = vpop.f32.mrf.mxu0
        %869 = vdwg.mxu0
        %v870 = vpack.c.bf16 %v865, %v865
        %871 = vrot.lane.b32.xlu0 %v536, 104
        %v872 = vpop.permute.xlu0 %871
        %873 = vrot.lane.b32.xlu0 %v536, 72
        %v874 = vpop.permute.xlu0 %873
        %v876 = vsel %vm540, %v872, 0
        %v879 = vsel %vm540, %v874, 0
        %881 = vmatprep.subr.bf16.mxu0 0
        %882 = vmatpush1.bf16.xpose.msra.mxu0 0
        %883 = vmatprep.subr.bf16.mxu0 0
        %884 = vmatpush1.bf16.xpose.msra.mxu0 0
        %885 = vmatprep.subr.bf16.mxu0 0
        %886 = vmatpush1.bf16.xpose.msra.mxu0 0
        %887 = vmatprep.subr.bf16.mxu0 0
        %888 = vmatpush1.bf16.xpose.msra.mxu0 0
        %889 = vmatprep.subr.bf16.mxu0 0
        %890 = vmatpush1.bf16.xpose.msra.mxu0 0
        %891 = vmatprep.subr.bf16.mxu0 0
        %892 = vmatpush1.bf16.xpose.msra.mxu0 0
        %893 = vmatprep.subr.bf16.mxu0 0
        %894 = vmatpush1.bf16.xpose.msra.mxu0 0
        %895 = vmatprep.subr.bf16.mxu0 0
        %896 = vmatpush1.bf16.xpose.msra.mxu0 %v879
        %897 = vmatprep.subr.bf16.mxu0 0
        %898 = vmatpush2.bf16.xpose.msra.mxu0 0
        %899 = vmatprep.subr.bf16.mxu0 0
        %900 = vmatpush2.bf16.xpose.msra.mxu0 0
        %901 = vmatprep.subr.bf16.mxu0 0
        %902 = vmatpush2.bf16.xpose.msra.mxu0 0
        %903 = vmatprep.subr.bf16.mxu0 0
        %904 = vmatpush2.bf16.xpose.msra.mxu0 0
        %905 = vmatprep.subr.bf16.mxu0 0
        %906 = vmatpush2.bf16.xpose.msra.mxu0 0
        %907 = vmatprep.subr.bf16.mxu0 0
        %908 = vmatpush2.bf16.xpose.msra.mxu0 0
        %909 = vmatprep.subr.bf16.mxu0 0
        %910 = vmatpush2.bf16.xpose.msra.mxu0 0
        %911 = vmatprep.subr.bf16.mxu0 0
        %912 = vmatpush2.bf16.xpose.msra.mxu0 0
        %913 = vmatprep.mubr.bf16.mxu0 0
        %914 = vmatmul.mubr.bf16.gmra.mxu0 %v876
        %v915 = vpop.f32.mrf.mxu0
        %v916 = vadd.f32 0.0, %v915
        %v917 = vpop.f32.mrf.mxu0
        %v918 = vpop.f32.mrf.mxu0
        %v919 = vpop.f32.mrf.mxu0
        %920 = vdwg.mxu0
        %v921 = vsel %vm540, %v916, -inf
        %922 = vmax.xlane.f32.xlu0 %v921
        %v923 = vpop.xlane.xlu0 %922
        %v924 = vsub.f32 %v916, %v923
        %v925 = vmul.f32 %v924, 1.442695
        %v926 = vpow.pop %v925
        %v927 = vsel %vm540, %v926, 0.0
        %928 = vadd.xlane.f32.xlu0 %v927
        %v929 = vpop.xlane.xlu0 %928
        %v930 = vrcp.pop %v929
        %v931 = vmul.f32 %v926, %v930
        %v932 = vpack.c.bf16 %v931, %v931
        %933 = vrot.lane.b32.xlu0 %v536, 40
        %v934 = vpop.permute.xlu0 %933
        %v936 = vsel %vm540, %v932, 0
        %v939 = vsel %vm604, %v934, 0
        %941 = vmatprep.subr.bf16.mxu0 0
        %942 = vmatpush1.bf16.msra.mxu0 0
        %943 = vmatprep.subr.bf16.mxu0 0
        %944 = vmatpush1.bf16.msra.mxu0 0
        %945 = vmatprep.subr.bf16.mxu0 0
        %946 = vmatpush1.bf16.msra.mxu0 0
        %947 = vmatprep.subr.bf16.mxu0 0
        %948 = vmatpush1.bf16.msra.mxu0 0
        %949 = vmatprep.subr.bf16.mxu0 0
        %950 = vmatpush1.bf16.msra.mxu0 0
        %951 = vmatprep.subr.bf16.mxu0 0
        %952 = vmatpush1.bf16.msra.mxu0 0
        %953 = vmatprep.subr.bf16.mxu0 0
        %954 = vmatpush1.bf16.msra.mxu0 0
        %955 = vmatprep.subr.bf16.mxu0 0
        %956 = vmatpush1.bf16.msra.mxu0 %v939
        %957 = vmatprep.subr.bf16.mxu0 0
        %958 = vmatpush2.bf16.msra.mxu0 0
        %959 = vmatprep.subr.bf16.mxu0 0
        %960 = vmatpush2.bf16.msra.mxu0 0
        %961 = vmatprep.subr.bf16.mxu0 0
        %962 = vmatpush2.bf16.msra.mxu0 0
        %963 = vmatprep.subr.bf16.mxu0 0
        %964 = vmatpush2.bf16.msra.mxu0 0
        %965 = vmatprep.subr.bf16.mxu0 0
        %966 = vmatpush2.bf16.msra.mxu0 0
        %967 = vmatprep.subr.bf16.mxu0 0
        %968 = vmatpush2.bf16.msra.mxu0 0
        %969 = vmatprep.subr.bf16.mxu0 0
        %970 = vmatpush2.bf16.msra.mxu0 0
        %971 = vmatprep.subr.bf16.mxu0 0
        %972 = vmatpush2.bf16.msra.mxu0 0
        %973 = vmatprep.mubr.bf16.mxu0 0
        %974 = vmatmul.mubr.bf16.gmra.mxu0 %v936
        %v975 = vpop.f32.mrf.mxu0
        %v976 = vadd.f32 0.0, %v975
        %v977 = vpop.f32.mrf.mxu0
        %v978 = vpop.f32.mrf.mxu0
        %v979 = vpop.f32.mrf.mxu0
        %980 = vdwg.mxu0
        %v981 = vpack.c.bf16 %v976, %v976
        %983 = vrot.lane.b32.xlu0 %v759, 8
        %v984 = vpop.permute.xlu0 %983
        %986 = vrot.lane.b32.xlu0 %v870, 16
        %v987 = vpop.permute.xlu0 %986
        %989 = vrot.lane.b32.xlu0 %v981, 24
        %v990 = vpop.permute.xlu0 %989
        %v993 = vsel %vm540, %v648, %v984
        %vm994 = vcmask 130048
        %v996 = vsel %vm994, %v993, %v987
        %vm997 = vcmask 195584
        %v999 = vsel %vm997, %v996, %v990
        %v1000 = vld [vmem:[%s3] sm:$0xf]
        %v1001 = vld [vmem:[%s3 + $0x4] sm:$0xf]
        %v1002 = vld [vmem:[%s3 + $0x8] sm:$0xf]
        %v1003 = vld [vmem:[%s3 + $0xc] sm:$0xf]
        %v1004 = vld [vmem:[%s4] sm:$0x1]
        %v1006 = vlaneseq
        %v1007 = vshrl.u32 %v1006, 7
        %v1008 = vsub.s32 0, %v1007
        %v1009 = vrot.slane %v1004, %v1008
        %v1015 = vunpack.c.l.b16 %v1000
        %v1016 = vunpack.c.l.b16 %v1001
        %v1017 = vunpack.c.l.b16 %v1002
        %v1018 = vunpack.c.l.b16 %v1003
        %v1019 = vpack.c.b16 %v1016, %v1015
        %v1020 = vpack.c.b16 %v1018, %v1017
        %v1023 = vsel %vm440, %v999, 0
        %1025 = vmatprep.subr.bf16.mxu0 0
        %1026 = vmatpush1.bf16.msra.mxu0 0
        %1027 = vmatprep.subr.bf16.mxu0 0
        %1028 = vmatpush1.bf16.msra.mxu0 0
        %1029 = vmatprep.subr.bf16.mxu0 0
        %1030 = vmatpush1.bf16.msra.mxu0 0
        %1031 = vmatprep.subr.bf16.mxu0 0
        %1032 = vmatpush1.bf16.msra.mxu0 0
        %1033 = vmatprep.subr.bf16.mxu0 0
        %1034 = vmatpush1.bf16.msra.mxu0 0
        %1035 = vmatprep.subr.bf16.mxu0 0
        %1036 = vmatpush1.bf16.msra.mxu0 0
        %1037 = vmatprep.subr.bf16.mxu0 0
        %1038 = vmatpush1.bf16.msra.mxu0 %v1020
        %1039 = vmatprep.subr.bf16.mxu0 0
        %1040 = vmatpush1.bf16.msra.mxu0 %v1019
        %1041 = vmatprep.subr.bf16.mxu0 0
        %1042 = vmatpush2.bf16.msra.mxu0 0
        %1043 = vmatprep.subr.bf16.mxu0 0
        %1044 = vmatpush2.bf16.msra.mxu0 0
        %1045 = vmatprep.subr.bf16.mxu0 0
        %1046 = vmatpush2.bf16.msra.mxu0 0
        %1047 = vmatprep.subr.bf16.mxu0 0
        %1048 = vmatpush2.bf16.msra.mxu0 0
        %1049 = vmatprep.subr.bf16.mxu0 0
        %1050 = vmatpush2.bf16.msra.mxu0 0
        %1051 = vmatprep.subr.bf16.mxu0 0
        %1052 = vmatpush2.bf16.msra.mxu0 0
        %1053 = vmatprep.subr.bf16.mxu0 0
        %1054 = vmatpush2.bf16.msra.mxu0 0
        %1055 = vmatprep.subr.bf16.mxu0 0
        %1056 = vmatpush2.bf16.msra.mxu0 0
        %1057 = vmatprep.mubr.bf16.mxu0 0
        %1058 = vmatmul.mubr.bf16.gmra.mxu0 %v1023
        %v1059 = vpop.f32.mrf.mxu0
        %v1060 = vadd.f32 %v1009, %v1059
        %v1061 = vpop.f32.mrf.mxu0
        %v1062 = vpop.f32.mrf.mxu0
        %v1063 = vpop.f32.mrf.mxu0
        %1064 = vdwg.mxu0
        %v1065 = vadd.f32 %v437, %v1060
        %v1066 = vld [vmem:[%s11] sm:$0x1]
        %v1067 = vld [vmem:[%s12] sm:$0x1]
        %v1068 = vsel %vm440, %v1065, 0.0
        %1069 = vadd.xlane.f32.xlu0 %v1068
        %v1070 = vpop.xlane.xlu0 %1069
        %v1071 = vmul.f32 %v1070, %v444
        %v1072 = vsub.f32 %v1065, %v1071
        %v1073 = vmul.f32 %v1072, %v1072
        %v1074 = vsel %vm440, %v1073, 0.0
        %1075 = vadd.xlane.f32.xlu0 %v1074
        %v1076 = vpop.xlane.xlu0 %1075
        %v1077 = vmul.f32 %v1076, %v444
        %v1078 = vadd.f32 %v1077, 1e-05
        %v1079 = vrsqrt.pop %v1078
        %v1080 = vmul.f32 %v1072, %v1079
        %v1082 = vlaneseq
        %v1083 = vshrl.u32 %v1082, 7
        %v1084 = vsub.s32 0, %v1083
        %v1085 = vrot.slane %v1066, %v1084
        %v1087 = vmul.f32 %v1080, %v1085
        %v1089 = vlaneseq
        %v1090 = vshrl.u32 %v1089, 7
        %v1091 = vsub.s32 0, %v1090
        %v1092 = vrot.slane %v1067, %v1091
        %v1094 = vadd.f32 %v1087, %v1092
        %v1095 = vpack.c.bf16 %v1094, %v1094
        %v1096 = vld [vmem:[%s7] sm:$0xf]
        %v1097 = vld [vmem:[%s7 + $0x4] sm:$0xf]
        %v1098 = vld [vmem:[%s7 + $0x8] sm:$0xf]
        %v1099 = vld [vmem:[%s7 + $0xc] sm:$0xf]
        %v1100 = vld [vmem:[%s8] sm:$0x1]
        %v1102 = vlaneseq
        %v1103 = vshrl.u32 %v1102, 7
        %v1104 = vsub.s32 0, %v1103
        %v1105 = vrot.slane %v1100, %v1104
        %v1111 = vunpack.c.l.b16 %v1096
        %v1112 = vunpack.c.l.b16 %v1097
        %v1113 = vunpack.c.l.b16 %v1098
        %v1114 = vunpack.c.l.b16 %v1099
        %v1115 = vpack.c.b16 %v1112, %v1111
        %v1116 = vpack.c.b16 %v1114, %v1113
        %v1120 = vsel %vm440, %v1095, 0
        %1122 = vmatprep.subr.bf16.mxu0 0
        %1123 = vmatpush1.bf16.msra.mxu0 0
        %1124 = vmatprep.subr.bf16.mxu0 0
        %1125 = vmatpush1.bf16.msra.mxu0 0
        %1126 = vmatprep.subr.bf16.mxu0 0
        %1127 = vmatpush1.bf16.msra.mxu0 0
        %1128 = vmatprep.subr.bf16.mxu0 0
        %1129 = vmatpush1.bf16.msra.mxu0 0
        %1130 = vmatprep.subr.bf16.mxu0 0
        %1131 = vmatpush1.bf16.msra.mxu0 0
        %1132 = vmatprep.subr.bf16.mxu0 0
        %1133 = vmatpush1.bf16.msra.mxu0 0
        %1134 = vmatprep.subr.bf16.mxu0 0
        %1135 = vmatpush1.bf16.msra.mxu0 %v1116
        %1136 = vmatprep.subr.bf16.mxu0 0
        %1137 = vmatpush1.bf16.msra.mxu0 %v1115
        %1138 = vmatprep.subr.bf16.mxu0 0
        %1139 = vmatpush2.bf16.msra.mxu0 0
        %1140 = vmatprep.subr.bf16.mxu0 0
        %1141 = vmatpush2.bf16.msra.mxu0 0
        %1142 = vmatprep.subr.bf16.mxu0 0
        %1143 = vmatpush2.bf16.msra.mxu0 0
        %1144 = vmatprep.subr.bf16.mxu0 0
        %1145 = vmatpush2.bf16.msra.mxu0 0
        %1146 = vmatprep.subr.bf16.mxu0 0
        %1147 = vmatpush2.bf16.msra.mxu0 0
        %1148 = vmatprep.subr.bf16.mxu0 0
        %1149 = vmatpush2.bf16.msra.mxu0 0
        %1150 = vmatprep.subr.bf16.mxu0 0
        %1151 = vmatpush2.bf16.msra.mxu0 0
        %1152 = vmatprep.subr.bf16.mxu0 0
        %1153 = vmatpush2.bf16.msra.mxu0 0
        %1154 = vmatprep.mubr.bf16.mxu0 0
        %1155 = vmatmul.mubr.bf16.gmra.mxu0 %v1120
        %v1156 = vpop.f32.mrf.mxu0
        %v1157 = vadd.f32 %v1105, %v1156
        %v1158 = vpop.f32.mrf.mxu0
        %v1159 = vpop.f32.mrf.mxu0
        %v1160 = vpop.f32.mrf.mxu0
        %1161 = vdwg.mxu0
        %v1162 = vmul.f32 %v1157, 1.702
        %v1163 = vxor.u32 %v1162, 2147483648
        %v1164 = vmul.f32 %v1163, 1.442695
        %v1165 = vpow.pop %v1164
        %v1166 = vadd.f32 %v1165, 1.0
        %v1167 = vrcp.pop %v1166
        %v1168 = vmul.f32 1.0, %v1167
        %v1169 = vmul.f32 %v1157, %v1168
        %v1170 = vpack.c.bf16 %v1169, %v1169
        %v1171 = vld [vmem:[%s9] sm:$0xf]
        %v1172 = vld [vmem:[%s9 + $0x4] sm:$0xf]
        %v1173 = vld [vmem:[%s9 + $0x8] sm:$0xf]
        %v1174 = vld [vmem:[%s9 + $0xc] sm:$0xf]
        %v1175 = vld [vmem:[%s9 + $0x10] sm:$0xf]
        %v1176 = vld [vmem:[%s9 + $0x14] sm:$0xf]
        %v1177 = vld [vmem:[%s9 + $0x18] sm:$0xf]
        %v1178 = vld [vmem:[%s9 + $0x1c] sm:$0xf]
        %v1179 = vld [vmem:[%s9 + $0x20] sm:$0xf]
        %v1180 = vld [vmem:[%s9 + $0x24] sm:$0xf]
        %v1181 = vld [vmem:[%s9 + $0x28] sm:$0xf]
        %v1182 = vld [vmem:[%s9 + $0x2c] sm:$0xf]
        %v1183 = vld [vmem:[%s9 + $0x30] sm:$0xf]
        %v1184 = vld [vmem:[%s9 + $0x34] sm:$0xf]
        %v1185 = vld [vmem:[%s9 + $0x38] sm:$0xf]
        %v1186 = vld [vmem:[%s9 + $0x3c] sm:$0xf]
        %v1203 = vunpack.c.l.b16 %v1171
        %v1204 = vunpack.c.l.b16 %v1172
        %v1205 = vunpack.c.l.b16 %v1173
        %v1206 = vunpack.c.l.b16 %v1174
        %v1207 = vunpack.c.l.b16 %v1175
        %v1208 = vunpack.c.l.b16 %v1176
        %v1209 = vunpack.c.l.b16 %v1177
        %v1210 = vunpack.c.l.b16 %v1178
        %v1211 = vunpack.c.l.b16 %v1179
        %v1212 = vunpack.c.l.b16 %v1180
        %v1213 = vunpack.c.l.b16 %v1181
        %v1214 = vunpack.c.l.b16 %v1182
        %v1215 = vunpack.c.l.b16 %v1183
        %v1216 = vunpack.c.l.b16 %v1184
        %v1217 = vunpack.c.l.b16 %v1185
        %v1218 = vunpack.c.l.b16 %v1186
        %v1219 = vpack.c.b16 %v1204, %v1203
        %v1220 = vpack.c.b16 %v1206, %v1205
        %v1221 = vpack.c.b16 %v1208, %v1207
        %v1222 = vpack.c.b16 %v1210, %v1209
        %v1223 = vpack.c.b16 %v1212, %v1211
        %v1224 = vpack.c.b16 %v1214, %v1213
        %v1225 = vpack.c.b16 %v1216, %v1215
        %v1226 = vpack.c.b16 %v1218, %v1217
        %1235 = vmatprep.subr.bf16.mxu0 0
        %1236 = vmatpush1.bf16.msra.mxu0 %v1226
        %1237 = vmatprep.subr.bf16.mxu0 0
        %1238 = vmatpush1.bf16.msra.mxu0 %v1225
        %1239 = vmatprep.subr.bf16.mxu0 0
        %1240 = vmatpush1.bf16.msra.mxu0 %v1224
        %1241 = vmatprep.subr.bf16.mxu0 0
        %1242 = vmatpush1.bf16.msra.mxu0 %v1223
        %1243 = vmatprep.subr.bf16.mxu0 0
        %1244 = vmatpush1.bf16.msra.mxu0 %v1222
        %1245 = vmatprep.subr.bf16.mxu0 0
        %1246 = vmatpush1.bf16.msra.mxu0 %v1221
        %1247 = vmatprep.subr.bf16.mxu0 0
        %1248 = vmatpush1.bf16.msra.mxu0 %v1220
        %1249 = vmatprep.subr.bf16.mxu0 0
        %1250 = vmatpush1.bf16.msra.mxu0 %v1219
        %1251 = vmatprep.subr.bf16.mxu0 0
        %1252 = vmatpush2.bf16.msra.mxu0 0
        %1253 = vmatprep.subr.bf16.mxu0 0
        %1254 = vmatpush2.bf16.msra.mxu0 0
        %1255 = vmatprep.subr.bf16.mxu0 0
        %1256 = vmatpush2.bf16.msra.mxu0 0
        %1257 = vmatprep.subr.bf16.mxu0 0
        %1258 = vmatpush2.bf16.msra.mxu0 0
        %1259 = vmatprep.subr.bf16.mxu0 0
        %1260 = vmatpush2.bf16.msra.mxu0 0
        %1261 = vmatprep.subr.bf16.mxu0 0
        %1262 = vmatpush2.bf16.msra.mxu0 0
        %1263 = vmatprep.subr.bf16.mxu0 0
        %1264 = vmatpush2.bf16.msra.mxu0 0
        %1265 = vmatprep.subr.bf16.mxu0 0
        %1266 = vmatpush2.bf16.msra.mxu0 0
        %1267 = vmatprep.mubr.bf16.mxu0 0
        %1268 = vmatmul.mubr.bf16.gmra.mxu0 %v1170
        %v1269 = vpop.f32.mrf.mxu0
        %v1270 = vadd.f32 0.0, %v1269
        %v1271 = vpop.f32.mrf.mxu0
        %v1272 = vpop.f32.mrf.mxu0
        %v1273 = vpop.f32.mrf.mxu0
        %1274 = vdwg.mxu0
        %v1275 = vadd.f32 %v1065, %v1270
        %v1276 = vld [vmem:[%s10] sm:$0x1]
        %v1278 = vlaneseq
        %v1279 = vshrl.u32 %v1278, 7
        %v1280 = vsub.s32 0, %v1279
        %v1281 = vrot.slane %v1276, %v1280
        %v1283 = vadd.f32 %v1275, %v1281
        %1284 = vst.msk [vmem:[%s431] sm:$0xff] %vm440, %v1283
        %s1285 = sand.u32 %s313, 1
        %s1286 = scalar_lea.sflag [#allocation3], %s1285
        %s1287 = sand.u32 %s313, 1
        %s1288 = smul.addr %s1287, 8
        %s1289 = scalar_lea.vmem [#allocation2], %s1288
        // Predicated region
        $region73: #{tpu_custom_call.1} parent=71 // pred_check
          %p1290 = pneg %p323
        $region74: #{tpu_custom_call.1} parent=71 // pred_check_branch
          %1292 = sbr.rel (%p1290) target = $region76
        $region75: #{tpu_custom_call.1} parent=71 // pred_region
          %s1294 = ssub.s32 128, 128
          %1295 = vsyncadd %s1286, %s1294
          %s1296 = smul.addr %s27, 128
          %s1297 = scalar_lea.hbm %s13, %s1296
          %s1299 = sshll.u32 %s1289, 4
          %s1300 = int_to_ptr.vmem [resolvable:$true] %s1299
          %1302 = dma.vmem_to_hbm [thread:$0]  %s1300, 128, %s1297, %s1286
        $region76: #{tpu_custom_call.1} parent=71 // pred_fallthru
          _
      $region72: #{tpu_custom_call.1} parent=5 // pred_fallthru
        _
      %p1303 = scmp.le.s32.totalorder 2, %s22
      // Predicated region
      $region77: #{tpu_custom_call.1} parent=5 // pred_check
        %p1304 = pneg %p1303
      $region78: #{tpu_custom_call.1} parent=5 // pred_check_branch
        %1306 = sbr.rel (%p1304) target = $region80
      $region79: #{tpu_custom_call.1} parent=5 // pred_region
        %s1307 = ssub.s32 %s22, 2
        // Predicated region
        $region81: #{tpu_custom_call.1} parent=79 // pred_check
          %p1308 = pneg %p329
        $region82: #{tpu_custom_call.1} parent=79 // pred_check_branch
          %1310 = sbr.rel (%p1308) target = $region84
        $region83: #{tpu_custom_call.1} parent=79 // pred_region
          %s1311 = sand.u32 %s314, 1
          %s1312 = scalar_lea.sflag [#allocation3], %s1311
          %s1313 = sand.u32 %s314, 1
          %s1314 = smul.addr %s1313, 8
          %s1315 = scalar_lea.vmem [#allocation2], %s1314
          %1316 = dma.done %s1312, 128
        $region84: #{tpu_custom_call.1} parent=79 // pred_fallthru
          _
      $region80: #{tpu_custom_call.1} parent=5 // pred_fallthru
        _
    $region6: #{tpu_custom_call.1} parent=1 // loop_footer
      %s26 = sadd.s32 1, %s22
    $region7: #{tpu_custom_call.1} parent=1 // loop_footer_branch
      %21 = sbr.rel target = $region3
    $region8: #{tpu_custom_call.1} parent=1 // loop_exit
      _
    %1317 = vsyncpa [#allocation3], 1
    %s1318 = scalar_lea.sflag [#allocation3], 1
    %1319 = vsyncpa %s1318, 1

// kernel: tpu_custom_call.1
$region0: #{tpu_custom_call.1}
  #allocation0 [shape = 'u32[]', space=smem, size = 0x4, offset = 0x4, fixed_abs, tag = 'smem constant byte address 0x4 - core index']
  #allocation1 [shape = 'u32[144,128]{1,0:T(1,128)}', space=vmem, size = 0x12000, scoped, tag = 'internal scratch']
  %s0 = inlined_call_operand.vmem [shape: f32[2,8,32], index: 0, kind: input, shape index: {}]
  %s1 = inlined_call_operand.vmem [shape: bf16[32,96], index: 1, kind: input, shape index: {}]
  %s2 = inlined_call_operand.vmem [shape: f32[1,96], index: 2, kind: input, shape index: {}]
  %s3 = inlined_call_operand.vmem [shape: bf16[32,32], index: 3, kind: input, shape index: {}]
  %s4 = inlined_call_operand.vmem [shape: f32[1,32], index: 4, kind: input, shape index: {}]
  %s5 = inlined_call_operand.vmem [shape: f32[1,32], index: 5, kind: input, shape index: {}]
  %s6 = inlined_call_operand.vmem [shape: f32[1,32], index: 6, kind: input, shape index: {}]
  %s7 = inlined_call_operand.vmem [shape: bf16[32,128], index: 7, kind: input, shape index: {}]
  %s8 = inlined_call_operand.vmem [shape: f32[1,128], index: 8, kind: input, shape index: {}]
  %s9 = inlined_call_operand.vmem [shape: bf16[128,32], index: 9, kind: input, shape index: {}]
  %s10 = inlined_call_operand.vmem [shape: f32[1,32], index: 10, kind: input, shape index: {}]
  %s11 = inlined_call_operand.vmem [shape: f32[1,32], index: 11, kind: input, shape index: {}]
  %s12 = inlined_call_operand.vmem [shape: f32[1,32], index: 12, kind: input, shape index: {}]
  %s13 = inlined_call_operand.hbm [shape: f32[2,8,32], index: 13, kind: output, shape index: {}]
  %s14 = sld [smem:[#allocation0]]
  $region85: #{tpu_custom_call.1} parent=0
    _
  %s16 = ssub.s32 1, %s14
  %s17 = scalar_select 0, %s16, %s14
  $region1: #{tpu_custom_call.1} parent=0
    #allocation2 [shape = 'u8[8192]{0}', space=vmem, size = 0x2000, scoped, tag = 'output window, operand 0']
    #allocation3 [shape = 's32[2]{0}', space=sflag, size = 0x8, scoped, tag = 'scoped memory for tpu_custom_call.1']
    %18 = vsyncpa [#allocation3], 0
    %s19 = scalar_lea.sflag [#allocation3], 1
    %20 = vsyncpa %s19, 0
    loop: start=0, step=1, limit=4
    $region2: #{tpu_custom_call.1} parent=1 // loop_pre_header
      _
    $region3: #{tpu_custom_call.1} parent=1 // loop_header
      %s22 = sphi 0, %s26
      %p23 = scmp.ge.s32.totalorder %s22, 4
      %s32 = sphi 0, %s34
      %s35 = sphi 0, %s32
      %s36 = sphi 0, %s35
      %s52 = sphi 0, %s36
      %s56 = sphi 0, %s56
      %s58 = sphi 0, %s56
      %s59 = sphi 0, %s58
      %s73 = sphi 0, %s59
      %s77 = sphi 0, %s77
      %s79 = sphi 0, %s77
      %s80 = sphi 0, %s79
      %s94 = sphi 0, %s80
      %s98 = sphi 0, %s98
      %s100 = sphi 0, %s98
      %s101 = sphi 0, %s100
      %s115 = sphi 0, %s101
      %s119 = sphi 0, %s119
      %s121 = sphi 0, %s119
      %s122 = sphi 0, %s121
      %s136 = sphi 0, %s122
      %s140 = sphi 0, %s140
      %s142 = sphi 0, %s140
      %s143 = sphi 0, %s142
      %s157 = sphi 0, %s143
      %s161 = sphi 0, %s161
      %s163 = sphi 0, %s161
      %s164 = sphi 0, %s163
      %s178 = sphi 0, %s164
      %s182 = sphi 0, %s182
      %s184 = sphi 0, %s182
      %s185 = sphi 0, %s184
      %s199 = sphi 0, %s185
      %s203 = sphi 0, %s203
      %s205 = sphi 0, %s203
      %s206 = sphi 0, %s205
      %s220 = sphi 0, %s206
      %s224 = sphi 0, %s224
      %s226 = sphi 0, %s224
      %s227 = sphi 0, %s226
      %s241 = sphi 0, %s227
      %s245 = sphi 0, %s245
      %s247 = sphi 0, %s245
      %s248 = sphi 0, %s247
      %s262 = sphi 0, %s248
      %s266 = sphi 0, %s266
      %s268 = sphi 0, %s266
      %s269 = sphi 0, %s268
      %s283 = sphi 0, %s269
      %s287 = sphi 0, %s287
      %s289 = sphi 0, %s287
      %s290 = sphi 0, %s289
      %s304 = sphi 0, %s290
      %s310 = sphi 0, %s312
      %s313 = sphi 0, %s310
      %s314 = sphi 0, %s313
      %s330 = sphi 0, %s314
    $region4: #{tpu_custom_call.1} parent=1 // loop_header_branch
      %25 = sbr.rel (%p23) target = $region8
    $region5: #{tpu_custom_call.1} parent=1 // loop_body
      %s27 = ssub.s32 %s22, 1
      %s28 = ssub.s32 %s22, 2
      %s29 = sadd.s32 %s22, 1
      %s30 = ssub.s32 %s22, %s29
      %p31 = scmp.eq.s32.totalorder %s30, 0
      %s33 = sadd.s32 %s32, 1
      %s34 = scalar_select %p31, %s32, %s33
      %p37 = pneg %p31
      %p38 = scmp.eq.s32.totalorder %s22, 1
      %p39 = por %p37, %p38
      %p40 = scmp.ne.s32.totalorder %s32, %s35
      %p41 = scmp.eq.s32.totalorder %s22, 0
      %p42 = por %p40, %p41
      %p43 = scmp.ne.s32.totalorder %s32, %s35
      %p44 = scmp.eq.s32.totalorder %s27, 1
      %p45 = por %p43, %p44
      %p46 = scmp.ne.s32.totalorder %s35, %s36
      %p47 = scmp.eq.s32.totalorder %s27, 0
      %p48 = por %p46, %p47
      %p49 = scmp.ne.s32.totalorder %s35, %s36
      %p50 = scmp.eq.s32.totalorder %s28, 1
      %p51 = por %p49, %p50
      %p53 = scmp.ne.s32.totalorder %s36, %s52
      %p54 = scmp.eq.s32.totalorder %s28, 0
      %p55 = por %p53, %p54
      %s57 = sadd.s32 %s56, 1
      %p60 = scmp.eq.s32.totalorder %s22, 1
      %p61 = scmp.ne.s32.totalorder %s56, %s58
      %p62 = scmp.eq.s32.totalorder %s22, 0
      %p63 = por %p61, %p62
      %p64 = scmp.ne.s32.totalorder %s56, %s58
      %p65 = scmp.eq.s32.totalorder %s27, 1
      %p66 = por %p64, %p65
      %p67 = scmp.ne.s32.totalorder %s58, %s59
      %p68 = scmp.eq.s32.totalorder %s27, 0
      %p69 = por %p67, %p68
      %p70 = scmp.ne.s32.totalorder %s58, %s59
      %p71 = scmp.eq.s32.totalorder %s28, 1
      %p72 = por %p70, %p71
      %p74 = scmp.ne.s32.totalorder %s59, %s73
      %p75 = scmp.eq.s32.totalorder %s28, 0
      %p76 = por %p74, %p75
      %s78 = sadd.s32 %s77, 1
      %p81 = scmp.eq.s32.totalorder %s22, 1
      %p82 = scmp.ne.s32.totalorder %s77, %s79
      %p83 = scmp.eq.s32.totalorder %s22, 0
      %p84 = por %p82, %p83
      %p85 = scmp.ne.s32.totalorder %s77, %s79
      %p86 = scmp.eq.s32.totalorder %s27, 1
      %p87 = por %p85, %p86
      %p88 = scmp.ne.s32.totalorder %s79, %s80
      %p89 = scmp.eq.s32.totalorder %s27, 0
      %p90 = por %p88, %p89
      %p91 = scmp.ne.s32.totalorder %s79, %s80
      %p92 = scmp.eq.s32.totalorder %s28, 1
      %p93 = por %p91, %p92
      %p95 = scmp.ne.s32.totalorder %s80, %s94
      %p96 = scmp.eq.s32.totalorder %s28, 0
      %p97 = por %p95, %p96
      %s99 = sadd.s32 %s98, 1
      %p102 = scmp.eq.s32.totalorder %s22, 1
      %p103 = scmp.ne.s32.totalorder %s98, %s100
      %p104 = scmp.eq.s32.totalorder %s22, 0
      %p105 = por %p103, %p104
      %p106 = scmp.ne.s32.totalorder %s98, %s100
      %p107 = scmp.eq.s32.totalorder %s27, 1
      %p108 = por %p106, %p107
      %p109 = scmp.ne.s32.totalorder %s100, %s101
      %p110 = scmp.eq.s32.totalorder %s27, 0
      %p111 = por %p109, %p110
      %p112 = scmp.ne.s32.totalorder %s100, %s101
      %p113 = scmp.eq.s32.totalorder %s28, 1
      %p114 = por %p112, %p113
      %p116 = scmp.ne.s32.totalorder %s101, %s115
      %p117 = scmp.eq.s32.totalorder %s28, 0
      %p118 = por %p116, %p117
      %s120 = sadd.s32 %s119, 1
      %p123 = scmp.eq.s32.totalorder %s22, 1
      %p124 = scmp.ne.s32.totalorder %s119, %s121
      %p125 = scmp.eq.s32.totalorder %s22, 0
      %p126 = por %p124, %p125
      %p127 = scmp.ne.s32.totalorder %s119, %s121
      %p128 = scmp.eq.s32.totalorder %s27, 1
      %p129 = por %p127, %p128
      %p130 = scmp.ne.s32.totalorder %s121, %s122
      %p131 = scmp.eq.s32.totalorder %s27, 0
      %p132 = por %p130, %p131
      %p133 = scmp.ne.s32.totalorder %s121, %s122
      %p134 = scmp.eq.s32.totalorder %s28, 1
      %p135 = por %p133, %p134
      %p137 = scmp.ne.s32.totalorder %s122, %s136
      %p138 = scmp.eq.s32.totalorder %s28, 0
      %p139 = por %p137, %p138
      %s141 = sadd.s32 %s140, 1
      %p144 = scmp.eq.s32.totalorder %s22, 1
      %p145 = scmp.ne.s32.totalorder %s140, %s142
      %p146 = scmp.eq.s32.totalorder %s22, 0
      %p147 = por %p145, %p146
      %p148 = scmp.ne.s32.totalorder %s140, %s142
      %p149 = scmp.eq.s32.totalorder %s27, 1
      %p150 = por %p148, %p149
      %p151 = scmp.ne.s32.totalorder %s142, %s143
      %p152 = scmp.eq.s32.totalorder %s27, 0
      %p153 = por %p151, %p152
      %p154 = scmp.ne.s32.totalorder %s142, %s143
      %p155 = scmp.eq.s32.totalorder %s28, 1
      %p156 = por %p154, %p155
      %p158 = scmp.ne.s32.totalorder %s143, %s157
      %p159 = scmp.eq.s32.totalorder %s28, 0
      %p160 = por %p158, %p159
      %s162 = sadd.s32 %s161, 1
      %p165 = scmp.eq.s32.totalorder %s22, 1
      %p166 = scmp.ne.s32.totalorder %s161, %s163
      %p167 = scmp.eq.s32.totalorder %s22, 0
      %p168 = por %p166, %p167
      %p169 = scmp.ne.s32.totalorder %s161, %s163
      %p170 = scmp.eq.s32.totalorder %s27, 1
      %p171 = por %p169, %p170
      %p172 = scmp.ne.s32.totalorder %s163, %s164
      %p173 = scmp.eq.s32.totalorder %s27, 0
      %p174 = por %p172, %p173
      %p175 = scmp.ne.s32.totalorder %s163, %s164
      %p176 = scmp.eq.s32.totalorder %s28, 1
      %p177 = por %p175, %p176
      %p179 = scmp.ne.s32.totalorder %s164, %s178
      %p180 = scmp.eq.s32.totalorder %s28, 0
      %p181 = por %p179, %p180
      %s183 = sadd.s32 %s182, 1
      %p186 = scmp.eq.s32.totalorder %s22, 1
      %p187 = scmp.ne.s32.totalorder %s182, %s184
      %p188 = scmp.eq.s32.totalorder %s22, 0
      %p189 = por %p187, %p188
      %p190 = scmp.ne.s32.totalorder %s182, %s184
      %p191 = scmp.eq.s32.totalorder %s27, 1
      %p192 = por %p190, %p191
      %p193 = scmp.ne.s32.totalorder %s184, %s185
      %p194 = scmp.eq.s32.totalorder %s27, 0
      %p195 = por %p193, %p194
      %p196 = scmp.ne.s32.totalorder %s184, %s185
      %p197 = scmp.eq.s32.totalorder %s28, 1
      %p198 = por %p196, %p197
      %p200 = scmp.ne.s32.totalorder %s185, %s199
      %p201 = scmp.eq.s32.totalorder %s28, 0
      %p202 = por %p200, %p201
      %s204 = sadd.s32 %s203, 1
      %p207 = scmp.eq.s32.totalorder %s22, 1
      %p208 = scmp.ne.s32.totalorder %s203, %s205
      %p209 = scmp.eq.s32.totalorder %s22, 0
      %p210 = por %p208, %p209
      %p211 = scmp.ne.s32.totalorder %s203, %s205
      %p212 = scmp.eq.s32.totalorder %s27, 1
      %p213 = por %p211, %p212
      %p214 = scmp.ne.s32.totalorder %s205, %s206
      %p215 = scmp.eq.s32.totalorder %s27, 0
      %p216 = por %p214, %p215
      %p217 = scmp.ne.s32.totalorder %s205, %s206
      %p218 = scmp.eq.s32.totalorder %s28, 1
      %p219 = por %p217, %p218
      %p221 = scmp.ne.s32.totalorder %s206, %s220
      %p222 = scmp.eq.s32.totalorder %s28, 0
      %p223 = por %p221, %p222
      %s225 = sadd.s32 %s224, 1
      %p228 = scmp.eq.s32.totalorder %s22, 1
      %p229 = scmp.ne.s32.totalorder %s224, %s226
      %p230 = scmp.eq.s32.totalorder %s22, 0
      %p231 = por %p229, %p230
      %p232 = scmp.ne.s32.totalorder %s224, %s226
      %p233 = scmp.eq.s32.totalorder %s27, 1
      %p234 = por %p232, %p233
      %p235 = scmp.ne.s32.totalorder %s226, %s227
      %p236 = scmp.eq.s32.totalorder %s27, 0
      %p237 = por %p235, %p236
      %p238 = scmp.ne.s32.totalorder %s226, %s227
      %p239 = scmp.eq.s32.totalorder %s28, 1
      %p240 = por %p238, %p239
      %p242 = scmp.ne.s32.totalorder %s227, %s241
      %p243 = scmp.eq.s32.totalorder %s28, 0
      %p244 = por %p242, %p243
      %s246 = sadd.s32 %s245, 1
      %p249 = scmp.eq.s32.totalorder %s22, 1
      %p250 = scmp.ne.s32.totalorder %s245, %s247
      %p251 = scmp.eq.s32.totalorder %s22, 0
      %p252 = por %p250, %p251
      %p253 = scmp.ne.s32.totalorder %s245, %s247
      %p254 = scmp.eq.s32.totalorder %s27, 1
      %p255 = por %p253, %p254
      %p256 = scmp.ne.s32.totalorder %s247, %s248
      %p257 = scmp.eq.s32.totalorder %s27, 0
      %p258 = por %p256, %p257
      %p259 = scmp.ne.s32.totalorder %s247, %s248
      %p260 = scmp.eq.s32.totalorder %s28, 1
      %p261 = por %p259, %p260
      %p263 = scmp.ne.s32.totalorder %s248, %s262
      %p264 = scmp.eq.s32.totalorder %s28, 0
      %p265 = por %p263, %p264
      %s267 = sadd.s32 %s266, 1
      %p270 = scmp.eq.s32.totalorder %s22, 1
      %p271 = scmp.ne.s32.totalorder %s266, %s268
      %p272 = scmp.eq.s32.totalorder %s22, 0
      %p273 = por %p271, %p272
      %p274 = scmp.ne.s32.totalorder %s266, %s268
      %p275 = scmp.eq.s32.totalorder %s27, 1
      %p276 = por %p274, %p275
      %p277 = scmp.ne.s32.totalorder %s268, %s269
      %p278 = scmp.eq.s32.totalorder %s27, 0
      %p279 = por %p277, %p278
      %p280 = scmp.ne.s32.totalorder %s268, %s269
      %p281 = scmp.eq.s32.totalorder %s28, 1
      %p282 = por %p280, %p281
      %p284 = scmp.ne.s32.totalorder %s269, %s283
      %p285 = scmp.eq.s32.totalorder %s28, 0
      %p286 = por %p284, %p285
      %s288 = sadd.s32 %s287, 1
      %p291 = scmp.eq.s32.totalorder %s22, 1
      %p292 = scmp.ne.s32.totalorder %s287, %s289
      %p293 = scmp.eq.s32.totalorder %s22, 0
      %p294 = por %p292, %p293
      %p295 = scmp.ne.s32.totalorder %s287, %s289
      %p296 = scmp.eq.s32.totalorder %s27, 1
      %p297 = por %p295, %p296
      %p298 = scmp.ne.s32.totalorder %s289, %s290
      %p299 = scmp.eq.s32.totalorder %s27, 0
      %p300 = por %p298, %p299
      %p301 = scmp.ne.s32.totalorder %s289, %s290
      %p302 = scmp.eq.s32.totalorder %s28, 1
      %p303 = por %p301, %p302
      %p305 = scmp.ne.s32.totalorder %s290, %s304
      %p306 = scmp.eq.s32.totalorder %s28, 0
      %p307 = por %p305, %p306
      %s308 = ssub.s32 %s22, %s29
      %p309 = scmp.eq.s32.totalorder %s308, 0
      %s311 = sadd.s32 %s310, 1
      %s312 = scalar_select %p309, %s310, %s311
      %p315 = pneg %p309
      %p316 = scmp.eq.s32.totalorder %s22, 1
      %p317 = por %p315, %p316
      %p318 = scmp.ne.s32.totalorder %s310, %s313
      %p319 = scmp.eq.s32.totalorder %s22, 0
      %p320 = por %p318, %p319
      %p321 = scmp.ne.s32.totalorder %s310, %s313
      %p322 = scmp.eq.s32.totalorder %s27, 1
      %p323 = por %p321, %p322
      %p324 = scmp.ne.s32.totalorder %s313, %s314
      %p325 = scmp.eq.s32.totalorder %s27, 0
      %p326 = por %p324, %p325
      %p327 = scmp.ne.s32.totalorder %s313, %s314
      %p328 = scmp.eq.s32.totalorder %s28, 1
      %p329 = por %p327, %p328
      %p331 = scmp.ne.s32.totalorder %s314, %s330
      %p332 = scmp.eq.s32.totalorder %s28, 0
      %p333 = por %p331, %p332
      %p334 = scmp.le.s32.totalorder 1, %s22
      %p335 = scmp.lt.s32.totalorder %s22, 3
      %p336 = pnand %p334, %p335
      %p337 = pneg %p336
      // Predicated region
      $region9: #{tpu_custom_call.1} parent=5 // pred_check
        _
      $region10: #{tpu_custom_call.1} parent=5 // pred_check_branch
        %339 = sbr.rel (%p336) target = $region12
      $region11: #{tpu_custom_call.1} parent=5 // pred_region
        %s340 = ssub.s32 %s22, 1
        // Predicated region
        $region13: #{tpu_custom_call.1} parent=11 // pred_check
          %p341 = pneg %p69
        $region14: #{tpu_custom_call.1} parent=11 // pred_check_branch
          %343 = sbr.rel (%p341) target = $region16
        $region15: #{tpu_custom_call.1} parent=11 // pred_region
          _
        $region16: #{tpu_custom_call.1} parent=11 // pred_fallthru
          _
        // Predicated region
        $region17: #{tpu_custom_call.1} parent=11 // pred_check
          %p344 = pneg %p90
        $region18: #{tpu_custom_call.1} parent=11 // pred_check_branch
          %346 = sbr.rel (%p344) target = $region20
        $region19: #{tpu_custom_call.1} parent=11 // pred_region
          _
        $region20: #{tpu_custom_call.1} parent=11 // pred_fallthru
          _
        // Predicated region
        $region21: #{tpu_custom_call.1} parent=11 // pred_check
          %p347 = pneg %p111
        $region22: #{tpu_custom_call.1} parent=11 // pred_check_branch
          %349 = sbr.rel (%p347) target = $region24
        $region23: #{tpu_custom_call.1} parent=11 // pred_region
          _
        $region24: #{tpu_custom_call.1} parent=11 // pred_fallthru
          _
        // Predicated region
        $region25: #{tpu_custom_call.1} parent=11 // pred_check
          %p350 = pneg %p132
        $region26: #{tpu_custom_call.1} parent=11 // pred_check_branch
          %352 = sbr.rel (%p350) target = $region28
        $region27: #{tpu_custom_call.1} parent=11 // pred_region
          _
        $region28: #{tpu_custom_call.1} parent=11 // pred_fallthru
          _
        // Predicated region
        $region29: #{tpu_custom_call.1} parent=11 // pred_check
          %p353 = pneg %p153
        $region30: #{tpu_custom_call.1} parent=11 // pred_check_branch
          %355 = sbr.rel (%p353) target = $region32
        $region31: #{tpu_custom_call.1} parent=11 // pred_region
          _
        $region32: #{tpu_custom_call.1} parent=11 // pred_fallthru
          _
        // Predicated region
        $region33: #{tpu_custom_call.1} parent=11 // pred_check
          %p356 = pneg %p174
        $region34: #{tpu_custom_call.1} parent=11 // pred_check_branch
          %358 = sbr.rel (%p356) target = $region36
        $region35: #{tpu_custom_call.1} parent=11 // pred_region
          _
        $region36: #{tpu_custom_call.1} parent=11 // pred_fallthru
          _
        // Predicated region
        $region37: #{tpu_custom_call.1} parent=11 // pred_check
          %p359 = pneg %p195
        $region38: #{tpu_custom_call.1} parent=11 // pred_check_branch
          %361 = sbr.rel (%p359) target = $region40
        $region39: #{tpu_custom_call.1} parent=11 // pred_region
          _
        $region40: #{tpu_custom_call.1} parent=11 // pred_fallthru
          _
        // Predicated region
        $region41: #{tpu_custom_call.1} parent=11 // pred_check
          %p362 = pneg %p216
        $region42: #{tpu_custom_call.1} parent=11 // pred_check_branch
          %364 = sbr.rel (%p362) target = $region44
        $region43: #{tpu_custom_call.1} parent=11 // pred_region
          _
        $region44: #{tpu_custom_call.1} parent=11 // pred_fallthru
          _
        // Predicated region
        $region45: #{tpu_custom_call.1} parent=11 // pred_check
          %p365 = pneg %p237
        $region46: #{tpu_custom_call.1} parent=11 // pred_check_branch
          %367 = sbr.rel (%p365) target = $region48
        $region47: #{tpu_custom_call.1} parent=11 // pred_region
          _
        $region48: #{tpu_custom_call.1} parent=11 // pred_fallthru
          _
        // Predicated region
        $region49: #{tpu_custom_call.1} parent=11 // pred_check
          %p368 = pneg %p258
        $region50: #{tpu_custom_call.1} parent=11 // pred_check_branch
          %370 = sbr.rel (%p368) target = $region52
        $region51: #{tpu_custom_call.1} parent=11 // pred_region
          _
        $region52: #{tpu_custom_call.1} parent=11 // pred_fallthru
          _
        // Predicated region
        $region53: #{tpu_custom_call.1} parent=11 // pred_check
          %p371 = pneg %p279
        $region54: #{tpu_custom_call.1} parent=11 // pred_check_branch
          %373 = sbr.rel (%p371) target = $region56
        $region55: #{tpu_custom_call.1} parent=11 // pred_region
          _
        $region56: #{tpu_custom_call.1} parent=11 // pred_fallthru
          _
        // Predicated region
        $region57: #{tpu_custom_call.1} parent=11 // pred_check
          %p374 = pneg %p300
        $region58: #{tpu_custom_call.1} parent=11 // pred_check_branch
          %376 = sbr.rel (%p374) target = $region60
        $region59: #{tpu_custom_call.1} parent=11 // pred_region
          _
        $region60: #{tpu_custom_call.1} parent=11 // pred_fallthru
          _
      $region12: #{tpu_custom_call.1} parent=5 // pred_fallthru
        _
      %p377 = scmp.lt.s32.totalorder %s22, 2
      // Predicated region
      $region61: #{tpu_custom_call.1} parent=5 // pred_check
        %p378 = pneg %p377
      $region62: #{tpu_custom_call.1} parent=5 // pred_check_branch
        %380 = sbr.rel (%p378) target = $region64
      $region63: #{tpu_custom_call.1} parent=5 // pred_region
        // Predicated region
        $region65: #{tpu_custom_call.1} parent=63 // pred_check
          %p381 = pneg %p42
        $region66: #{tpu_custom_call.1} parent=63 // pred_check_branch
          %383 = sbr.rel (%p381) target = $region68
        $region67: #{tpu_custom_call.1} parent=63 // pred_region
          %p384 = scmp.lt.s32.totalorder %s22, 1
          %s385 = scalar_select %p384, %s22, 1
          %s386 = smul.addr %s385, 8
          %s387 = scalar_lea.vmem %s0, %s386
        $region68: #{tpu_custom_call.1} parent=63 // pred_fallthru
          _
      $region64: #{tpu_custom_call.1} parent=5 // pred_fallthru
        _
      %p388 = scmp.le.s32.totalorder 1, %s22
      %p389 = scmp.lt.s32.totalorder %s22, 3
      %p390 = pnand %p388, %p389
      %p391 = pneg %p390
      // Predicated region
      $region69: #{tpu_custom_call.1} parent=5 // pred_check
        _
      $region70: #{tpu_custom_call.1} parent=5 // pred_check_branch
        %393 = sbr.rel (%p390) target = $region72
      $region71: #{tpu_custom_call.1} parent=5 // pred_region
        %s394 = ssub.s32 %s22, 1
        %p395 = scmp.lt.s32.totalorder %s27, 1
        %s396 = scalar_select %p395, %s27, 1
        %s397 = smul.addr %s396, 8
        %s398 = scalar_lea.vmem %s0, %s397
        %p399 = pneg %p48
        %p400 = pneg %p45
        %p401 = pneg %p69
        %p402 = pneg %p66
        %p403 = pneg %p90
        %p404 = pneg %p87
        %p405 = pneg %p111
        %p406 = pneg %p108
        %p407 = pneg %p132
        %p408 = pneg %p129
        %p409 = pneg %p153
        %p410 = pneg %p150
        %p411 = pneg %p174
        %p412 = pneg %p171
        %p413 = pneg %p195
        %p414 = pneg %p192
        %p415 = pneg %p216
        %p416 = pneg %p213
        %p417 = pneg %p237
        %p418 = pneg %p234
        %p419 = pneg %p258
        %p420 = pneg %p255
        %p421 = pneg %p279
        %p422 = pneg %p276
        %p423 = pneg %p300
        %p424 = pneg %p297
        %p425 = pneg %p326
        %p426 = pneg %p323
        %s427 = sand.u32 %s313, 1
        %s428 = scalar_lea.sflag [#allocation3], %s427
        %s429 = sand.u32 %s313, 1
        %s430 = smul.addr %s429, 8
        %s431 = scalar_lea.vmem [#allocation2], %s430
        %p432 = scmp.lt.s32.totalorder %s27, 1
        %s433 = scalar_select %p432, %s27, 1
        %s434 = smul.addr %s433, 8
        %s435 = scalar_lea.vmem %s0, %s434
        %v437 = vld [vmem:[%s435] sm:$0xff]
        %v438 = vld [vmem:[%s5] sm:$0x1]
        %v439 = vld [vmem:[%s6] sm:$0x1]
        %vm440 = vcmask 261120
        %v441 = vsel %vm440, %v437, 0.0
        %442 = vadd.xlane.f32.xlu0 %v441
        %v443 = vpop.xlane.xlu0 %442
        %v444 = vrcp.pop 32.0
        %v445 = vmul.f32 %v443, %v444
        %v446 = vsub.f32 %v437, %v445
        %v447 = vmul.f32 %v446, %v446
        %v448 = vsel %vm440, %v447, 0.0
        %449 = vadd.xlane.f32.xlu0 %v448
        %v450 = vpop.xlane.xlu0 %449
        %v451 = vmul.f32 %v450, %v444
        %v452 = vadd.f32 %v451, 1e-05
        %v453 = vrsqrt.pop %v452
        %v454 = vmul.f32 %v446, %v453
        %v456 = vlaneseq
        %v457 = vshrl.u32 %v456, 7
        %v458 = vsub.s32 0, %v457
        %v459 = vrot.slane %v438, %v458
        %v461 = vmul.f32 %v454, %v459
        %v463 = vlaneseq
        %v464 = vshrl.u32 %v463, 7
        %v465 = vsub.s32 0, %v464
        %v466 = vrot.slane %v439, %v465
        %v468 = vadd.f32 %v461, %v466
        %v469 = vpack.c.bf16 %v468, %v468
        %v470 = vld [vmem:[%s1] sm:$0xf]
        %v471 = vld [vmem:[%s1 + $0x4] sm:$0xf]
        %v472 = vld [vmem:[%s1 + $0x8] sm:$0xf]
        %v473 = vld [vmem:[%s1 + $0xc] sm:$0xf]
        %v474 = vld [vmem:[%s2] sm:$0x1]
        %v476 = vlaneseq
        %v477 = vshrl.u32 %v476, 7
        %v478 = vsub.s32 0, %v477
        %v479 = vrot.slane %v474, %v478
        %v485 = vunpack.c.l.b16 %v470
        %v486 = vunpack.c.l.b16 %v471
        %v487 = vunpack.c.l.b16 %v472
        %v488 = vunpack.c.l.b16 %v473
        %v489 = vpack.c.b16 %v486, %v485
        %v490 = vpack.c.b16 %v488, %v487
        %v494 = vsel %vm440, %v469, 0
        %496 = vmatprep.subr.bf16.mxu0 0
        %497 = vmatpush1.bf16.msra.mxu0 0
        %498 = vmatprep.subr.bf16.mxu0 0
        %499 = vmatpush1.bf16.msra.mxu0 0
        %500 = vmatprep.subr.bf16.mxu0 0
        %501 = vmatpush1.bf16.msra.mxu0 0
        %502 = vmatprep.subr.bf16.mxu0 0
        %503 = vmatpush1.bf16.msra.mxu0 0
        %504 = vmatprep.subr.bf16.mxu0 0
        %505 = vmatpush1.bf16.msra.mxu0 0
        %506 = vmatprep.subr.bf16.mxu0 0
        %507 = vmatpush1.bf16.msra.mxu0 0
        %508 = vmatprep.subr.bf16.mxu0 0
        %509 = vmatpush1.bf16.msra.mxu0 %v490
        %510 = vmatprep.subr.bf16.mxu0 0
        %511 = vmatpush1.bf16.msra.mxu0 %v489
        %512 = vmatprep.subr.bf16.mxu0 0
        %513 = vmatpush2.bf16.msra.mxu0 0
        %514 = vmatprep.subr.bf16.mxu0 0
        %515 = vmatpush2.bf16.msra.mxu0 0
        %516 = vmatprep.subr.bf16.mxu0 0
        %517 = vmatpush2.bf16.msra.mxu0 0
        %518 = vmatprep.subr.bf16.mxu0 0
        %519 = vmatpush2.bf16.msra.mxu0 0
        %520 = vmatprep.subr.bf16.mxu0 0
        %521 = vmatpush2.bf16.msra.mxu0 0
        %522 = vmatprep.subr.bf16.mxu0 0
        %523 = vmatpush2.bf16.msra.mxu0 0
        %524 = vmatprep.subr.bf16.mxu0 0
        %525 = vmatpush2.bf16.msra.mxu0 0
        %526 = vmatprep.subr.bf16.mxu0 0
        %527 = vmatpush2.bf16.msra.mxu0 0
        %528 = vmatprep.mubr.bf16.mxu0 0
        %529 = vmatmul.mubr.bf16.gmra.mxu0 %v494
        %v530 = vpop.f32.mrf.mxu0
        %v531 = vadd.f32 %v479, %v530
        %v532 = vpop.f32.mrf.mxu0
        %v533 = vpop.f32.mrf.mxu0
        %v534 = vpop.f32.mrf.mxu0
        %535 = vdwg.mxu0
        %v536 = vpack.c.bf16 %v531, %v531
        %538 = vrot.lane.b32.xlu0 %v536, 96
        %v539 = vpop.permute.xlu0 %538
        %vm540 = vcmask 64512
        %v542 = vsel %vm540, %v536, 0
        %v545 = vsel %vm540, %v539, 0
        %547 = vmatprep.subr.bf16.mxu0 0
        %548 = vmatpush1.bf16.xpose.msra.mxu0 0
        %549 = vmatprep.subr.bf16.mxu0 0
        %550 = vmatpush1.bf16.xpose.msra.mxu0 0
        %551 = vmatprep.subr.bf16.mxu0 0
        %552 = vmatpush1.bf16.xpose.msra.mxu0 0
        %553 = vmatprep.subr.bf16.mxu0 0
        %554 = vmatpush1.bf16.xpose.msra.mxu0 0
        %555 = vmatprep.subr.bf16.mxu0 0
        %556 = vmatpush1.bf16.xpose.msra.mxu0 0
        %557 = vmatprep.subr.bf16.mxu0 0
        %558 = vmatpush1.bf16.xpose.msra.mxu0 0
        %559 = vmatprep.subr.bf16.mxu0 0
        %560 = vmatpush1.bf16.xpose.msra.mxu0 0
        %561 = vmatprep.subr.bf16.mxu0 0
        %562 = vmatpush1.bf16.xpose.msra.mxu0 %v545
        %563 = vmatprep.subr.bf16.mxu0 0
        %564 = vmatpush2.bf16.xpose.msra.mxu0 0
        %565 = vmatprep.subr.bf16.mxu0 0
        %566 = vmatpush2.bf16.xpose.msra.mxu0 0
        %567 = vmatprep.subr.bf16.mxu0 0
        %568 = vmatpush2.bf16.xpose.msra.mxu0 0
        %569 = vmatprep.subr.bf16.mxu0 0
        %570 = vmatpush2.bf16.xpose.msra.mxu0 0
        %571 = vmatprep.subr.bf16.mxu0 0
        %572 = vmatpush2.bf16.xpose.msra.mxu0 0
        %573 = vmatprep.subr.bf16.mxu0 0
        %574 = vmatpush2.bf16.xpose.msra.mxu0 0
        %575 = vmatprep.subr.bf16.mxu0 0
        %576 = vmatpush2.bf16.xpose.msra.mxu0 0
        %577 = vmatprep.subr.bf16.mxu0 0
        %578 = vmatpush2.bf16.xpose.msra.mxu0 0
        %579 = vmatprep.mubr.bf16.mxu0 0
        %580 = vmatmul.mubr.bf16.gmra.mxu0 %v542
        %v581 = vpop.f32.mrf.mxu0
        %v582 = vadd.f32 0.0, %v581
        %v583 = vpop.f32.mrf.mxu0
        %v584 = vpop.f32.mrf.mxu0
        %v585 = vpop.f32.mrf.mxu0
        %586 = vdwg.mxu0
        %v587 = vsel %vm540, %v582, -inf
        %588 = vmax.xlane.f32.xlu0 %v587
        %v589 = vpop.xlane.xlu0 %588
        %v590 = vsub.f32 %v582, %v589
        %v591 = vmul.f32 %v590, 1.442695
        %v592 = vpow.pop %v591
        %v593 = vsel %vm540, %v592, 0.0
        %594 = vadd.xlane.f32.xlu0 %v593
        %v595 = vpop.xlane.xlu0 %594
        %v596 = vrcp.pop %v595
        %v597 = vmul.f32 %v592, %v596
        %v598 = vpack.c.bf16 %v597, %v597
        %599 = vrot.lane.b32.xlu0 %v536, 64
        %v600 = vpop.permute.xlu0 %599
        %v602 = vsel %vm540, %v598, 0
        %vm604 = vcmask 1043456
        %v606 = vsel %vm604, %v600, 0
        %608 = vmatprep.subr.bf16.mxu0 0
        %609 = vmatpush1.bf16.msra.mxu0 0
        %610 = vmatprep.subr.bf16.mxu0 0
        %611 = vmatpush1.bf16.msra.mxu0 0
        %612 = vmatprep.subr.bf16.mxu0 0
        %613 = vmatpush1.bf16.msra.mxu0 0
        %614 = vmatprep.subr.bf16.mxu0 0
        %615 = vmatpush1.bf16.msra.mxu0 0
        %616 = vmatprep.subr.bf16.mxu0 0
        %617 = vmatpush1.bf16.msra.mxu0 0
        %618 = vmatprep.subr.bf16.mxu0 0
        %619 = vmatpush1.bf16.msra.mxu0 0
        %620 = vmatprep.subr.bf16.mxu0 0
        %621 = vmatpush1.bf16.msra.mxu0 0
        %622 = vmatprep.subr.bf16.mxu0 0
        %623 = vmatpush1.bf16.msra.mxu0 %v606
        %624 = vmatprep.subr.bf16.mxu0 0
        %625 = vmatpush2.bf16.msra.mxu0 0
        %626 = vmatprep.subr.bf16.mxu0 0
        %627 = vmatpush2.bf16.msra.mxu0 0
        %628 = vmatprep.subr.bf16.mxu0 0
        %629 = vmatpush2.bf16.msra.mxu0 0
        %630 = vmatprep.subr.bf16.mxu0 0
        %631 = vmatpush2.bf16.msra.mxu0 0
        %632 = vmatprep.subr.bf16.mxu0 0
        %633 = vmatpush2.bf16.msra.mxu0 0
        %634 = vmatprep.subr.bf16.mxu0 0
        %635 = vmatpush2.bf16.msra.mxu0 0
        %636 = vmatprep.subr.bf16.mxu0 0
        %637 = vmatpush2.bf16.msra.mxu0 0
        %638 = vmatprep.subr.bf16.mxu0 0
        %639 = vmatpush2.bf16.msra.mxu0 0
        %640 = vmatprep.mubr.bf16.mxu0 0
        %641 = vmatmul.mubr.bf16.gmra.mxu0 %v602
        %v642 = vpop.f32.mrf.mxu0
        %v643 = vadd.f32 0.0, %v642
        %v644 = vpop.f32.mrf.mxu0
        %v645 = vpop.f32.mrf.mxu0
        %v646 = vpop.f32.mrf.mxu0
        %647 = vdwg.mxu0
        %v648 = vpack.c.bf16 %v643, %v643
        %649 = vrot.lane.b32.xlu0 %v536, 120
        %v650 = vpop.permute.xlu0 %649
        %651 = vrot.lane.b32.xlu0 %v536, 88
        %v652 = vpop.permute.xlu0 %651
        %v654 = vsel %vm540, %v650, 0
        %v657 = vsel %vm540, %v652, 0
        %659 = vmatprep.subr.bf16.mxu0 0
        %660 = vmatpush1.bf16.xpose.msra.mxu0 0
        %661 = vmatprep.subr.bf16.mxu0 0
        %662 = vmatpush1.bf16.xpose.msra.mxu0 0
        %663 = vmatprep.subr.bf16.mxu0 0
        %664 = vmatpush1.bf16.xpose.msra.mxu0 0
        %665 = vmatprep.subr.bf16.mxu0 0
        %666 = vmatpush1.bf16.xpose.msra.mxu0 0
        %667 = vmatprep.subr.bf16.mxu0 0
        %668 = vmatpush1.bf16.xpose.msra.mxu0 0
        %669 = vmatprep.subr.bf16.mxu0 0
        %670 = vmatpush1.bf16.xpose.msra.mxu0 0
        %671 = vmatprep.subr.bf16.mxu0 0
        %672 = vmatpush1.bf16.xpose.msra.mxu0 0
        %673 = vmatprep.subr.bf16.mxu0 0
        %674 = vmatpush1.bf16.xpose.msra.mxu0 %v657
        %675 = vmatprep.subr.bf16.mxu0 0
        %676 = vmatpush2.bf16.xpose.msra.mxu0 0
        %677 = vmatprep.subr.bf16.mxu0 0
        %678 = vmatpush2.bf16.xpose.msra.mxu0 0
        %679 = vmatprep.subr.bf16.mxu0 0
        %680 = vmatpush2.bf16.xpose.msra.mxu0 0
        %681 = vmatprep.subr.bf16.mxu0 0
        %682 = vmatpush2.bf16.xpose.msra.mxu0 0
        %683 = vmatprep.subr.bf16.mxu0 0
        %684 = vmatpush2.bf16.xpose.msra.mxu0 0
        %685 = vmatprep.subr.bf16.mxu0 0
        %686 = vmatpush2.bf16.xpose.msra.mxu0 0
        %687 = vmatprep.subr.bf16.mxu0 0
        %688 = vmatpush2.bf16.xpose.msra.mxu0 0
        %689 = vmatprep.subr.bf16.mxu0 0
        %690 = vmatpush2.bf16.xpose.msra.mxu0 0
        %691 = vmatprep.mubr.bf16.mxu0 0
        %692 = vmatmul.mubr.bf16.gmra.mxu0 %v654
        %v693 = vpop.f32.mrf.mxu0
        %v694 = vadd.f32 0.0, %v693
        %v695 = vpop.f32.mrf.mxu0
        %v696 = vpop.f32.mrf.mxu0
        %v697 = vpop.f32.mrf.mxu0
        %698 = vdwg.mxu0
        %v699 = vsel %vm540, %v694, -inf
        %700 = vmax.xlane.f32.xlu0 %v699
        %v701 = vpop.xlane.xlu0 %700
        %v702 = vsub.f32 %v694, %v701
        %v703 = vmul.f32 %v702, 1.442695
        %v704 = vpow.pop %v703
        %v705 = vsel %vm540, %v704, 0.0
        %706 = vadd.xlane.f32.xlu0 %v705
        %v707 = vpop.xlane.xlu0 %706
        %v708 = vrcp.pop %v707
        %v709 = vmul.f32 %v704, %v708
        %v710 = vpack.c.bf16 %v709, %v709
        %711 = vrot.lane.b32.xlu0 %v536, 56
        %v712 = vpop.permute.xlu0 %711
        %v714 = vsel %vm540, %v710, 0
        %v717 = vsel %vm604, %v712, 0
        %719 = vmatprep.subr.bf16.mxu0 0
        %720 = vmatpush1.bf16.msra.mxu0 0
        %721 = vmatprep.subr.bf16.mxu0 0
        %722 = vmatpush1.bf16.msra.mxu0 0
        %723 = vmatprep.subr.bf16.mxu0 0
        %724 = vmatpush1.bf16.msra.mxu0 0
        %725 = vmatprep.subr.bf16.mxu0 0
        %726 = vmatpush1.bf16.msra.mxu0 0
        %727 = vmatprep.subr.bf16.mxu0 0
        %728 = vmatpush1.bf16.msra.mxu0 0
        %729 = vmatprep.subr.bf16.mxu0 0
        %730 = vmatpush1.bf16.msra.mxu0 0
        %731 = vmatprep.subr.bf16.mxu0 0
        %732 = vmatpush1.bf16.msra.mxu0 0
        %733 = vmatprep.subr.bf16.mxu0 0
        %734 = vmatpush1.bf16.msra.mxu0 %v717
        %735 = vmatprep.subr.bf16.mxu0 0
        %736 = vmatpush2.bf16.msra.mxu0 0
        %737 = vmatprep.subr.bf16.mxu0 0
        %738 = vmatpush2.bf16.msra.mxu0 0
        %739 = vmatprep.subr.bf16.mxu0 0
        %740 = vmatpush2.bf16.msra.mxu0 0
        %741 = vmatprep.subr.bf16.mxu0 0
        %742 = vmatpush2.bf16.msra.mxu0 0
        %743 = vmatprep.subr.bf16.mxu0 0
        %744 = vmatpush2.bf16.msra.mxu0 0
        %745 = vmatprep.subr.bf16.mxu0 0
        %746 = vmatpush2.bf16.msra.mxu0 0
        %747 = vmatprep.subr.bf16.mxu0 0
        %748 = vmatpush2.bf16.msra.mxu0 0
        %749 = vmatprep.subr.bf16.mxu0 0
        %750 = vmatpush2.bf16.msra.mxu0 0
        %751 = vmatprep.mubr.bf16.mxu0 0
        %752 = vmatmul.mubr.bf16.gmra.mxu0 %v714
        %v753 = vpop.f32.mrf.mxu0
        %v754 = vadd.f32 0.0, %v753
        %v755 = vpop.f32.mrf.mxu0
        %v756 = vpop.f32.mrf.mxu0
        %v757 = vpop.f32.mrf.mxu0
        %758 = vdwg.mxu0
        %v759 = vpack.c.bf16 %v754, %v754
        %760 = vrot.lane.b32.xlu0 %v536, 112
        %v761 = vpop.permute.xlu0 %760
        %762 = vrot.lane.b32.xlu0 %v536, 80
        %v763 = vpop.permute.xlu0 %762
        %v765 = vsel %vm540, %v761, 0
        %v768 = vsel %vm540, %v763, 0
        %770 = vmatprep.subr.bf16.mxu0 0
        %771 = vmatpush1.bf16.xpose.msra.mxu0 0
        %772 = vmatprep.subr.bf16.mxu0 0
        %773 = vmatpush1.bf16.xpose.msra.mxu0 0
        %774 = vmatprep.subr.bf16.mxu0 0
        %775 = vmatpush1.bf16.xpose.msra.mxu0 0
        %776 = vmatprep.subr.bf16.mxu0 0
        %777 = vmatpush1.bf16.xpose.msra.mxu0 0
        %778 = vmatprep.subr.bf16.mxu0 0
        %779 = vmatpush1.bf16.xpose.msra.mxu0 0
        %780 = vmatprep.subr.bf16.mxu0 0
        %781 = vmatpush1.bf16.xpose.msra.mxu0 0
        %782 = vmatprep.subr.bf16.mxu0 0
        %783 = vmatpush1.bf16.xpose.msra.mxu0 0
        %784 = vmatprep.subr.bf16.mxu0 0
        %785 = vmatpush1.bf16.xpose.msra.mxu0 %v768
        %786 = vmatprep.subr.bf16.mxu0 0
        %787 = vmatpush2.bf16.xpose.msra.mxu0 0
        %788 = vmatprep.subr.bf16.mxu0 0
        %789 = vmatpush2.bf16.xpose.msra.mxu0 0
        %790 = vmatprep.subr.bf16.mxu0 0
        %791 = vmatpush2.bf16.xpose.msra.mxu0 0
        %792 = vmatprep.subr.bf16.mxu0 0
        %793 = vmatpush2.bf16.xpose.msra.mxu0 0
        %794 = vmatprep.subr.bf16.mxu0 0
        %795 = vmatpush2.bf16.xpose.msra.mxu0 0
        %796 = vmatprep.subr.bf16.mxu0 0
        %797 = vmatpush2.bf16.xpose.msra.mxu0 0
        %798 = vmatprep.subr.bf16.mxu0 0
        %799 = vmatpush2.bf16.xpose.msra.mxu0 0
        %800 = vmatprep.subr.bf16.mxu0 0
        %801 = vmatpush2.bf16.xpose.msra.mxu0 0
        %802 = vmatprep.mubr.bf16.mxu0 0
        %803 = vmatmul.mubr.bf16.gmra.mxu0 %v765
        %v804 = vpop.f32.mrf.mxu0
        %v805 = vadd.f32 0.0, %v804
        %v806 = vpop.f32.mrf.mxu0
        %v807 = vpop.f32.mrf.mxu0
        %v808 = vpop.f32.mrf.mxu0
        %809 = vdwg.mxu0
        %v810 = vsel %vm540, %v805, -inf
        %811 = vmax.xlane.f32.xlu0 %v810
        %v812 = vpop.xlane.xlu0 %811
        %v813 = vsub.f32 %v805, %v812
        %v814 = vmul.f32 %v813, 1.442695
        %v815 = vpow.pop %v814
        %v816 = vsel %vm540, %v815, 0.0
        %817 = vadd.xlane.f32.xlu0 %v816
        %v818 = vpop.xlane.xlu0 %817
        %v819 = vrcp.pop %v818
        %v820 = vmul.f32 %v815, %v819
        %v821 = vpack.c.bf16 %v820, %v820
        %822 = vrot.lane.b32.xlu0 %v536, 48
        %v823 = vpop.permute.xlu0 %822
        %v825 = vsel %vm540, %v821, 0
        %v828 = vsel %vm604, %v823, 0
        %830 = vmatprep.subr.bf16.mxu0 0
        %831 = vmatpush1.bf16.msra.mxu0 0
        %832 = vmatprep.subr.bf16.mxu0 0
        %833 = vmatpush1.bf16.msra.mxu0 0
        %834 = vmatprep.subr.bf16.mxu0 0
        %835 = vmatpush1.bf16.msra.mxu0 0
        %836 = vmatprep.subr.bf16.mxu0 0
        %837 = vmatpush1.bf16.msra.mxu0 0
        %838 = vmatprep.subr.bf16.mxu0 0
        %839 = vmatpush1.bf16.msra.mxu0 0
        %840 = vmatprep.subr.bf16.mxu0 0
        %841 = vmatpush1.bf16.msra.mxu0 0
        %842 = vmatprep.subr.bf16.mxu0 0
        %843 = vmatpush1.bf16.msra.mxu0 0
        %844 = vmatprep.subr.bf16.mxu0 0
        %845 = vmatpush1.bf16.msra.mxu0 %v828
        %846 = vmatprep.subr.bf16.mxu0 0
        %847 = vmatpush2.bf16.msra.mxu0 0
        %848 = vmatprep.subr.bf16.mxu0 0
        %849 = vmatpush2.bf16.msra.mxu0 0
        %850 = vmatprep.subr.bf16.mxu0 0
        %851 = vmatpush2.bf16.msra.mxu0 0
        %852 = vmatprep.subr.bf16.mxu0 0
        %853 = vmatpush2.bf16.msra.mxu0 0
        %854 = vmatprep.subr.bf16.mxu0 0
        %855 = vmatpush2.bf16.msra.mxu0 0
        %856 = vmatprep.subr.bf16.mxu0 0
        %857 = vmatpush2.bf16.msra.mxu0 0
        %858 = vmatprep.subr.bf16.mxu0 0
        %859 = vmatpush2.bf16.msra.mxu0 0
        %860 = vmatprep.subr.bf16.mxu0 0
        %861 = vmatpush2.bf16.msra.mxu0 0
        %862 = vmatprep.mubr.bf16.mxu0 0
        %863 = vmatmul.mubr.bf16.gmra.mxu0 %v825
        %v864 = vpop.f32.mrf.mxu0
        %v865 = vadd.f32 0.0, %v864
        %v866 = vpop.f32.mrf.mxu0
        %v867 = vpop.f32.mrf.mxu0
        %v868 = vpop.f32.mrf.mxu0
        %869 = vdwg.mxu0
        %v870 = vpack.c.bf16 %v865, %v865
        %871 = vrot.lane.b32.xlu0 %v536, 104
        %v872 = vpop.permute.xlu0 %871
        %873 = vrot.lane.b32.xlu0 %v536, 72
        %v874 = vpop.permute.xlu0 %873
        %v876 = vsel %vm540, %v872, 0
        %v879 = vsel %vm540, %v874, 0
        %881 = vmatprep.subr.bf16.mxu0 0
        %882 = vmatpush1.bf16.xpose.msra.mxu0 0
        %883 = vmatprep.subr.bf16.mxu0 0
        %884 = vmatpush1.bf16.xpose.msra.mxu0 0
        %885 = vmatprep.subr.bf16.mxu0 0
        %886 = vmatpush1.bf16.xpose.msra.mxu0 0
        %887 = vmatprep.subr.bf16.mxu0 0
        %888 = vmatpush1.bf16.xpose.msra.mxu0 0
        %889 = vmatprep.subr.bf16.mxu0 0
        %890 = vmatpush1.bf16.xpose.msra.mxu0 0
        %891 = vmatprep.subr.bf16.mxu0 0
        %892 = vmatpush1.bf16.xpose.msra.mxu0 0
        %893 = vmatprep.subr.bf16.mxu0 0
        %894 = vmatpush1.bf16.xpose.msra.mxu0 0
        %895 = vmatprep.subr.bf16.mxu0 0
        %896 = vmatpush1.bf16.xpose.msra.mxu0 %v879
        %897 = vmatprep.subr.bf16.mxu0 0
        %898 = vmatpush2.bf16.xpose.msra.mxu0 0
        %899 = vmatprep.subr.bf16.mxu0 0
        %900 = vmatpush2.bf16.xpose.msra.mxu0 0
        %901 = vmatprep.subr.bf16.mxu0 0
        %902 = vmatpush2.bf16.xpose.msra.mxu0 0
        %903 = vmatprep.subr.bf16.mxu0 0
        %904 = vmatpush2.bf16.xpose.msra.mxu0 0
        %905 = vmatprep.subr.bf16.mxu0 0
        %906 = vmatpush2.bf16.xpose.msra.mxu0 0
        %907 = vmatprep.subr.bf16.mxu0 0
        %908 = vmatpush2.bf16.xpose.msra.mxu0 0
        %909 = vmatprep.subr.bf16.mxu0 0
        %910 = vmatpush2.bf16.xpose.msra.mxu0 0
        %911 = vmatprep.subr.bf16.mxu0 0
        %912 = vmatpush2.bf16.xpose.msra.mxu0 0
        %913 = vmatprep.mubr.bf16.mxu0 0
        %914 = vmatmul.mubr.bf16.gmra.mxu0 %v876
        %v915 = vpop.f32.mrf.mxu0
        %v916 = vadd.f32 0.0, %v915
        %v917 = vpop.f32.mrf.mxu0
        %v918 = vpop.f32.mrf.mxu0
        %v919 = vpop.f32.mrf.mxu0
        %920 = vdwg.mxu0
        %v921 = vsel %vm540, %v916, -inf
        %922 = vmax.xlane.f32.xlu0 %v921
        %v923 = vpop.xlane.xlu0 %922
        %v924 = vsub.f32 %v916, %v923
        %v925 = vmul.f32 %v924, 1.442695
        %v926 = vpow.pop %v925
        %v927 = vsel %vm540, %v926, 0.0
        %928 = vadd.xlane.f32.xlu0 %v927
        %v929 = vpop.xlane.xlu0 %928
        %v930 = vrcp.pop %v929
        %v931 = vmul.f32 %v926, %v930
        %v932 = vpack.c.bf16 %v931, %v931
        %933 = vrot.lane.b32.xlu0 %v536, 40
        %v934 = vpop.permute.xlu0 %933
        %v936 = vsel %vm540, %v932, 0
        %v939 = vsel %vm604, %v934, 0
        %941 = vmatprep.subr.bf16.mxu0 0
        %942 = vmatpush1.bf16.msra.mxu0 0
        %943 = vmatprep.subr.bf16.mxu0 0
        %944 = vmatpush1.bf16.msra.mxu0 0
        %945 = vmatprep.subr.bf16.mxu0 0
        %946 = vmatpush1.bf16.msra.mxu0 0
        %947 = vmatprep.subr.bf16.mxu0 0
        %948 = vmatpush1.bf16.msra.mxu0 0
        %949 = vmatprep.subr.bf16.mxu0 0
        %950 = vmatpush1.bf16.msra.mxu0 0
        %951 = vmatprep.subr.bf16.mxu0 0
        %952 = vmatpush1.bf16.msra.mxu0 0
        %953 = vmatprep.subr.bf16.mxu0 0
        %954 = vmatpush1.bf16.msra.mxu0 0
        %955 = vmatprep.subr.bf16.mxu0 0
        %956 = vmatpush1.bf16.msra.mxu0 %v939
        %957 = vmatprep.subr.bf16.mxu0 0
        %958 = vmatpush2.bf16.msra.mxu0 0
        %959 = vmatprep.subr.bf16.mxu0 0
        %960 = vmatpush2.bf16.msra.mxu0 0
        %961 = vmatprep.subr.bf16.mxu0 0
        %962 = vmatpush2.bf16.msra.mxu0 0
        %963 = vmatprep.subr.bf16.mxu0 0
        %964 = vmatpush2.bf16.msra.mxu0 0
        %965 = vmatprep.subr.bf16.mxu0 0
        %966 = vmatpush2.bf16.msra.mxu0 0
        %967 = vmatprep.subr.bf16.mxu0 0
        %968 = vmatpush2.bf16.msra.mxu0 0
        %969 = vmatprep.subr.bf16.mxu0 0
        %970 = vmatpush2.bf16.msra.mxu0 0
        %971 = vmatprep.subr.bf16.mxu0 0
        %972 = vmatpush2.bf16.msra.mxu0 0
        %973 = vmatprep.mubr.bf16.mxu0 0
        %974 = vmatmul.mubr.bf16.gmra.mxu0 %v936
        %v975 = vpop.f32.mrf.mxu0
        %v976 = vadd.f32 0.0, %v975
        %v977 = vpop.f32.mrf.mxu0
        %v978 = vpop.f32.mrf.mxu0
        %v979 = vpop.f32.mrf.mxu0
        %980 = vdwg.mxu0
        %v981 = vpack.c.bf16 %v976, %v976
        %983 = vrot.lane.b32.xlu0 %v759, 8
        %v984 = vpop.permute.xlu0 %983
        %986 = vrot.lane.b32.xlu0 %v870, 16
        %v987 = vpop.permute.xlu0 %986
        %989 = vrot.lane.b32.xlu0 %v981, 24
        %v990 = vpop.permute.xlu0 %989
        %v993 = vsel %vm540, %v648, %v984
        %vm994 = vcmask 130048
        %v996 = vsel %vm994, %v993, %v987
        %vm997 = vcmask 195584
        %v999 = vsel %vm997, %v996, %v990
        %v1000 = vld [vmem:[%s3] sm:$0xf]
        %v1001 = vld [vmem:[%s3 + $0x4] sm:$0xf]
        %v1002 = vld [vmem:[%s3 + $0x8] sm:$0xf]
        %v1003 = vld [vmem:[%s3 + $0xc] sm:$0xf]
        %v1004 = vld [vmem:[%s4] sm:$0x1]
        %v1006 = vlaneseq
        %v1007 = vshrl.u32 %v1006, 7
        %v1008 = vsub.s32 0, %v1007
        %v1009 = vrot.slane %v1004, %v1008
        %v1015 = vunpack.c.l.b16 %v1000
        %v1016 = vunpack.c.l.b16 %v1001
        %v1017 = vunpack.c.l.b16 %v1002
        %v1018 = vunpack.c.l.b16 %v1003
        %v1019 = vpack.c.b16 %v1016, %v1015
        %v1020 = vpack.c.b16 %v1018, %v1017
        %v1023 = vsel %vm440, %v999, 0
        %1025 = vmatprep.subr.bf16.mxu0 0
        %1026 = vmatpush1.bf16.msra.mxu0 0
        %1027 = vmatprep.subr.bf16.mxu0 0
        %1028 = vmatpush1.bf16.msra.mxu0 0
        %1029 = vmatprep.subr.bf16.mxu0 0
        %1030 = vmatpush1.bf16.msra.mxu0 0
        %1031 = vmatprep.subr.bf16.mxu0 0
        %1032 = vmatpush1.bf16.msra.mxu0 0
        %1033 = vmatprep.subr.bf16.mxu0 0
        %1034 = vmatpush1.bf16.msra.mxu0 0
        %1035 = vmatprep.subr.bf16.mxu0 0
        %1036 = vmatpush1.bf16.msra.mxu0 0
        %1037 = vmatprep.subr.bf16.mxu0 0
        %1038 = vmatpush1.bf16.msra.mxu0 %v1020
        %1039 = vmatprep.subr.bf16.mxu0 0
        %1040 = vmatpush1.bf16.msra.mxu0 %v1019
        %1041 = vmatprep.subr.bf16.mxu0 0
        %1042 = vmatpush2.bf16.msra.mxu0 0
        %1043 = vmatprep.subr.bf16.mxu0 0
        %1044 = vmatpush2.bf16.msra.mxu0 0
        %1045 = vmatprep.subr.bf16.mxu0 0
        %1046 = vmatpush2.bf16.msra.mxu0 0
        %1047 = vmatprep.subr.bf16.mxu0 0
        %1048 = vmatpush2.bf16.msra.mxu0 0
        %1049 = vmatprep.subr.bf16.mxu0 0
        %1050 = vmatpush2.bf16.msra.mxu0 0
        %1051 = vmatprep.subr.bf16.mxu0 0
        %1052 = vmatpush2.bf16.msra.mxu0 0
        %1053 = vmatprep.subr.bf16.mxu0 0
        %1054 = vmatpush2.bf16.msra.mxu0 0
        %1055 = vmatprep.subr.bf16.mxu0 0
        %1056 = vmatpush2.bf16.msra.mxu0 0
        %1057 = vmatprep.mubr.bf16.mxu0 0
        %1058 = vmatmul.mubr.bf16.gmra.mxu0 %v1023
        %v1059 = vpop.f32.mrf.mxu0
        %v1060 = vadd.f32 %v1009, %v1059
        %v1061 = vpop.f32.mrf.mxu0
        %v1062 = vpop.f32.mrf.mxu0
        %v1063 = vpop.f32.mrf.mxu0
        %1064 = vdwg.mxu0
        %v1065 = vadd.f32 %v437, %v1060
        %v1066 = vld [vmem:[%s11] sm:$0x1]
        %v1067 = vld [vmem:[%s12] sm:$0x1]
        %v1068 = vsel %vm440, %v1065, 0.0
        %1069 = vadd.xlane.f32.xlu0 %v1068
        %v1070 = vpop.xlane.xlu0 %1069
        %v1071 = vmul.f32 %v1070, %v444
        %v1072 = vsub.f32 %v1065, %v1071
        %v1073 = vmul.f32 %v1072, %v1072
        %v1074 = vsel %vm440, %v1073, 0.0
        %1075 = vadd.xlane.f32.xlu0 %v1074
        %v1076 = vpop.xlane.xlu0 %1075
        %v1077 = vmul.f32 %v1076, %v444
        %v1078 = vadd.f32 %v1077, 1e-05
        %v1079 = vrsqrt.pop %v1078
        %v1080 = vmul.f32 %v1072, %v1079
        %v1082 = vlaneseq
        %v1083 = vshrl.u32 %v1082, 7
        %v1084 = vsub.s32 0, %v1083
        %v1085 = vrot.slane %v1066, %v1084
        %v1087 = vmul.f32 %v1080, %v1085
        %v1089 = vlaneseq
        %v1090 = vshrl.u32 %v1089, 7
        %v1091 = vsub.s32 0, %v1090
        %v1092 = vrot.slane %v1067, %v1091
        %v1094 = vadd.f32 %v1087, %v1092
        %v1095 = vpack.c.bf16 %v1094, %v1094
        %v1096 = vld [vmem:[%s7] sm:$0xf]
        %v1097 = vld [vmem:[%s7 + $0x4] sm:$0xf]
        %v1098 = vld [vmem:[%s7 + $0x8] sm:$0xf]
        %v1099 = vld [vmem:[%s7 + $0xc] sm:$0xf]
        %v1100 = vld [vmem:[%s8] sm:$0x1]
        %v1102 = vlaneseq
        %v1103 = vshrl.u32 %v1102, 7
        %v1104 = vsub.s32 0, %v1103
        %v1105 = vrot.slane %v1100, %v1104
        %v1111 = vunpack.c.l.b16 %v1096
        %v1112 = vunpack.c.l.b16 %v1097
        %v1113 = vunpack.c.l.b16 %v1098
        %v1114 = vunpack.c.l.b16 %v1099
        %v1115 = vpack.c.b16 %v1112, %v1111
        %v1116 = vpack.c.b16 %v1114, %v1113
        %v1120 = vsel %vm440, %v1095, 0
        %1122 = vmatprep.subr.bf16.mxu0 0
        %1123 = vmatpush1.bf16.msra.mxu0 0
        %1124 = vmatprep.subr.bf16.mxu0 0
        %1125 = vmatpush1.bf16.msra.mxu0 0
        %1126 = vmatprep.subr.bf16.mxu0 0
        %1127 = vmatpush1.bf16.msra.mxu0 0
        %1128 = vmatprep.subr.bf16.mxu0 0
        %1129 = vmatpush1.bf16.msra.mxu0 0
        %1130 = vmatprep.subr.bf16.mxu0 0
        %1131 = vmatpush1.bf16.msra.mxu0 0
        %1132 = vmatprep.subr.bf16.mxu0 0
        %1133 = vmatpush1.bf16.msra.mxu0 0
        %1134 = vmatprep.subr.bf16.mxu0 0
        %1135 = vmatpush1.bf16.msra.mxu0 %v1116
        %1136 = vmatprep.subr.bf16.mxu0 0
        %1137 = vmatpush1.bf16.msra.mxu0 %v1115
        %1138 = vmatprep.subr.bf16.mxu0 0
        %1139 = vmatpush2.bf16.msra.mxu0 0
        %1140 = vmatprep.subr.bf16.mxu0 0
        %1141 = vmatpush2.bf16.msra.mxu0 0
        %1142 = vmatprep.subr.bf16.mxu0 0
        %1143 = vmatpush2.bf16.msra.mxu0 0
        %1144 = vmatprep.subr.bf16.mxu0 0
        %1145 = vmatpush2.bf16.msra.mxu0 0
        %1146 = vmatprep.subr.bf16.mxu0 0
        %1147 = vmatpush2.bf16.msra.mxu0 0
        %1148 = vmatprep.subr.bf16.mxu0 0
        %1149 = vmatpush2.bf16.msra.mxu0 0
        %1150 = vmatprep.subr.bf16.mxu0 0
        %1151 = vmatpush2.bf16.msra.mxu0 0
        %1152 = vmatprep.subr.bf16.mxu0 0
        %1153 = vmatpush2.bf16.msra.mxu0 0
        %1154 = vmatprep.mubr.bf16.mxu0 0
        %1155 = vmatmul.mubr.bf16.gmra.mxu0 %v1120
        %v1156 = vpop.f32.mrf.mxu0
        %v1157 = vadd.f32 %v1105, %v1156
        %v1158 = vpop.f32.mrf.mxu0
        %v1159 = vpop.f32.mrf.mxu0
        %v1160 = vpop.f32.mrf.mxu0
        %1161 = vdwg.mxu0
        %v1162 = vmul.f32 %v1157, 1.702
        %v1163 = vxor.u32 %v1162, 2147483648
        %v1164 = vmul.f32 %v1163, 1.442695
        %v1165 = vpow.pop %v1164
        %v1166 = vadd.f32 %v1165, 1.0
        %v1167 = vrcp.pop %v1166
        %v1168 = vmul.f32 1.0, %v1167
        %v1169 = vmul.f32 %v1157, %v1168
        %v1170 = vpack.c.bf16 %v1169, %v1169
        %v1171 = vld [vmem:[%s9] sm:$0xf]
        %v1172 = vld [vmem:[%s9 + $0x4] sm:$0xf]
        %v1173 = vld [vmem:[%s9 + $0x8] sm:$0xf]
        %v1174 = vld [vmem:[%s9 + $0xc] sm:$0xf]
        %v1175 = vld [vmem:[%s9 + $0x10] sm:$0xf]
        %v1176 = vld [vmem:[%s9 + $0x14] sm:$0xf]
        %v1177 = vld [vmem:[%s9 + $0x18] sm:$0xf]
        %v1178 = vld [vmem:[%s9 + $0x1c] sm:$0xf]
        %v1179 = vld [vmem:[%s9 + $0x20] sm:$0xf]
        %v1180 = vld [vmem:[%s9 + $0x24] sm:$0xf]
        %v1181 = vld [vmem:[%s9 + $0x28] sm:$0xf]
        %v1182 = vld [vmem:[%s9 + $0x2c] sm:$0xf]
        %v1183 = vld [vmem:[%s9 + $0x30] sm:$0xf]
        %v1184 = vld [vmem:[%s9 + $0x34] sm:$0xf]
        %v1185 = vld [vmem:[%s9 + $0x38] sm:$0xf]
        %v1186 = vld [vmem:[%s9 + $0x3c] sm:$0xf]
        %v1203 = vunpack.c.l.b16 %v1171
        %v1204 = vunpack.c.l.b16 %v1172
        %v1205 = vunpack.c.l.b16 %v1173
        %v1206 = vunpack.c.l.b16 %v1174
        %v1207 = vunpack.c.l.b16 %v1175
        %v1208 = vunpack.c.l.b16 %v1176
        %v1209 = vunpack.c.l.b16 %v1177
        %v1210 = vunpack.c.l.b16 %v1178
        %v1211 = vunpack.c.l.b16 %v1179
        %v1212 = vunpack.c.l.b16 %v1180
        %v1213 = vunpack.c.l.b16 %v1181
        %v1214 = vunpack.c.l.b16 %v1182
        %v1215 = vunpack.c.l.b16 %v1183
        %v1216 = vunpack.c.l.b16 %v1184
        %v1217 = vunpack.c.l.b16 %v1185
        %v1218 = vunpack.c.l.b16 %v1186
        %v1219 = vpack.c.b16 %v1204, %v1203
        %v1220 = vpack.c.b16 %v1206, %v1205
        %v1221 = vpack.c.b16 %v1208, %v1207
        %v1222 = vpack.c.b16 %v1210, %v1209
        %v1223 = vpack.c.b16 %v1212, %v1211
        %v1224 = vpack.c.b16 %v1214, %v1213
        %v1225 = vpack.c.b16 %v1216, %v1215
        %v1226 = vpack.c.b16 %v1218, %v1217
        %1235 = vmatprep.subr.bf16.mxu0 0
        %1236 = vmatpush1.bf16.msra.mxu0 %v1226
        %1237 = vmatprep.subr.bf16.mxu0 0
        %1238 = vmatpush1.bf16.msra.mxu0 %v1225
        %1239 = vmatprep.subr.bf16.mxu0 0
        %1240 = vmatpush1.bf16.msra.mxu0 %v1224
        %1241 = vmatprep.subr.bf16.mxu0 0
        %1242 = vmatpush1.bf16.msra.mxu0 %v1223
        %1243 = vmatprep.subr.bf16.mxu0 0
        %1244 = vmatpush1.bf16.msra.mxu0 %v1222
        %1245 = vmatprep.subr.bf16.mxu0 0
        %1246 = vmatpush1.bf16.msra.mxu0 %v1221
        %1247 = vmatprep.subr.bf16.mxu0 0
        %1248 = vmatpush1.bf16.msra.mxu0 %v1220
        %1249 = vmatprep.subr.bf16.mxu0 0
        %1250 = vmatpush1.bf16.msra.mxu0 %v1219
        %1251 = vmatprep.subr.bf16.mxu0 0
        %1252 = vmatpush2.bf16.msra.mxu0 0
        %1253 = vmatprep.subr.bf16.mxu0 0
        %1254 = vmatpush2.bf16.msra.mxu0 0
        %1255 = vmatprep.subr.bf16.mxu0 0
        %1256 = vmatpush2.bf16.msra.mxu0 0
        %1257 = vmatprep.subr.bf16.mxu0 0
        %1258 = vmatpush2.bf16.msra.mxu0 0
        %1259 = vmatprep.subr.bf16.mxu0 0
        %1260 = vmatpush2.bf16.msra.mxu0 0
        %1261 = vmatprep.subr.bf16.mxu0 0
        %1262 = vmatpush2.bf16.msra.mxu0 0
        %1263 = vmatprep.subr.bf16.mxu0 0
        %1264 = vmatpush2.bf16.msra.mxu0 0
        %1265 = vmatprep.subr.bf16.mxu0 0
        %1266 = vmatpush2.bf16.msra.mxu0 0
        %1267 = vmatprep.mubr.bf16.mxu0 0
        %1268 = vmatmul.mubr.bf16.gmra.mxu0 %v1170
        %v1269 = vpop.f32.mrf.mxu0
        %v1270 = vadd.f32 0.0, %v1269
        %v1271 = vpop.f32.mrf.mxu0
        %v1272 = vpop.f32.mrf.mxu0
        %v1273 = vpop.f32.mrf.mxu0
        %1274 = vdwg.mxu0
        %v1275 = vadd.f32 %v1065, %v1270
        %v1276 = vld [vmem:[%s10] sm:$0x1]
        %v1278 = vlaneseq
        %v1279 = vshrl.u32 %v1278, 7
        %v1280 = vsub.s32 0, %v1279
        %v1281 = vrot.slane %v1276, %v1280
        %v1283 = vadd.f32 %v1275, %v1281
        %1284 = vst.msk [vmem:[%s431] sm:$0xff] %vm440, %v1283
        %s1285 = sand.u32 %s313, 1
        %s1286 = scalar_lea.sflag [#allocation3], %s1285
        %s1287 = sand.u32 %s313, 1
        %s1288 = smul.addr %s1287, 8
        %s1289 = scalar_lea.vmem [#allocation2], %s1288
        // Predicated region
        $region73: #{tpu_custom_call.1} parent=71 // pred_check
          %p1290 = pneg %p323
        $region74: #{tpu_custom_call.1} parent=71 // pred_check_branch
          %1292 = sbr.rel (%p1290) target = $region76
        $region75: #{tpu_custom_call.1} parent=71 // pred_region
          %s1294 = ssub.s32 128, 128
          %1295 = vsyncadd %s1286, %s1294
          %s1296 = smul.addr %s27, 128
          %s1297 = scalar_lea.hbm %s13, %s1296
          %s1299 = sshll.u32 %s1289, 4
          %s1300 = int_to_ptr.vmem [resolvable:$true] %s1299
          %1302 = dma.vmem_to_hbm [thread:$0]  %s1300, 128, %s1297, %s1286
        $region76: #{tpu_custom_call.1} parent=71 // pred_fallthru
          _
      $region72: #{tpu_custom_call.1} parent=5 // pred_fallthru
        _
      %p1303 = scmp.le.s32.totalorder 2, %s22
      // Predicated region
      $region77: #{tpu_custom_call.1} parent=5 // pred_check
        %p1304 = pneg %p1303
      $region78: #{tpu_custom_call.1} parent=5 // pred_check_branch
        %1306 = sbr.rel (%p1304) target = $region80
      $region79: #{tpu_custom_call.1} parent=5 // pred_region
        %s1307 = ssub.s32 %s22, 2
        // Predicated region
        $region81: #{tpu_custom_call.1} parent=79 // pred_check
          %p1308 = pneg %p329
        $region82: #{tpu_custom_call.1} parent=79 // pred_check_branch
          %1310 = sbr.rel (%p1308) target = $region84
        $region83: #{tpu_custom_call.1} parent=79 // pred_region
          %s1311 = sand.u32 %s314, 1
          %s1312 = scalar_lea.sflag [#allocation3], %s1311
          %s1313 = sand.u32 %s314, 1
          %s1314 = smul.addr %s1313, 8
          %s1315 = scalar_lea.vmem [#allocation2], %s1314
          %1316 = dma.done %s1312, 128
        $region84: #{tpu_custom_call.1} parent=79 // pred_fallthru
          _
      $region80: #{tpu_custom_call.1} parent=5 // pred_fallthru
        _
    $region6: #{tpu_custom_call.1} parent=1 // loop_footer
      %s26 = sadd.s32 1, %s22
    $region7: #{tpu_custom_call.1} parent=1 // loop_footer_branch
      %21 = sbr.rel target = $region3
    $region8: #{tpu_custom_call.1} parent=1 // loop_exit
      _
    %1317 = vsyncpa [#allocation3], 1
    %s1318 = scalar_lea.sflag [#allocation3], 1
    %1319 = vsyncpa %s1318, 1

</llo_original>
